<compile_context>
chip_gen: v7x
topology: tpu7x:2x2x1
jax: 0.10.0
libtpu: 0.0.40
codegen_flags: <defaults>
</compile_context>

<pallas_src>
import functools

import jax
import jax.numpy as jnp
from jax.experimental import pallas as pl
from jax.experimental.pallas import tpu as pltpu

EPS = 1e-5


# ----------------------------------------------------------------------------
# Generation-aware compiler params
# ----------------------------------------------------------------------------
def _vmem_limit_bytes():
    """Scoped-VMEM request sized per TPU generation (v7x has 64 MiB per TC)."""
    cap = 64 * 1024 * 1024          # conservative fallback
    try:
        cap = int(getattr(pltpu.get_tpu_info(), "vmem_capacity_bytes", cap))
    except Exception:
        pass
    if cap <= 64 * 1024 * 1024:     # v7x-class: leave headroom for internals
        return 36 * 1024 * 1024
    return 80 * 1024 * 1024         # v5e / v6e: 128 MiB physical


def _compiler_params(n_grid_axes, vmem_limit):
    return pltpu.CompilerParams(
        dimension_semantics=("parallel",) * n_grid_axes,
        vmem_limit_bytes=vmem_limit)


# ----------------------------------------------------------------------------
# Kernels
# ----------------------------------------------------------------------------
def _stats_kernel(x_ref, s_ref, q_ref):
    # Per-step partial sums over (batch-block, rows); lanes stay W*C wide.
    x = x_ref[...].astype(jnp.float32)                 # (NB, H, W*C)
    wc = x.shape[-1]
    s_ref[...] = jnp.sum(x, axis=(0, 1)).reshape(1, wc)
    q_ref[...] = jnp.sum(x * x, axis=(0, 1)).reshape(1, wc)


def _row_slab(xp_ref, kh, ho, stride):
    # Rows kh, kh+stride, ... of the H-padded bf16 slab (already bf16: no
    # per-tap cast pass).
    if stride == 1:
        slab = xp_ref[:, kh:kh + ho, :]
    else:
        # Stride handled via a strided sublane read (no wasted compute).
        slab = xp_ref[:, pl.ds(kh, ho, stride=stride), :]
    nb, _, k = slab.shape
    return slab.reshape(nb * ho, k)


def _banded_conv(xp_ref, t_ref, ho, stride):
    # sum_kh  X_kh @ T_kh : 3 MXU matmuls, f32 accumulation, acc initialized
    # by the first tap (no zeros+add).
    acc = jnp.dot(_row_slab(xp_ref, 0, ho, stride), t_ref[0],
                  preferred_element_type=jnp.float32)
    for kh in (1, 2):
        acc = acc + jnp.dot(_row_slab(xp_ref, kh, ho, stride), t_ref[kh],
                            preferred_element_type=jnp.float32)
    return acc


def _zero_pad_rows(ref, n_low, n_high):
    # Zero ONLY the pad rows of an H-padded slab; data rows get overwritten.
    nb, rows, lanes = ref.shape
    if n_low > 0:
        ref[:, 0:n_low, :] = jnp.zeros((nb, n_low, lanes), ref.dtype)
    if n_high > 0:
        ref[:, rows - n_high:rows, :] = jnp.zeros((nb, n_high, lanes),
                                                  ref.dtype)


def _dual_conv_kernel(x_ref, s1_ref, h1_ref, t1_ref, b1_ref, ts_ref, bs_ref,
                      y_ref, z_ref, ysum_ref, ysq_ref, zsum_ref, zsq_ref,
                      xpb_ref, xps_ref, *, stride, pad1):
    """Fused: [BN1+ReLU -> conv1] and [skip conv], one HBM read of x,
    plus fused partial BN statistics of both conv outputs."""
    nb, ho, woc = y_ref.shape
    h = x_ref.shape[1]

    x = x_ref[...].astype(jnp.float32)                     # (NB, H, W*Cin)
    xb = jnp.maximum(x * s1_ref[...] + h1_ref[...], 0.0)   # BN1 + ReLU

    # In-kernel zero padding (H side only; W padding lives in the band mats).
    # Only the pad rows are zeroed; the data rows are stored once as bf16.
    _zero_pad_rows(xpb_ref, pad1, pad1)
    _zero_pad_rows(xps_ref, 1, 1)
    xpb_ref[:, pad1:pad1 + h, :] = xb.astype(xpb_ref.dtype)
    xps_ref[:, 1:1 + h, :] = x.astype(xps_ref.dtype)

    y = _banded_conv(xpb_ref, t1_ref, ho, stride) + b1_ref[...]  # (NB*Ho,WoC)
    z = _banded_conv(xps_ref, ts_ref, ho, stride) + bs_ref[...]

    y_ref[...] = y.reshape(nb, ho, woc).astype(y_ref.dtype)      # bf16 out
    z_ref[...] = z.reshape(nb, ho, woc).astype(z_ref.dtype)      # bf16 out

    # Partial BN statistics in f32 (per-channel fold done by tiny JAX glue).
    ysum_ref[...] = jnp.sum(y, axis=0, keepdims=True)
    ysq_ref[...] = jnp.sum(y * y, axis=0, keepdims=True)
    zsum_ref[...] = jnp.sum(z, axis=0, keepdims=True)
    zsq_ref[...] = jnp.sum(z * z, axis=0, keepdims=True)


def _conv2_add_kernel(y_ref, z_ref, s2_ref, h2_ref, t2_ref, b2_ref,
                      ss_ref, hs_ref, o_ref, xp2_ref):
    """Fused: BN2+ReLU -> conv2 (stride 1, pad 1) -> + skip-BN(zs)."""
    nb, ho, woc = o_ref.shape

    y = y_ref[...].astype(jnp.float32)
    yb = jnp.maximum(y * s2_ref[...] + h2_ref[...], 0.0)   # BN2 + ReLU

    _zero_pad_rows(xp2_ref, 1, 1)
    xp2_ref[:, 1:1 + ho, :] = yb.astype(xp2_ref.dtype)

    blk = _banded_conv(xp2_ref, t2_ref, ho, 1) + b2_ref[...]   # (NB*Ho, WoC)
    skip = z_ref[...].astype(jnp.float32) * ss_ref[...] + hs_ref[...]
    o_ref[...] = (blk.reshape(nb, ho, woc) + skip).astype(o_ref.dtype)


# ----------------------------------------------------------------------------
# Host-side (trace-time) glue
# ----------------------------------------------------------------------------
def _out_size(size, pad, stride):
    return (size + 2 * pad - 3) // stride + 1


def _banded_weights(w_hwio, w_in, w_out, stride, pad):
    """(3,3,Cin,Cout) -> (3, W_in*Cin, W_out*Cout) banded matrices (bf16).

    T[kh, c*Cin+ci, j*Cout+co] = w[kh, c - j*stride + pad, ci, co] when that
    kernel column lies in [0,3) and c in [0,W_in); zero otherwise.  Stride and
    W-side zero padding are baked into the band structure.
    """
    kh_, kw_, cin, cout = w_hwio.shape
    t = jnp.zeros((kh_, w_in * cin, w_out * cout), jnp.float32)
    for j in range(w_out):
        for kw in range(kw_):
            c = j * stride + kw - pad
            if 0 <= c < w_in:
                t = t.at[:, c * cin:(c + 1) * cin,
                         j * cout:(j + 1) * cout].set(w_hwio[:, kw])
    return t.astype(jnp.bfloat16)


def _bn_scale_shift(gamma, beta, s, q, count):
    mean = s / count
    var = jnp.maximum(q / count - mean * mean, 0.0)   # biased (train mode)
    scale = gamma * jax.lax.rsqrt(var + EPS)
    shift = beta - mean * scale
    return scale, shift


def _tile_lanes(v, reps):
    # Per-channel vector -> (1, reps*C) lane pattern matching index w*C + c.
    return jnp.tile(v.astype(jnp.float32), reps).reshape(1, -1)


def _pick_batch_block(n, per_elem_bytes, budget, rows_per_elem=1,
                      target_m=None):
    """Pick a divisor of n: under the VMEM budget, keeping >= 2 grid steps
    (pipelining / v7x megacore).  If target_m is given, prefer the smallest
    block reaching M = nb*rows >= target_m; else the largest feasible."""
    divs = [d for d in range(1, n + 1) if n % d == 0]
    feasible = [d for d in divs
                if d * per_elem_bytes <= budget and (n // d >= 2 or n < 2)]
    if not feasible:
        return 1
    if target_m is not None:
        reach = [d for d in feasible if d * rows_per_elem >= target_m]
        if reach:
            return min(reach)
    return max(feasible)


def _x_stats_pallas(xf, nb, vmem_limit):
    """Partial per-lane sums of the flat (N, H, W*C) activation."""
    n, h, wc = xf.shape
    g = n // nb
    s, q = pl.pallas_call(
        _stats_kernel,
        out_shape=(jax.ShapeDtypeStruct((g, 1, wc), jnp.float32),
                   jax.ShapeDtypeStruct((g, 1, wc), jnp.float32)),
        grid=(g,),
        in_specs=[pl.BlockSpec((nb, h, wc), lambda i: (i, 0, 0))],
        out_specs=(pl.BlockSpec((None, 1, wc), lambda i: (i, 0, 0)),
                   pl.BlockSpec((None, 1, wc), lambda i: (i, 0, 0))),
        compiler_params=_compiler_params(1, vmem_limit),
    )(xf)
    return s.sum(axis=(0, 1)), q.sum(axis=(0, 1))


# ----------------------------------------------------------------------------
# ResidualConv forward (Pallas) and pure-JAX reference
# ----------------------------------------------------------------------------
def residual_conv_forward(x_nchw, p, stride, padding):
    n, cin, h, w = x_nchw.shape
    cout = p["conv1_w"].shape[-1]

    ho = _out_size(h, padding, stride)
    wo = _out_size(w, padding, stride)
    # conv_skip always uses padding=1; its output must match conv_block's so
    # the residual add is defined.
    assert ho == _out_size(h, 1, stride) and wo == _out_size(w, 1, stride), (
        "conv_block / conv_skip output shapes must match")

    wc, woc = w * cin, wo * cout

    # NCHW -> flat NHWC (N, H, W*Cin): channels fused into the lane dim.
    xf = jnp.transpose(x_nchw, (0, 2, 3, 1)).reshape(n, h, wc)

    vmem_limit = _vmem_limit_bytes()

    # Per-batch-element VMEM footprint (double-buffered HBM blocks, bf16
    # scratch slabs, live f32 temporaries) of the two conv kernels.
    per_elem_k1 = (2 * h * wc * 4                 # x block (f32, 2 buffers)
                   + (h + 2 * padding) * wc * 2   # bf16 conv-branch slab
                   + (h + 2) * wc * 2             # bf16 skip-branch slab
                   + 2 * 2 * ho * woc * 2         # y, z bf16 outs (2 buffers)
                   + 2 * h * wc * 4               # live f32 x / bn1(x)
                   + 2 * ho * woc * 4)            # live f32 conv results
    per_elem_k2 = (2 * 2 * ho * woc * 2           # y, z bf16 ins (2 buffers)
                   + (ho + 2) * woc * 2           # bf16 slab
                   + 2 * ho * woc * 4             # f32 output (2 buffers)
                   + 3 * ho * woc * 4)            # live f32 temporaries
    const_bytes = 2 * (2 * 3 * wc * woc * 2) + 2 * 3 * woc * woc * 2  # weights
    budget = max(vmem_limit // 2 - const_bytes, 1)

    nb = _pick_batch_block(n, max(per_elem_k1, per_elem_k2), budget,
                           rows_per_elem=ho, target_m=256)
    g = n // nb

    # ---- BN1 statistics of x (own, much larger batch block) ---------------
    nb_s = _pick_batch_block(n, 3 * h * wc * 4, vmem_limit // 2)
    xs, xq = _x_stats_pallas(xf, nb_s, vmem_limit)
    xs = xs.reshape(w, cin).sum(0)
    xq = xq.reshape(w, cin).sum(0)
    sc1, sh1 = _bn_scale_shift(p["bn1_gamma"], p["bn1_beta"], xs, xq,
                               float(n * h * w))

    # ---- banded (Toeplitz) weights & lane-tiled per-channel vectors -------
    t1 = _banded_weights(p["conv1_w"], w, wo, stride, padding)
    ts = _banded_weights(p["skip_w"], w, wo, stride, 1)
    t2 = _banded_weights(p["conv2_w"], wo, wo, 1, 1)
    b1f = _tile_lanes(p["conv1_b"], wo)
    bsf = _tile_lanes(p["skip_b"], wo)
    b2f = _tile_lanes(p["conv2_b"], wo)
    sc1f, sh1f = _tile_lanes(sc1, w), _tile_lanes(sh1, w)

    vec_spec = pl.BlockSpec((1, wc), lambda i: (0, 0))
    ovec_spec = pl.BlockSpec((1, woc), lambda i: (0, 0))
    stat_spec = pl.BlockSpec((None, 1, woc), lambda i: (i, 0, 0))
    act_spec = pl.BlockSpec((nb, ho, woc), lambda i: (i, 0, 0))

    # ---- fused kernel 1: [BN1+ReLU -> conv1]  and  [skip conv] ------------
    # Inter-kernel intermediates y1/zs are bf16 (halved HBM traffic).
    y1, zs, ysum, ysq, zsum, zsq = pl.pallas_call(
        functools.partial(_dual_conv_kernel, stride=stride, pad1=padding),
        out_shape=(jax.ShapeDtypeStruct((n, ho, woc), jnp.bfloat16),
                   jax.ShapeDtypeStruct((n, ho, woc), jnp.bfloat16),
                   jax.ShapeDtypeStruct((g, 1, woc), jnp.float32),
                   jax.ShapeDtypeStruct((g, 1, woc), jnp.float32),
                   jax.ShapeDtypeStruct((g, 1, woc), jnp.float32),
                   jax.ShapeDtypeStruct((g, 1, woc), jnp.float32)),
        grid=(g,),
        in_specs=[
            pl.BlockSpec((nb, h, wc), lambda i: (i, 0, 0)),
            vec_spec, vec_spec,
            pl.BlockSpec((3, wc, woc), lambda i: (0, 0, 0)),
            ovec_spec,
            pl.BlockSpec((3, wc, woc), lambda i: (0, 0, 0)),
            ovec_spec,
        ],
        out_specs=(act_spec, act_spec, stat_spec, stat_spec, stat_spec,
                   stat_spec),
        scratch_shapes=[
            pltpu.VMEM((nb, h + 2 * padding, wc), jnp.bfloat16),
            pltpu.VMEM((nb, h + 2, wc), jnp.bfloat16)],
        compiler_params=_compiler_params(1, vmem_limit),
    )(xf, sc1f, sh1f, t1, b1f, ts, bsf)

    # ---- fold partial stats -> BN2 / skip-BN scale & shift ----------------
    cnt = float(n * ho * wo)
    sc2, sh2 = _bn_scale_shift(
        p["bn2_gamma"], p["bn2_beta"],
        ysum.sum(axis=(0, 1)).reshape(wo, cout).sum(0),
        ysq.sum(axis=(0, 1)).reshape(wo, cout).sum(0), cnt)
    scs, shs = _bn_scale_shift(
        p["bns_gamma"], p["bns_beta"],
        zsum.sum(axis=(0, 1)).reshape(wo, cout).sum(0),
        zsq.sum(axis=(0, 1)).reshape(wo, cout).sum(0), cnt)

    # ---- fused kernel 2: BN2+ReLU -> conv2 -> + skip-BN(zs) ---------------
    out = pl.pallas_call(
        _conv2_add_kernel,
        out_shape=jax.ShapeDtypeStruct((n, ho, woc), x_nchw.dtype),
        grid=(g,),
        in_specs=[
            act_spec, act_spec,
            ovec_spec, ovec_spec,
            pl.BlockSpec((3, woc, woc), lambda i: (0, 0, 0)),
            ovec_spec, ovec_spec, ovec_spec,
        ],
        out_specs=act_spec,
        scratch_shapes=[pltpu.VMEM((nb, ho + 2, woc), jnp.bfloat16)],
        compiler_params=_compiler_params(1, vmem_limit),
    )(y1, zs, _tile_lanes(sc2, wo), _tile_lanes(sh2, wo), t2, b2f,
      _tile_lanes(scs, wo), _tile_lanes(shs, wo))

    # flat NHWC -> NCHW (free reshape + one tiny boundary transpose).
    return jnp.transpose(out.reshape(n, ho, wo, cout), (0, 3, 1, 2))


def residual_conv_reference(x_nchw, p, stride, padding):
    x = jnp.transpose(x_nchw, (0, 2, 3, 1))

    def bn(v, g, b):
        m = jnp.mean(v, axis=(0, 1, 2))
        var = jnp.var(v, axis=(0, 1, 2))
        return (v - m) * (g * jax.lax.rsqrt(var + EPS)) + b

    def conv(v, w, b, s, pad):
        return jax.lax.conv_general_dilated(
            v, w, window_strides=(s, s), padding=[(pad, pad), (pad, pad)],
            dimension_numbers=("NHWC", "HWIO", "NHWC")) + b

    y = jnp.maximum(bn(x, p["bn1_gamma"], p["bn1_beta"]), 0.0)
    y = conv(y, p["conv1_w"], p["conv1_b"], stride, padding)
    y = jnp.maximum(bn(y, p["bn2_gamma"], p["bn2_beta"]), 0.0)
    y = conv(y, p["conv2_w"], p["conv2_b"], 1, 1)
    zs = conv(x, p["skip_w"], p["skip_b"], stride, 1)
    zs = bn(zs, p["bns_gamma"], p["bns_beta"])
    return jnp.transpose(y + zs, (0, 3, 1, 2))


# ----------------------------------------------------------------------------
if __name__ == "__main__":
    N, Cin, H, W = 2, 4, 16, 16
    Cout = 8
    stride, padding = 1, 1

    key = jax.random.PRNGKey(0)
    ks = jax.random.split(key, 13)

    params = {
        "bn1_gamma": 1.0 + 0.1 * jax.random.normal(ks[0], (Cin,), jnp.float32),
        "bn1_beta": 0.1 * jax.random.normal(ks[1], (Cin,), jnp.float32),
        "conv1_w": 0.2 * jax.random.normal(ks[2], (3, 3, Cin, Cout), jnp.float32),
        "conv1_b": 0.1 * jax.random.normal(ks[3], (Cout,), jnp.float32),
        "bn2_gamma": 1.0 + 0.1 * jax.random.normal(ks[4], (Cout,), jnp.float32),
        "bn2_beta": 0.1 * jax.random.normal(ks[5], (Cout,), jnp.float32),
        "conv2_w": 0.2 * jax.random.normal(ks[6], (3, 3, Cout, Cout), jnp.float32),
        "conv2_b": 0.1 * jax.random.normal(ks[7], (Cout,), jnp.float32),
        "skip_w": 0.2 * jax.random.normal(ks[8], (3, 3, Cin, Cout), jnp.float32),
        "skip_b": 0.1 * jax.random.normal(ks[9], (Cout,), jnp.float32),
        "bns_gamma": 1.0 + 0.1 * jax.random.normal(ks[10], (Cout,), jnp.float32),
        "bns_beta": 0.1 * jax.random.normal(ks[11], (Cout,), jnp.float32),
    }

    x = jax.random.normal(ks[12], (N, Cin, H, W), jnp.float32)

    fwd = jax.jit(residual_conv_forward, static_argnums=(2, 3))
    out = jax.block_until_ready(fwd(x, params, stride, padding))
    ref = jax.block_until_ready(
        residual_conv_reference(x, params, stride, padding))

    assert out.shape == ref.shape, (out.shape, ref.shape)
    # bf16 MXU operands + bf16 inter-kernel intermediates -> bf16 tolerance.
    assert jnp.allclose(out, ref, atol=5e-2, rtol=5e-2), float(
        jnp.max(jnp.abs(out - ref)))

    print("KERNEL_OK")
</pallas_src>

<mosaic_0001>
module attributes {stable_mosaic.version = 11 : i64} {
  func.func @_stats_kernel(%arg0: i32, %arg1: memref<1x16x64xf32, #tpu.memory_space<vmem>>, %arg2: memref<1x1x64xf32, #tpu.memory_space<vmem>>, %arg3: memref<1x1x64xf32, #tpu.memory_space<vmem>>) attributes {dimension_semantics = [#tpu.dimension_semantics<parallel>], iteration_bounds = array<i64: 2>, scalar_prefetch = 0 : i64, scratch_operands = 0 : i64, tpu.core_type = #tpu.core_type<tc>, window_params = [{transform_indices = @transform_0, window_bounds = array<i64: 1, 16, 64>}, {transform_indices = @transform_1, window_bounds = array<i64: 1, 1, 64>}, {transform_indices = @transform_2, window_bounds = array<i64: 1, 1, 64>}]} {
    %c0 = arith.constant 0 : index
    %c0_0 = arith.constant 0 : index
    %c0_1 = arith.constant 0 : index
    %0 = vector.load %arg1[%c0, %c0_0, %c0_1] : memref<1x16x64xf32, #tpu.memory_space<vmem>>, vector<1x16x64xf32>
    %cst = arith.constant dense<0.000000e+00> : vector<64xf32>
    %1 = vector.multi_reduction <add>, %0, %cst [0, 1] : vector<1x16x64xf32> to vector<64xf32>
    %2 = vector.shape_cast %1 : vector<64xf32> to vector<1x64xf32>
    %c0_2 = arith.constant 0 : index
    %c0_3 = arith.constant 0 : index
    %c0_4 = arith.constant 0 : index
    %3 = vector.load %arg2[%c0_2, %c0_3, %c0_4] : memref<1x1x64xf32, #tpu.memory_space<vmem>>, vector<1x1x64xf32>
    %4 = vector.shape_cast %3 : vector<1x1x64xf32> to vector<1x64xf32>
    %5 = vector.shape_cast %2 : vector<1x64xf32> to vector<1x1x64xf32>
    tpu.vector_store %arg2[%c0_2, %c0_3, %c0_4], %5 {strides = array<i32>} : memref<1x1x64xf32, #tpu.memory_space<vmem>>, vector<1x1x64xf32>,
    %6 = arith.mulf %0, %0 : vector<1x16x64xf32>
    %cst_5 = arith.constant dense<0.000000e+00> : vector<64xf32>
    %7 = vector.multi_reduction <add>, %6, %cst_5 [0, 1] : vector<1x16x64xf32> to vector<64xf32>
    %8 = vector.shape_cast %7 : vector<64xf32> to vector<1x64xf32>
    %c0_6 = arith.constant 0 : index
    %c0_7 = arith.constant 0 : index
    %c0_8 = arith.constant 0 : index
    %9 = vector.load %arg3[%c0_6, %c0_7, %c0_8] : memref<1x1x64xf32, #tpu.memory_space<vmem>>, vector<1x1x64xf32>
    %10 = vector.shape_cast %9 : vector<1x1x64xf32> to vector<1x64xf32>
    %11 = vector.shape_cast %8 : vector<1x64xf32> to vector<1x1x64xf32>
    tpu.vector_store %arg3[%c0_6, %c0_7, %c0_8], %11 {strides = array<i32>} : memref<1x1x64xf32, #tpu.memory_space<vmem>>, vector<1x1x64xf32>,
    return
  }
  func.func @transform_0(%arg0: i32) -> (i32, i32, i32) {
    %c0_i32 = arith.constant 0 : i32
    %c0_i32_0 = arith.constant 0 : i32
    %c0_i32_1 = arith.constant 0 : i32
    return %arg0, %c0_i32, %c0_i32_0 : i32, i32, i32
  }
  func.func @transform_1(%arg0: i32) -> (i32, i32, i32) {
    %c0_i32 = arith.constant 0 : i32
    %c0_i32_0 = arith.constant 0 : i32
    %c0_i32_1 = arith.constant 0 : i32
    return %arg0, %c0_i32, %c0_i32_0 : i32, i32, i32
  }
  func.func @transform_2(%arg0: i32) -> (i32, i32, i32) {
    %c0_i32 = arith.constant 0 : i32
    %c0_i32_0 = arith.constant 0 : i32
    %c0_i32_1 = arith.constant 0 : i32
    return %arg0, %c0_i32, %c0_i32_0 : i32, i32, i32
  }
}

module attributes {stable_mosaic.version = 11 : i64} {
  func.func @_dual_conv_kernel(%arg0: i32, %arg1: memref<1x16x64xf32, #tpu.memory_space<vmem>>, %arg2: memref<1x64xf32, #tpu.memory_space<vmem>>, %arg3: memref<1x64xf32, #tpu.memory_space<vmem>>, %arg4: memref<3x64x128xbf16, #tpu.memory_space<vmem>>, %arg5: memref<1x128xf32, #tpu.memory_space<vmem>>, %arg6: memref<3x64x128xbf16, #tpu.memory_space<vmem>>, %arg7: memref<1x128xf32, #tpu.memory_space<vmem>>, %arg8: memref<1x16x128xbf16, #tpu.memory_space<vmem>>, %arg9: memref<1x16x128xbf16, #tpu.memory_space<vmem>>, %arg10: memref<1x1x128xf32, #tpu.memory_space<vmem>>, %arg11: memref<1x1x128xf32, #tpu.memory_space<vmem>>, %arg12: memref<1x1x128xf32, #tpu.memory_space<vmem>>, %arg13: memref<1x1x128xf32, #tpu.memory_space<vmem>>, %arg14: memref<1x18x64xbf16, #tpu.memory_space<vmem>>, %arg15: memref<1x18x64xbf16, #tpu.memory_space<vmem>>) attributes {dimension_semantics = [#tpu.dimension_semantics<parallel>], iteration_bounds = array<i64: 2>, scalar_prefetch = 0 : i64, scratch_operands = 2 : i64, tpu.core_type = #tpu.core_type<tc>, window_params = [{transform_indices = @transform_0, window_bounds = array<i64: 1, 16, 64>}, {pipeline_mode = #tpu.pipeline_mode<synchronous>, transform_indices = @transform_1, window_bounds = array<i64: 1, 64>}, {pipeline_mode = #tpu.pipeline_mode<synchronous>, transform_indices = @transform_2, window_bounds = array<i64: 1, 64>}, {pipeline_mode = #tpu.pipeline_mode<synchronous>, transform_indices = @transform_3, window_bounds = array<i64: 3, 64, 128>}, {pipeline_mode = #tpu.pipeline_mode<synchronous>, transform_indices = @transform_4, window_bounds = array<i64: 1, 128>}, {pipeline_mode = #tpu.pipeline_mode<synchronous>, transform_indices = @transform_5, window_bounds = array<i64: 3, 64, 128>}, {pipeline_mode = #tpu.pipeline_mode<synchronous>, transform_indices = @transform_6, window_bounds = array<i64: 1, 128>}, {transform_indices = @transform_7, window_bounds = array<i64: 1, 16, 128>}, {transform_indices = @transform_8, window_bounds = array<i64: 1, 16, 128>}, {transform_indices = @transform_9, window_bounds = array<i64: 1, 1, 128>}, {transform_indices = @transform_10, window_bounds = array<i64: 1, 1, 128>}, {transform_indices = @transform_11, window_bounds = array<i64: 1, 1, 128>}, {transform_indices = @transform_12, window_bounds = array<i64: 1, 1, 128>}]} {
    %c0 = arith.constant 0 : index
    %c0_0 = arith.constant 0 : index
    %c0_1 = arith.constant 0 : index
    %0 = vector.load %arg1[%c0, %c0_0, %c0_1] : memref<1x16x64xf32, #tpu.memory_space<vmem>>, vector<1x16x64xf32>
    %c0_2 = arith.constant 0 : index
    %c0_3 = arith.constant 0 : index
    %1 = vector.load %arg2[%c0_2, %c0_3] : memref<1x64xf32, #tpu.memory_space<vmem>>, vector<1x64xf32>
    %2 = vector.shape_cast %1 : vector<1x64xf32> to vector<1x1x64xf32>
    %3 = vector.broadcast %2 : vector<1x1x64xf32> to vector<1x16x64xf32>
    %4 = arith.mulf %0, %3 : vector<1x16x64xf32>
    %c0_4 = arith.constant 0 : index
    %c0_5 = arith.constant 0 : index
    %5 = vector.load %arg3[%c0_4, %c0_5] : memref<1x64xf32, #tpu.memory_space<vmem>>, vector<1x64xf32>
    %6 = vector.shape_cast %5 : vector<1x64xf32> to vector<1x1x64xf32>
    %7 = vector.broadcast %6 : vector<1x1x64xf32> to vector<1x16x64xf32>
    %8 = arith.addf %4, %7 : vector<1x16x64xf32>
    %cst = arith.constant 0.000000e+00 : f32
    %9 = vector.broadcast %cst : f32 to vector<1x16x64xf32>
    %10 = arith.maximumf %8, %9 : vector<1x16x64xf32>
    %cst_6 = arith.constant 0.000000e+00 : bf16
    %11 = vector.broadcast %cst_6 : bf16 to vector<1x1x64xbf16>
    %c0_7 = arith.constant 0 : index
    %c0_8 = arith.constant 0 : index
    %c0_9 = arith.constant 0 : index
    %12 = vector.load %arg14[%c0_7, %c0_8, %c0_9] : memref<1x18x64xbf16, #tpu.memory_space<vmem>>, vector<1x1x64xbf16>
    tpu.vector_store %arg14[%c0_7, %c0_8, %c0_9], %11 {strides = array<i32>} : memref<1x18x64xbf16, #tpu.memory_space<vmem>>, vector<1x1x64xbf16>,
    %cst_10 = arith.constant 0.000000e+00 : bf16
    %13 = vector.broadcast %cst_10 : bf16 to vector<1x1x64xbf16>
    %c0_11 = arith.constant 0 : index
    %c17 = arith.constant 17 : index
    %c0_12 = arith.constant 0 : index
    %14 = vector.load %arg14[%c0_11, %c17, %c0_12] : memref<1x18x64xbf16, #tpu.memory_space<vmem>>, vector<1x1x64xbf16>
    tpu.vector_store %arg14[%c0_11, %c17, %c0_12], %13 {strides = array<i32>} : memref<1x18x64xbf16, #tpu.memory_space<vmem>>, vector<1x1x64xbf16>,
    %cst_13 = arith.constant 0.000000e+00 : bf16
    %15 = vector.broadcast %cst_13 : bf16 to vector<1x1x64xbf16>
    %c0_14 = arith.constant 0 : index
    %c0_15 = arith.constant 0 : index
    %c0_16 = arith.constant 0 : index
    %16 = vector.load %arg15[%c0_14, %c0_15, %c0_16] : memref<1x18x64xbf16, #tpu.memory_space<vmem>>, vector<1x1x64xbf16>
    tpu.vector_store %arg15[%c0_14, %c0_15, %c0_16], %15 {strides = array<i32>} : memref<1x18x64xbf16, #tpu.memory_space<vmem>>, vector<1x1x64xbf16>,
    %cst_17 = arith.constant 0.000000e+00 : bf16
    %17 = vector.broadcast %cst_17 : bf16 to vector<1x1x64xbf16>
    %c0_18 = arith.constant 0 : index
    %c17_19 = arith.constant 17 : index
    %c0_20 = arith.constant 0 : index
    %18 = vector.load %arg15[%c0_18, %c17_19, %c0_20] : memref<1x18x64xbf16, #tpu.memory_space<vmem>>, vector<1x1x64xbf16>
    tpu.vector_store %arg15[%c0_18, %c17_19, %c0_20], %17 {strides = array<i32>} : memref<1x18x64xbf16, #tpu.memory_space<vmem>>, vector<1x1x64xbf16>,
    %19 = arith.truncf %10 : vector<1x16x64xf32> to vector<1x16x64xbf16>
    %c0_21 = arith.constant 0 : index
    %c1 = arith.constant 1 : index
    %c0_22 = arith.constant 0 : index
    %20 = vector.load %arg14[%c0_21, %c1, %c0_22] : memref<1x18x64xbf16, #tpu.memory_space<vmem>>, vector<1x16x64xbf16>
    tpu.vector_store %arg14[%c0_21, %c1, %c0_22], %19 {strides = array<i32>} : memref<1x18x64xbf16, #tpu.memory_space<vmem>>, vector<1x16x64xbf16>,
    %21 = arith.truncf %0 : vector<1x16x64xf32> to vector<1x16x64xbf16>
    %c0_23 = arith.constant 0 : index
    %c1_24 = arith.constant 1 : index
    %c0_25 = arith.constant 0 : index
    %22 = vector.load %arg15[%c0_23, %c1_24, %c0_25] : memref<1x18x64xbf16, #tpu.memory_space<vmem>>, vector<1x16x64xbf16>
    tpu.vector_store %arg15[%c0_23, %c1_24, %c0_25], %21 {strides = array<i32>} : memref<1x18x64xbf16, #tpu.memory_space<vmem>>, vector<1x16x64xbf16>,
    %c0_26 = arith.constant 0 : index
    %c0_27 = arith.constant 0 : index
    %c0_28 = arith.constant 0 : index
    %23 = vector.load %arg14[%c0_26, %c0_27, %c0_28] : memref<1x18x64xbf16, #tpu.memory_space<vmem>>, vector<1x16x64xbf16>
    %24 = vector.shape_cast %23 : vector<1x16x64xbf16> to vector<16x64xbf16>
    %c0_29 = arith.constant 0 : index
    %c0_30 = arith.constant 0 : index
    %c0_31 = arith.constant 0 : index
    %25 = vector.load %arg4[%c0_29, %c0_30, %c0_31] : memref<3x64x128xbf16, #tpu.memory_space<vmem>>, vector<1x64x128xbf16>
    %26 = vector.shape_cast %25 : vector<1x64x128xbf16> to vector<64x128xbf16>
    %cst_32 = arith.constant dense<0.000000e+00> : vector<16x128xf32>
    %27 = tpu.matmul %24, %26, %cst_32 {dimension_numbers = #tpu.dot_dimension_numbers<[1], [0], [0], [1], [0, 0, 1, 1], [], []>} : vector<16x64xbf16>, vector<64x128xbf16>, vector<16x128xf32> -> vector<16x128xf32>
    %c0_33 = arith.constant 0 : index
    %c1_34 = arith.constant 1 : index
    %c0_35 = arith.constant 0 : index
    %28 = vector.load %arg14[%c0_33, %c1_34, %c0_35] : memref<1x18x64xbf16, #tpu.memory_space<vmem>>, vector<1x16x64xbf16>
    %29 = vector.shape_cast %28 : vector<1x16x64xbf16> to vector<16x64xbf16>
    %c1_36 = arith.constant 1 : index
    %c0_37 = arith.constant 0 : index
    %c0_38 = arith.constant 0 : index
    %30 = vector.load %arg4[%c1_36, %c0_37, %c0_38] : memref<3x64x128xbf16, #tpu.memory_space<vmem>>, vector<1x64x128xbf16>
    %31 = vector.shape_cast %30 : vector<1x64x128xbf16> to vector<64x128xbf16>
    %cst_39 = arith.constant dense<0.000000e+00> : vector<16x128xf32>
    %32 = tpu.matmul %29, %31, %cst_39 {dimension_numbers = #tpu.dot_dimension_numbers<[1], [0], [0], [1], [0, 0, 1, 1], [], []>} : vector<16x64xbf16>, vector<64x128xbf16>, vector<16x128xf32> -> vector<16x128xf32>
    %33 = arith.addf %27, %32 : vector<16x128xf32>
    %c0_40 = arith.constant 0 : index
    %c2 = arith.constant 2 : index
    %c0_41 = arith.constant 0 : index
    %34 = vector.load %arg14[%c0_40, %c2, %c0_41] : memref<1x18x64xbf16, #tpu.memory_space<vmem>>, vector<1x16x64xbf16>
    %35 = vector.shape_cast %34 : vector<1x16x64xbf16> to vector<16x64xbf16>
    %c2_42 = arith.constant 2 : index
    %c0_43 = arith.constant 0 : index
    %c0_44 = arith.constant 0 : index
    %36 = vector.load %arg4[%c2_42, %c0_43, %c0_44] : memref<3x64x128xbf16, #tpu.memory_space<vmem>>, vector<1x64x128xbf16>
    %37 = vector.shape_cast %36 : vector<1x64x128xbf16> to vector<64x128xbf16>
    %cst_45 = arith.constant dense<0.000000e+00> : vector<16x128xf32>
    %38 = tpu.matmul %35, %37, %cst_45 {dimension_numbers = #tpu.dot_dimension_numbers<[1], [0], [0], [1], [0, 0, 1, 1], [], []>} : vector<16x64xbf16>, vector<64x128xbf16>, vector<16x128xf32> -> vector<16x128xf32>
    %39 = arith.addf %33, %38 : vector<16x128xf32>
    %c0_46 = arith.constant 0 : index
    %c0_47 = arith.constant 0 : index
    %40 = vector.load %arg5[%c0_46, %c0_47] : memref<1x128xf32, #tpu.memory_space<vmem>>, vector<1x128xf32>
    %41 = vector.broadcast %40 : vector<1x128xf32> to vector<16x128xf32>
    %42 = arith.addf %39, %41 : vector<16x128xf32>
    %c0_48 = arith.constant 0 : index
    %c0_49 = arith.constant 0 : index
    %c0_50 = arith.constant 0 : index
    %43 = vector.load %arg15[%c0_48, %c0_49, %c0_50] : memref<1x18x64xbf16, #tpu.memory_space<vmem>>, vector<1x16x64xbf16>
    %44 = vector.shape_cast %43 : vector<1x16x64xbf16> to vector<16x64xbf16>
    %c0_51 = arith.constant 0 : index
    %c0_52 = arith.constant 0 : index
    %c0_53 = arith.constant 0 : index
    %45 = vector.load %arg6[%c0_51, %c0_52, %c0_53] : memref<3x64x128xbf16, #tpu.memory_space<vmem>>, vector<1x64x128xbf16>
    %46 = vector.shape_cast %45 : vector<1x64x128xbf16> to vector<64x128xbf16>
    %cst_54 = arith.constant dense<0.000000e+00> : vector<16x128xf32>
    %47 = tpu.matmul %44, %46, %cst_54 {dimension_numbers = #tpu.dot_dimension_numbers<[1], [0], [0], [1], [0, 0, 1, 1], [], []>} : vector<16x64xbf16>, vector<64x128xbf16>, vector<16x128xf32> -> vector<16x128xf32>
    %c0_55 = arith.constant 0 : index
    %c1_56 = arith.constant 1 : index
    %c0_57 = arith.constant 0 : index
    %48 = vector.load %arg15[%c0_55, %c1_56, %c0_57] : memref<1x18x64xbf16, #tpu.memory_space<vmem>>, vector<1x16x64xbf16>
    %49 = vector.shape_cast %48 : vector<1x16x64xbf16> to vector<16x64xbf16>
    %c1_58 = arith.constant 1 : index
    %c0_59 = arith.constant 0 : index
    %c0_60 = arith.constant 0 : index
    %50 = vector.load %arg6[%c1_58, %c0_59, %c0_60] : memref<3x64x128xbf16, #tpu.memory_space<vmem>>, vector<1x64x128xbf16>
    %51 = vector.shape_cast %50 : vector<1x64x128xbf16> to vector<64x128xbf16>
    %cst_61 = arith.constant dense<0.000000e+00> : vector<16x128xf32>
    %52 = tpu.matmul %49, %51, %cst_61 {dimension_numbers = #tpu.dot_dimension_numbers<[1], [0], [0], [1], [0, 0, 1, 1], [], []>} : vector<16x64xbf16>, vector<64x128xbf16>, vector<16x128xf32> -> vector<16x128xf32>
    %53 = arith.addf %47, %52 : vector<16x128xf32>
    %c0_62 = arith.constant 0 : index
    %c2_63 = arith.constant 2 : index
    %c0_64 = arith.constant 0 : index
    %54 = vector.load %arg15[%c0_62, %c2_63, %c0_64] : memref<1x18x64xbf16, #tpu.memory_space<vmem>>, vector<1x16x64xbf16>
    %55 = vector.shape_cast %54 : vector<1x16x64xbf16> to vector<16x64xbf16>
    %c2_65 = arith.constant 2 : index
    %c0_66 = arith.constant 0 : index
    %c0_67 = arith.constant 0 : index
    %56 = vector.load %arg6[%c2_65, %c0_66, %c0_67] : memref<3x64x128xbf16, #tpu.memory_space<vmem>>, vector<1x64x128xbf16>
    %57 = vector.shape_cast %56 : vector<1x64x128xbf16> to vector<64x128xbf16>
    %cst_68 = arith.constant dense<0.000000e+00> : vector<16x128xf32>
    %58 = tpu.matmul %55, %57, %cst_68 {dimension_numbers = #tpu.dot_dimension_numbers<[1], [0], [0], [1], [0, 0, 1, 1], [], []>} : vector<16x64xbf16>, vector<64x128xbf16>, vector<16x128xf32> -> vector<16x128xf32>
    %59 = arith.addf %53, %58 : vector<16x128xf32>
    %c0_69 = arith.constant 0 : index
    %c0_70 = arith.constant 0 : index
    %60 = vector.load %arg7[%c0_69, %c0_70] : memref<1x128xf32, #tpu.memory_space<vmem>>, vector<1x128xf32>
    %61 = vector.broadcast %60 : vector<1x128xf32> to vector<16x128xf32>
    %62 = arith.addf %59, %61 : vector<16x128xf32>
    %63 = vector.shape_cast %42 : vector<16x128xf32> to vector<1x16x128xf32>
    %64 = arith.truncf %63 : vector<1x16x128xf32> to vector<1x16x128xbf16>
    %c0_71 = arith.constant 0 : index
    %c0_72 = arith.constant 0 : index
    %c0_73 = arith.constant 0 : index
    %65 = vector.load %arg8[%c0_71, %c0_72, %c0_73] : memref<1x16x128xbf16, #tpu.memory_space<vmem>>, vector<1x16x128xbf16>
    tpu.vector_store %arg8[%c0_71, %c0_72, %c0_73], %64 {strides = array<i32>} : memref<1x16x128xbf16, #tpu.memory_space<vmem>>, vector<1x16x128xbf16>,
    %66 = vector.shape_cast %62 : vector<16x128xf32> to vector<1x16x128xf32>
    %67 = arith.truncf %66 : vector<1x16x128xf32> to vector<1x16x128xbf16>
    %c0_74 = arith.constant 0 : index
    %c0_75 = arith.constant 0 : index
    %c0_76 = arith.constant 0 : index
    %68 = vector.load %arg9[%c0_74, %c0_75, %c0_76] : memref<1x16x128xbf16, #tpu.memory_space<vmem>>, vector<1x16x128xbf16>
    tpu.vector_store %arg9[%c0_74, %c0_75, %c0_76], %67 {strides = array<i32>} : memref<1x16x128xbf16, #tpu.memory_space<vmem>>, vector<1x16x128xbf16>,
    %cst_77 = arith.constant dense<0.000000e+00> : vector<128xf32>
    %69 = vector.multi_reduction <add>, %42, %cst_77 [0] : vector<16x128xf32> to vector<128xf32>
    %70 = vector.shape_cast %69 : vector<128xf32> to vector<1x128xf32>
    %c0_78 = arith.constant 0 : index
    %c0_79 = arith.constant 0 : index
    %c0_80 = arith.constant 0 : index
    %71 = vector.load %arg10[%c0_78, %c0_79, %c0_80] : memref<1x1x128xf32, #tpu.memory_space<vmem>>, vector<1x1x128xf32>
    %72 = vector.shape_cast %71 : vector<1x1x128xf32> to vector<1x128xf32>
    %73 = vector.shape_cast %70 : vector<1x128xf32> to vector<1x1x128xf32>
    tpu.vector_store %arg10[%c0_78, %c0_79, %c0_80], %73 {strides = array<i32>} : memref<1x1x128xf32, #tpu.memory_space<vmem>>, vector<1x1x128xf32>,
    %74 = arith.mulf %42, %42 : vector<16x128xf32>
    %cst_81 = arith.constant dense<0.000000e+00> : vector<128xf32>
    %75 = vector.multi_reduction <add>, %74, %cst_81 [0] : vector<16x128xf32> to vector<128xf32>
    %76 = vector.shape_cast %75 : vector<128xf32> to vector<1x128xf32>
    %c0_82 = arith.constant 0 : index
    %c0_83 = arith.constant 0 : index
    %c0_84 = arith.constant 0 : index
    %77 = vector.load %arg11[%c0_82, %c0_83, %c0_84] : memref<1x1x128xf32, #tpu.memory_space<vmem>>, vector<1x1x128xf32>
    %78 = vector.shape_cast %77 : vector<1x1x128xf32> to vector<1x128xf32>
    %79 = vector.shape_cast %76 : vector<1x128xf32> to vector<1x1x128xf32>
    tpu.vector_store %arg11[%c0_82, %c0_83, %c0_84], %79 {strides = array<i32>} : memref<1x1x128xf32, #tpu.memory_space<vmem>>, vector<1x1x128xf32>,
    %cst_85 = arith.constant dense<0.000000e+00> : vector<128xf32>
    %80 = vector.multi_reduction <add>, %62, %cst_85 [0] : vector<16x128xf32> to vector<128xf32>
    %81 = vector.shape_cast %80 : vector<128xf32> to vector<1x128xf32>
    %c0_86 = arith.constant 0 : index
    %c0_87 = arith.constant 0 : index
    %c0_88 = arith.constant 0 : index
    %82 = vector.load %arg12[%c0_86, %c0_87, %c0_88] : memref<1x1x128xf32, #tpu.memory_space<vmem>>, vector<1x1x128xf32>
    %83 = vector.shape_cast %82 : vector<1x1x128xf32> to vector<1x128xf32>
    %84 = vector.shape_cast %81 : vector<1x128xf32> to vector<1x1x128xf32>
    tpu.vector_store %arg12[%c0_86, %c0_87, %c0_88], %84 {strides = array<i32>} : memref<1x1x128xf32, #tpu.memory_space<vmem>>, vector<1x1x128xf32>,
    %85 = arith.mulf %62, %62 : vector<16x128xf32>
    %cst_89 = arith.constant dense<0.000000e+00> : vector<128xf32>
    %86 = vector.multi_reduction <add>, %85, %cst_89 [0] : vector<16x128xf32> to vector<128xf32>
    %87 = vector.shape_cast %86 : vector<128xf32> to vector<1x128xf32>
    %c0_90 = arith.constant 0 : index
    %c0_91 = arith.constant 0 : index
    %c0_92 = arith.constant 0 : index
    %88 = vector.load %arg13[%c0_90, %c0_91, %c0_92] : memref<1x1x128xf32, #tpu.memory_space<vmem>>, vector<1x1x128xf32>
    %89 = vector.shape_cast %88 : vector<1x1x128xf32> to vector<1x128xf32>
    %90 = vector.shape_cast %87 : vector<1x128xf32> to vector<1x1x128xf32>
    tpu.vector_store %arg13[%c0_90, %c0_91, %c0_92], %90 {strides = array<i32>} : memref<1x1x128xf32, #tpu.memory_space<vmem>>, vector<1x1x128xf32>,
    return
  }
  func.func @transform_0(%arg0: i32) -> (i32, i32, i32) {
    %c0_i32 = arith.constant 0 : i32
    %c0_i32_0 = arith.constant 0 : i32
    %c0_i32_1 = arith.constant 0 : i32
    return %arg0, %c0_i32, %c0_i32_0 : i32, i32, i32
  }
  func.func @transform_1(%arg0: i32) -> (i32, i32) {
    %c0_i32 = arith.constant 0 : i32
    %c0_i32_0 = arith.constant 0 : i32
    %c0_i32_1 = arith.constant 0 : i32
    return %c0_i32, %c0_i32_0 : i32, i32
  }
  func.func @transform_2(%arg0: i32) -> (i32, i32) {
    %c0_i32 = arith.constant 0 : i32
    %c0_i32_0 = arith.constant 0 : i32
    %c0_i32_1 = arith.constant 0 : i32
    return %c0_i32, %c0_i32_0 : i32, i32
  }
  func.func @transform_3(%arg0: i32) -> (i32, i32, i32) {
    %c0_i32 = arith.constant 0 : i32
    %c0_i32_0 = arith.constant 0 : i32
    %c0_i32_1 = arith.constant 0 : i32
    %c0_i32_2 = arith.constant 0 : i32
    return %c0_i32, %c0_i32_0, %c0_i32_1 : i32, i32, i32
  }
  func.func @transform_4(%arg0: i32) -> (i32, i32) {
    %c0_i32 = arith.constant 0 : i32
    %c0_i32_0 = arith.constant 0 : i32
    %c0_i32_1 = arith.constant 0 : i32
    return %c0_i32, %c0_i32_0 : i32, i32
  }
  func.func @transform_5(%arg0: i32) -> (i32, i32, i32) {
    %c0_i32 = arith.constant 0 : i32
    %c0_i32_0 = arith.constant 0 : i32
    %c0_i32_1 = arith.constant 0 : i32
    %c0_i32_2 = arith.constant 0 : i32
    return %c0_i32, %c0_i32_0, %c0_i32_1 : i32, i32, i32
  }
  func.func @transform_6(%arg0: i32) -> (i32, i32) {
    %c0_i32 = arith.constant 0 : i32
    %c0_i32_0 = arith.constant 0 : i32
    %c0_i32_1 = arith.constant 0 : i32
    return %c0_i32, %c0_i32_0 : i32, i32
  }
  func.func @transform_7(%arg0: i32) -> (i32, i32, i32) {
    %c0_i32 = arith.constant 0 : i32
    %c0_i32_0 = arith.constant 0 : i32
    %c0_i32_1 = arith.constant 0 : i32
    return %arg0, %c0_i32, %c0_i32_0 : i32, i32, i32
  }
  func.func @transform_8(%arg0: i32) -> (i32, i32, i32) {
    %c0_i32 = arith.constant 0 : i32
    %c0_i32_0 = arith.constant 0 : i32
    %c0_i32_1 = arith.constant 0 : i32
    return %arg0, %c0_i32, %c0_i32_0 : i32, i32, i32
  }
  func.func @transform_9(%arg0: i32) -> (i32, i32, i32) {
    %c0_i32 = arith.constant 0 : i32
    %c0_i32_0 = arith.constant 0 : i32
    %c0_i32_1 = arith.constant 0 : i32
    return %arg0, %c0_i32, %c0_i32_0 : i32, i32, i32
  }
  func.func @transform_10(%arg0: i32) -> (i32, i32, i32) {
    %c0_i32 = arith.constant 0 : i32
    %c0_i32_0 = arith.constant 0 : i32
    %c0_i32_1 = arith.constant 0 : i32
    return %arg0, %c0_i32, %c0_i32_0 : i32, i32, i32
  }
  func.func @transform_11(%arg0: i32) -> (i32, i32, i32) {
    %c0_i32 = arith.constant 0 : i32
    %c0_i32_0 = arith.constant 0 : i32
    %c0_i32_1 = arith.constant 0 : i32
    return %arg0, %c0_i32, %c0_i32_0 : i32, i32, i32
  }
  func.func @transform_12(%arg0: i32) -> (i32, i32, i32) {
    %c0_i32 = arith.constant 0 : i32
    %c0_i32_0 = arith.constant 0 : i32
    %c0_i32_1 = arith.constant 0 : i32
    return %arg0, %c0_i32, %c0_i32_0 : i32, i32, i32
  }
}

module attributes {stable_mosaic.version = 11 : i64} {
  func.func @_conv2_add_kernel(%arg0: i32, %arg1: memref<1x16x128xbf16, #tpu.memory_space<vmem>>, %arg2: memref<1x16x128xbf16, #tpu.memory_space<vmem>>, %arg3: memref<1x128xf32, #tpu.memory_space<vmem>>, %arg4: memref<1x128xf32, #tpu.memory_space<vmem>>, %arg5: memref<3x128x128xbf16, #tpu.memory_space<vmem>>, %arg6: memref<1x128xf32, #tpu.memory_space<vmem>>, %arg7: memref<1x128xf32, #tpu.memory_space<vmem>>, %arg8: memref<1x128xf32, #tpu.memory_space<vmem>>, %arg9: memref<1x16x128xf32, #tpu.memory_space<vmem>>, %arg10: memref<1x18x128xbf16, #tpu.memory_space<vmem>>) attributes {dimension_semantics = [#tpu.dimension_semantics<parallel>], iteration_bounds = array<i64: 2>, scalar_prefetch = 0 : i64, scratch_operands = 1 : i64, tpu.core_type = #tpu.core_type<tc>, window_params = [{transform_indices = @transform_0, window_bounds = array<i64: 1, 16, 128>}, {transform_indices = @transform_1, window_bounds = array<i64: 1, 16, 128>}, {pipeline_mode = #tpu.pipeline_mode<synchronous>, transform_indices = @transform_2, window_bounds = array<i64: 1, 128>}, {pipeline_mode = #tpu.pipeline_mode<synchronous>, transform_indices = @transform_3, window_bounds = array<i64: 1, 128>}, {pipeline_mode = #tpu.pipeline_mode<synchronous>, transform_indices = @transform_4, window_bounds = array<i64: 3, 128, 128>}, {pipeline_mode = #tpu.pipeline_mode<synchronous>, transform_indices = @transform_5, window_bounds = array<i64: 1, 128>}, {pipeline_mode = #tpu.pipeline_mode<synchronous>, transform_indices = @transform_6, window_bounds = array<i64: 1, 128>}, {pipeline_mode = #tpu.pipeline_mode<synchronous>, transform_indices = @transform_7, window_bounds = array<i64: 1, 128>}, {transform_indices = @transform_8, window_bounds = array<i64: 1, 16, 128>}]} {
    %c0 = arith.constant 0 : index
    %c0_0 = arith.constant 0 : index
    %c0_1 = arith.constant 0 : index
    %0 = vector.load %arg1[%c0, %c0_0, %c0_1] : memref<1x16x128xbf16, #tpu.memory_space<vmem>>, vector<1x16x128xbf16>
    %1 = arith.extf %0 : vector<1x16x128xbf16> to vector<1x16x128xf32>
    %c0_2 = arith.constant 0 : index
    %c0_3 = arith.constant 0 : index
    %2 = vector.load %arg3[%c0_2, %c0_3] : memref<1x128xf32, #tpu.memory_space<vmem>>, vector<1x128xf32>
    %3 = vector.shape_cast %2 : vector<1x128xf32> to vector<1x1x128xf32>
    %4 = vector.broadcast %3 : vector<1x1x128xf32> to vector<1x16x128xf32>
    %5 = arith.mulf %1, %4 : vector<1x16x128xf32>
    %c0_4 = arith.constant 0 : index
    %c0_5 = arith.constant 0 : index
    %6 = vector.load %arg4[%c0_4, %c0_5] : memref<1x128xf32, #tpu.memory_space<vmem>>, vector<1x128xf32>
    %7 = vector.shape_cast %6 : vector<1x128xf32> to vector<1x1x128xf32>
    %8 = vector.broadcast %7 : vector<1x1x128xf32> to vector<1x16x128xf32>
    %9 = arith.addf %5, %8 : vector<1x16x128xf32>
    %cst = arith.constant 0.000000e+00 : f32
    %10 = vector.broadcast %cst : f32 to vector<1x16x128xf32>
    %11 = arith.maximumf %9, %10 : vector<1x16x128xf32>
    %cst_6 = arith.constant 0.000000e+00 : bf16
    %12 = vector.broadcast %cst_6 : bf16 to vector<1x1x128xbf16>
    %c0_7 = arith.constant 0 : index
    %c0_8 = arith.constant 0 : index
    %c0_9 = arith.constant 0 : index
    %13 = vector.load %arg10[%c0_7, %c0_8, %c0_9] : memref<1x18x128xbf16, #tpu.memory_space<vmem>>, vector<1x1x128xbf16>
    tpu.vector_store %arg10[%c0_7, %c0_8, %c0_9], %12 {strides = array<i32>} : memref<1x18x128xbf16, #tpu.memory_space<vmem>>, vector<1x1x128xbf16>,
    %cst_10 = arith.constant 0.000000e+00 : bf16
    %14 = vector.broadcast %cst_10 : bf16 to vector<1x1x128xbf16>
    %c0_11 = arith.constant 0 : index
    %c17 = arith.constant 17 : index
    %c0_12 = arith.constant 0 : index
    %15 = vector.load %arg10[%c0_11, %c17, %c0_12] : memref<1x18x128xbf16, #tpu.memory_space<vmem>>, vector<1x1x128xbf16>
    tpu.vector_store %arg10[%c0_11, %c17, %c0_12], %14 {strides = array<i32>} : memref<1x18x128xbf16, #tpu.memory_space<vmem>>, vector<1x1x128xbf16>,
    %16 = arith.truncf %11 : vector<1x16x128xf32> to vector<1x16x128xbf16>
    %c0_13 = arith.constant 0 : index
    %c1 = arith.constant 1 : index
    %c0_14 = arith.constant 0 : index
    %17 = vector.load %arg10[%c0_13, %c1, %c0_14] : memref<1x18x128xbf16, #tpu.memory_space<vmem>>, vector<1x16x128xbf16>
    tpu.vector_store %arg10[%c0_13, %c1, %c0_14], %16 {strides = array<i32>} : memref<1x18x128xbf16, #tpu.memory_space<vmem>>, vector<1x16x128xbf16>,
    %c0_15 = arith.constant 0 : index
    %c0_16 = arith.constant 0 : index
    %c0_17 = arith.constant 0 : index
    %18 = vector.load %arg10[%c0_15, %c0_16, %c0_17] : memref<1x18x128xbf16, #tpu.memory_space<vmem>>, vector<1x16x128xbf16>
    %19 = vector.shape_cast %18 : vector<1x16x128xbf16> to vector<16x128xbf16>
    %c0_18 = arith.constant 0 : index
    %c0_19 = arith.constant 0 : index
    %c0_20 = arith.constant 0 : index
    %20 = vector.load %arg5[%c0_18, %c0_19, %c0_20] : memref<3x128x128xbf16, #tpu.memory_space<vmem>>, vector<1x128x128xbf16>
    %21 = vector.shape_cast %20 : vector<1x128x128xbf16> to vector<128x128xbf16>
    %cst_21 = arith.constant dense<0.000000e+00> : vector<16x128xf32>
    %22 = tpu.matmul %19, %21, %cst_21 {dimension_numbers = #tpu.dot_dimension_numbers<[1], [0], [0], [1], [0, 0, 1, 1], [], []>} : vector<16x128xbf16>, vector<128x128xbf16>, vector<16x128xf32> -> vector<16x128xf32>
    %c0_22 = arith.constant 0 : index
    %c1_23 = arith.constant 1 : index
    %c0_24 = arith.constant 0 : index
    %23 = vector.load %arg10[%c0_22, %c1_23, %c0_24] : memref<1x18x128xbf16, #tpu.memory_space<vmem>>, vector<1x16x128xbf16>
    %24 = vector.shape_cast %23 : vector<1x16x128xbf16> to vector<16x128xbf16>
    %c1_25 = arith.constant 1 : index
    %c0_26 = arith.constant 0 : index
    %c0_27 = arith.constant 0 : index
    %25 = vector.load %arg5[%c1_25, %c0_26, %c0_27] : memref<3x128x128xbf16, #tpu.memory_space<vmem>>, vector<1x128x128xbf16>
    %26 = vector.shape_cast %25 : vector<1x128x128xbf16> to vector<128x128xbf16>
    %cst_28 = arith.constant dense<0.000000e+00> : vector<16x128xf32>
    %27 = tpu.matmul %24, %26, %cst_28 {dimension_numbers = #tpu.dot_dimension_numbers<[1], [0], [0], [1], [0, 0, 1, 1], [], []>} : vector<16x128xbf16>, vector<128x128xbf16>, vector<16x128xf32> -> vector<16x128xf32>
    %28 = arith.addf %22, %27 : vector<16x128xf32>
    %c0_29 = arith.constant 0 : index
    %c2 = arith.constant 2 : index
    %c0_30 = arith.constant 0 : index
    %29 = vector.load %arg10[%c0_29, %c2, %c0_30] : memref<1x18x128xbf16, #tpu.memory_space<vmem>>, vector<1x16x128xbf16>
    %30 = vector.shape_cast %29 : vector<1x16x128xbf16> to vector<16x128xbf16>
    %c2_31 = arith.constant 2 : index
    %c0_32 = arith.constant 0 : index
    %c0_33 = arith.constant 0 : index
    %31 = vector.load %arg5[%c2_31, %c0_32, %c0_33] : memref<3x128x128xbf16, #tpu.memory_space<vmem>>, vector<1x128x128xbf16>
    %32 = vector.shape_cast %31 : vector<1x128x128xbf16> to vector<128x128xbf16>
    %cst_34 = arith.constant dense<0.000000e+00> : vector<16x128xf32>
    %33 = tpu.matmul %30, %32, %cst_34 {dimension_numbers = #tpu.dot_dimension_numbers<[1], [0], [0], [1], [0, 0, 1, 1], [], []>} : vector<16x128xbf16>, vector<128x128xbf16>, vector<16x128xf32> -> vector<16x128xf32>
    %34 = arith.addf %28, %33 : vector<16x128xf32>
    %c0_35 = arith.constant 0 : index
    %c0_36 = arith.constant 0 : index
    %35 = vector.load %arg6[%c0_35, %c0_36] : memref<1x128xf32, #tpu.memory_space<vmem>>, vector<1x128xf32>
    %36 = vector.broadcast %35 : vector<1x128xf32> to vector<16x128xf32>
    %37 = arith.addf %34, %36 : vector<16x128xf32>
    %c0_37 = arith.constant 0 : index
    %c0_38 = arith.constant 0 : index
    %c0_39 = arith.constant 0 : index
    %38 = vector.load %arg2[%c0_37, %c0_38, %c0_39] : memref<1x16x128xbf16, #tpu.memory_space<vmem>>, vector<1x16x128xbf16>
    %39 = arith.extf %38 : vector<1x16x128xbf16> to vector<1x16x128xf32>
    %c0_40 = arith.constant 0 : index
    %c0_41 = arith.constant 0 : index
    %40 = vector.load %arg7[%c0_40, %c0_41] : memref<1x128xf32, #tpu.memory_space<vmem>>, vector<1x128xf32>
    %41 = vector.shape_cast %40 : vector<1x128xf32> to vector<1x1x128xf32>
    %42 = vector.broadcast %41 : vector<1x1x128xf32> to vector<1x16x128xf32>
    %43 = arith.mulf %39, %42 : vector<1x16x128xf32>
    %c0_42 = arith.constant 0 : index
    %c0_43 = arith.constant 0 : index
    %44 = vector.load %arg8[%c0_42, %c0_43] : memref<1x128xf32, #tpu.memory_space<vmem>>, vector<1x128xf32>
    %45 = vector.shape_cast %44 : vector<1x128xf32> to vector<1x1x128xf32>
    %46 = vector.broadcast %45 : vector<1x1x128xf32> to vector<1x16x128xf32>
    %47 = arith.addf %43, %46 : vector<1x16x128xf32>
    %48 = vector.shape_cast %37 : vector<16x128xf32> to vector<1x16x128xf32>
    %49 = arith.addf %48, %47 : vector<1x16x128xf32>
    %c0_44 = arith.constant 0 : index
    %c0_45 = arith.constant 0 : index
    %c0_46 = arith.constant 0 : index
    %50 = vector.load %arg9[%c0_44, %c0_45, %c0_46] : memref<1x16x128xf32, #tpu.memory_space<vmem>>, vector<1x16x128xf32>
    tpu.vector_store %arg9[%c0_44, %c0_45, %c0_46], %49 {strides = array<i32>} : memref<1x16x128xf32, #tpu.memory_space<vmem>>, vector<1x16x128xf32>,
    return
  }
  func.func @transform_0(%arg0: i32) -> (i32, i32, i32) {
    %c0_i32 = arith.constant 0 : i32
    %c0_i32_0 = arith.constant 0 : i32
    %c0_i32_1 = arith.constant 0 : i32
    return %arg0, %c0_i32, %c0_i32_0 : i32, i32, i32
  }
  func.func @transform_1(%arg0: i32) -> (i32, i32, i32) {
    %c0_i32 = arith.constant 0 : i32
    %c0_i32_0 = arith.constant 0 : i32
    %c0_i32_1 = arith.constant 0 : i32
    return %arg0, %c0_i32, %c0_i32_0 : i32, i32, i32
  }
  func.func @transform_2(%arg0: i32) -> (i32, i32) {
    %c0_i32 = arith.constant 0 : i32
    %c0_i32_0 = arith.constant 0 : i32
    %c0_i32_1 = arith.constant 0 : i32
    return %c0_i32, %c0_i32_0 : i32, i32
  }
  func.func @transform_3(%arg0: i32) -> (i32, i32) {
    %c0_i32 = arith.constant 0 : i32
    %c0_i32_0 = arith.constant 0 : i32
    %c0_i32_1 = arith.constant 0 : i32
    return %c0_i32, %c0_i32_0 : i32, i32
  }
  func.func @transform_4(%arg0: i32) -> (i32, i32, i32) {
    %c0_i32 = arith.constant 0 : i32
    %c0_i32_0 = arith.constant 0 : i32
    %c0_i32_1 = arith.constant 0 : i32
    %c0_i32_2 = arith.constant 0 : i32
    return %c0_i32, %c0_i32_0, %c0_i32_1 : i32, i32, i32
  }
  func.func @transform_5(%arg0: i32) -> (i32, i32) {
    %c0_i32 = arith.constant 0 : i32
    %c0_i32_0 = arith.constant 0 : i32
    %c0_i32_1 = arith.constant 0 : i32
    return %c0_i32, %c0_i32_0 : i32, i32
  }
  func.func @transform_6(%arg0: i32) -> (i32, i32) {
    %c0_i32 = arith.constant 0 : i32
    %c0_i32_0 = arith.constant 0 : i32
    %c0_i32_1 = arith.constant 0 : i32
    return %c0_i32, %c0_i32_0 : i32, i32
  }
  func.func @transform_7(%arg0: i32) -> (i32, i32) {
    %c0_i32 = arith.constant 0 : i32
    %c0_i32_0 = arith.constant 0 : i32
    %c0_i32_1 = arith.constant 0 : i32
    return %c0_i32, %c0_i32_0 : i32, i32
  }
  func.func @transform_8(%arg0: i32) -> (i32, i32, i32) {
    %c0_i32 = arith.constant 0 : i32
    %c0_i32_0 = arith.constant 0 : i32
    %c0_i32_1 = arith.constant 0 : i32
    return %arg0, %c0_i32, %c0_i32_0 : i32, i32, i32
  }
}

</mosaic_0001>

<llo_original>
// kernel: tile.48
$region0: #{tile.48}
  #allocation0 [shape = 's32[1]{0}', space=sflag, size = 0x4, scoped, tag = 'scoped memory for tile.48']
  %s0 = inlined_call_operand.vmem [shape: f32[8], index: 0, kind: input, shape index: {}]
  %s1 = inlined_call_operand.vmem [shape: f32[16,8], index: 1, kind: output, shape index: {}]
  // Predicated region
  $region2: #{tile.48} parent=0 // pred_check
    _
  $region3: #{tile.48} parent=0 // pred_check_branch
    %3 = sbr.rel (0) target = $region5
  $region4: #{tile.48} parent=0 // pred_region
    _
  $region5: #{tile.48} parent=0 // pred_fallthru
    _
  %v4 = vld [vmem:[%s0] ss:$0 sm:$0xff]
  %5 = vst [vmem:[%s1] sm:$0xff] %v4
  %s6 = scalar_lea.vmem %s1, 8
  %7 = vst [vmem:[%s6] sm:$0xff] %v4

// kernel: tile.49
$region0: #{tile.49}
  %s0 = inlined_call_operand.vmem [shape: f32[16,8], index: 0, kind: input, shape index: {}]
  %s1 = inlined_call_operand.vmem [shape: f32[1,128], index: 1, kind: output, shape index: {}]
  $region1: #{tile.49} parent=0
    #allocation0 [shape = 'u8[4096]{0}', space=vmem, size = 0x1000, scoped, tag = 'scoped mem for output reshape']
    %v2 = vld [vmem:[%s0] sm:$0x1]
    %vm3 = vcmask 64512
    %4 = vst.msk [vmem:[#allocation0] sm:$0x1] %vm3, %v2
    %s5 = scalar_lea.vmem %s0, 15
    %v6 = vld [vmem:[%s5] sm:$0x1]
    %7 = vrot.lane.b32.xlu0 %v6, 120
    %v8 = vpop.permute.xlu0 %7
    %vm9 = vcmask 1048512
    %10 = vst.msk [vmem:[#allocation0] sm:$0x1] %vm9, %v8
    %s11 = scalar_lea.vmem %s0, 14
    %v12 = vld [vmem:[%s11] sm:$0x1]
    %13 = vrot.lane.b32.xlu0 %v12, 112
    %v14 = vpop.permute.xlu0 %13
    %vm15 = vcmask 982912
    %16 = vst.msk [vmem:[#allocation0] sm:$0x1] %vm15, %v14
    %s17 = scalar_lea.vmem %s0, 13
    %v18 = vld [vmem:[%s17] sm:$0x1]
    %19 = vrot.lane.b32.xlu0 %v18, 104
    %v20 = vpop.permute.xlu0 %19
    %vm21 = vcmask 917312
    %22 = vst.msk [vmem:[#allocation0] sm:$0x1] %vm21, %v20
    %s23 = scalar_lea.vmem %s0, 12
    %v24 = vld [vmem:[%s23] sm:$0x1]
    %25 = vrot.lane.b32.xlu0 %v24, 96
    %v26 = vpop.permute.xlu0 %25
    %vm27 = vcmask 851712
    %28 = vst.msk [vmem:[#allocation0] sm:$0x1] %vm27, %v26
    %s29 = scalar_lea.vmem %s0, 11
    %v30 = vld [vmem:[%s29] sm:$0x1]
    %31 = vrot.lane.b32.xlu0 %v30, 88
    %v32 = vpop.permute.xlu0 %31
    %vm33 = vcmask 786112
    %34 = vst.msk [vmem:[#allocation0] sm:$0x1] %vm33, %v32
    %s35 = scalar_lea.vmem %s0, 10
    %v36 = vld [vmem:[%s35] sm:$0x1]
    %37 = vrot.lane.b32.xlu0 %v36, 80
    %v38 = vpop.permute.xlu0 %37
    %vm39 = vcmask 720512
    %40 = vst.msk [vmem:[#allocation0] sm:$0x1] %vm39, %v38
    %s41 = scalar_lea.vmem %s0, 9
    %v42 = vld [vmem:[%s41] sm:$0x1]
    %43 = vrot.lane.b32.xlu0 %v42, 72
    %v44 = vpop.permute.xlu0 %43
    %vm45 = vcmask 654912
    %46 = vst.msk [vmem:[#allocation0] sm:$0x1] %vm45, %v44
    %s47 = scalar_lea.vmem %s0, 8
    %v48 = vld [vmem:[%s47] sm:$0x1]
    %49 = vrot.lane.b32.xlu0 %v48, 64
    %v50 = vpop.permute.xlu0 %49
    %vm51 = vcmask 589312
    %52 = vst.msk [vmem:[#allocation0] sm:$0x1] %vm51, %v50
    %s53 = scalar_lea.vmem %s0, 7
    %v54 = vld [vmem:[%s53] sm:$0x1]
    %55 = vrot.lane.b32.xlu0 %v54, 56
    %v56 = vpop.permute.xlu0 %55
    %vm57 = vcmask 523712
    %58 = vst.msk [vmem:[#allocation0] sm:$0x1] %vm57, %v56
    %s59 = scalar_lea.vmem %s0, 6
    %v60 = vld [vmem:[%s59] sm:$0x1]
    %61 = vrot.lane.b32.xlu0 %v60, 48
    %v62 = vpop.permute.xlu0 %61
    %vm63 = vcmask 458112
    %64 = vst.msk [vmem:[#allocation0] sm:$0x1] %vm63, %v62
    %s65 = scalar_lea.vmem %s0, 5
    %v66 = vld [vmem:[%s65] sm:$0x1]
    %67 = vrot.lane.b32.xlu0 %v66, 40
    %v68 = vpop.permute.xlu0 %67
    %vm69 = vcmask 392512
    %70 = vst.msk [vmem:[#allocation0] sm:$0x1] %vm69, %v68
    %s71 = scalar_lea.vmem %s0, 4
    %v72 = vld [vmem:[%s71] sm:$0x1]
    %73 = vrot.lane.b32.xlu0 %v72, 32
    %v74 = vpop.permute.xlu0 %73
    %vm75 = vcmask 326912
    %76 = vst.msk [vmem:[#allocation0] sm:$0x1] %vm75, %v74
    %s77 = scalar_lea.vmem %s0, 3
    %v78 = vld [vmem:[%s77] sm:$0x1]
    %79 = vrot.lane.b32.xlu0 %v78, 24
    %v80 = vpop.permute.xlu0 %79
    %vm81 = vcmask 261312
    %82 = vst.msk [vmem:[#allocation0] sm:$0x1] %vm81, %v80
    %s83 = scalar_lea.vmem %s0, 2
    %v84 = vld [vmem:[%s83] sm:$0x1]
    %85 = vrot.lane.b32.xlu0 %v84, 16
    %v86 = vpop.permute.xlu0 %85
    %vm87 = vcmask 195712
    %88 = vst.msk [vmem:[#allocation0] sm:$0x1] %vm87, %v86
    %s89 = scalar_lea.vmem %s0, 1
    %v90 = vld [vmem:[%s89] sm:$0x1]
    %91 = vrot.lane.b32.xlu0 %v90, 8
    %v92 = vpop.permute.xlu0 %91
    %vm93 = vcmask 130112
    %94 = vst.msk [vmem:[#allocation0] sm:$0x1] %vm93, %v92
    %s96 = sshllo.u32 0, 1
    %v98 = vld [vmem:[#allocation0] sm:%s96]
    %s99 = sshllo.u32 0, 1
    %100 = vst [vmem:[%s1] sm:%s99] %v98

// kernel: tile.68
$region0: #{tile.68}
  #allocation0 [shape = 's32[1]{0}', space=sflag, size = 0x4, scoped, tag = 'scoped memory for tile.68']
  %s0 = inlined_call_operand.vmem [shape: f32[4], index: 0, kind: input, shape index: {}]
  %s1 = inlined_call_operand.vmem [shape: f32[16,4], index: 1, kind: output, shape index: {}]
  // Predicated region
  $region2: #{tile.68} parent=0 // pred_check
    _
  $region3: #{tile.68} parent=0 // pred_check_branch
    %3 = sbr.rel (0) target = $region5
  $region4: #{tile.68} parent=0 // pred_region
    _
  $region5: #{tile.68} parent=0 // pred_fallthru
    _
  %v4 = vld [vmem:[%s0] ss:$0 sm:$0xff]
  %5 = vst [vmem:[%s1] sm:$0xff] %v4
  %s6 = scalar_lea.vmem %s1, 8
  %7 = vst [vmem:[%s6] sm:$0xff] %v4

// kernel: tile.69
$region0: #{tile.69}
  %s0 = inlined_call_operand.vmem [shape: f32[16,4], index: 0, kind: input, shape index: {}]
  %s1 = inlined_call_operand.vmem [shape: f32[1,64], index: 1, kind: output, shape index: {}]
  $region1: #{tile.69} parent=0
    #allocation0 [shape = 'u8[4096]{0}', space=vmem, size = 0x1000, scoped, tag = 'scoped mem for output reshape']
    %v2 = vld [vmem:[%s0] sm:$0x1]
    %vm3 = vcmask 31744
    %4 = vst.msk [vmem:[#allocation0] sm:$0x1] %vm3, %v2
    %s5 = scalar_lea.vmem %s0, 15
    %v6 = vld [vmem:[%s5] sm:$0x1]
    %7 = vrot.lane.b32.xlu0 %v6, 60
    %v8 = vpop.permute.xlu0 %7
    %vm9 = vcmask 523744
    %10 = vst.msk [vmem:[#allocation0] sm:$0x1] %vm9, %v8
    %s11 = scalar_lea.vmem %s0, 14
    %v12 = vld [vmem:[%s11] sm:$0x1]
    %13 = vrot.lane.b32.xlu0 %v12, 56
    %v14 = vpop.permute.xlu0 %13
    %vm15 = vcmask 490944
    %16 = vst.msk [vmem:[#allocation0] sm:$0x1] %vm15, %v14
    %s17 = scalar_lea.vmem %s0, 13
    %v18 = vld [vmem:[%s17] sm:$0x1]
    %19 = vrot.lane.b32.xlu0 %v18, 52
    %v20 = vpop.permute.xlu0 %19
    %vm21 = vcmask 458144
    %22 = vst.msk [vmem:[#allocation0] sm:$0x1] %vm21, %v20
    %s23 = scalar_lea.vmem %s0, 12
    %v24 = vld [vmem:[%s23] sm:$0x1]
    %25 = vrot.lane.b32.xlu0 %v24, 48
    %v26 = vpop.permute.xlu0 %25
    %vm27 = vcmask 425344
    %28 = vst.msk [vmem:[#allocation0] sm:$0x1] %vm27, %v26
    %s29 = scalar_lea.vmem %s0, 11
    %v30 = vld [vmem:[%s29] sm:$0x1]
    %31 = vrot.lane.b32.xlu0 %v30, 44
    %v32 = vpop.permute.xlu0 %31
    %vm33 = vcmask 392544
    %34 = vst.msk [vmem:[#allocation0] sm:$0x1] %vm33, %v32
    %s35 = scalar_lea.vmem %s0, 10
    %v36 = vld [vmem:[%s35] sm:$0x1]
    %37 = vrot.lane.b32.xlu0 %v36, 40
    %v38 = vpop.permute.xlu0 %37
    %vm39 = vcmask 359744
    %40 = vst.msk [vmem:[#allocation0] sm:$0x1] %vm39, %v38
    %s41 = scalar_lea.vmem %s0, 9
    %v42 = vld [vmem:[%s41] sm:$0x1]
    %43 = vrot.lane.b32.xlu0 %v42, 36
    %v44 = vpop.permute.xlu0 %43
    %vm45 = vcmask 326944
    %46 = vst.msk [vmem:[#allocation0] sm:$0x1] %vm45, %v44
    %s47 = scalar_lea.vmem %s0, 8
    %v48 = vld [vmem:[%s47] sm:$0x1]
    %49 = vrot.lane.b32.xlu0 %v48, 32
    %v50 = vpop.permute.xlu0 %49
    %vm51 = vcmask 294144
    %52 = vst.msk [vmem:[#allocation0] sm:$0x1] %vm51, %v50
    %s53 = scalar_lea.vmem %s0, 7
    %v54 = vld [vmem:[%s53] sm:$0x1]
    %55 = vrot.lane.b32.xlu0 %v54, 28
    %v56 = vpop.permute.xlu0 %55
    %vm57 = vcmask 261344
    %58 = vst.msk [vmem:[#allocation0] sm:$0x1] %vm57, %v56
    %s59 = scalar_lea.vmem %s0, 6
    %v60 = vld [vmem:[%s59] sm:$0x1]
    %61 = vrot.lane.b32.xlu0 %v60, 24
    %v62 = vpop.permute.xlu0 %61
    %vm63 = vcmask 228544
    %64 = vst.msk [vmem:[#allocation0] sm:$0x1] %vm63, %v62
    %s65 = scalar_lea.vmem %s0, 5
    %v66 = vld [vmem:[%s65] sm:$0x1]
    %67 = vrot.lane.b32.xlu0 %v66, 20
    %v68 = vpop.permute.xlu0 %67
    %vm69 = vcmask 195744
    %70 = vst.msk [vmem:[#allocation0] sm:$0x1] %vm69, %v68
    %s71 = scalar_lea.vmem %s0, 4
    %v72 = vld [vmem:[%s71] sm:$0x1]
    %73 = vrot.lane.b32.xlu0 %v72, 16
    %v74 = vpop.permute.xlu0 %73
    %vm75 = vcmask 162944
    %76 = vst.msk [vmem:[#allocation0] sm:$0x1] %vm75, %v74
    %s77 = scalar_lea.vmem %s0, 3
    %v78 = vld [vmem:[%s77] sm:$0x1]
    %79 = vrot.lane.b32.xlu0 %v78, 12
    %v80 = vpop.permute.xlu0 %79
    %vm81 = vcmask 130144
    %82 = vst.msk [vmem:[#allocation0] sm:$0x1] %vm81, %v80
    %s83 = scalar_lea.vmem %s0, 2
    %v84 = vld [vmem:[%s83] sm:$0x1]
    %85 = vrot.lane.b32.xlu0 %v84, 8
    %v86 = vpop.permute.xlu0 %85
    %vm87 = vcmask 97344
    %88 = vst.msk [vmem:[#allocation0] sm:$0x1] %vm87, %v86
    %s89 = scalar_lea.vmem %s0, 1
    %v90 = vld [vmem:[%s89] sm:$0x1]
    %91 = vrot.lane.b32.xlu0 %v90, 4
    %v92 = vpop.permute.xlu0 %91
    %vm93 = vcmask 64544
    %94 = vst.msk [vmem:[#allocation0] sm:$0x1] %vm93, %v92
    %s96 = sshllo.u32 0, 1
    %v98 = vld [vmem:[#allocation0] sm:%s96]
    %s99 = sshllo.u32 0, 1
    %100 = vst [vmem:[%s1] sm:%s99] %v98

// kernel: residual_conv_forward.3
$region0: #{residual_conv_forward.3}
  #allocation0 [shape = 'u32[]', space=smem, size = 0x4, offset = 0x4, fixed_abs, tag = 'smem constant byte address 0x4 - core index']
  #allocation1 [shape = 'u32[144,128]{1,0:T(1,128)}', space=vmem, size = 0x12000, scoped, tag = 'internal scratch']
  %s0 = inlined_call_operand.vmem [shape: f32[2,16,64], index: 0, kind: input, shape index: {}]
  %s1 = inlined_call_operand.vmem [shape: f32[2,1,64], index: 1, kind: output, shape index: {0}]
  %s2 = inlined_call_operand.vmem [shape: f32[2,1,64], index: 2, kind: output, shape index: {1}]
  %3 = xla_tuple %s1, %s2
  %s4 = sld [smem:[#allocation0]]
  $region45: #{residual_conv_forward.3} parent=0
    _
  %s6 = ssub.s32 1, %s4
  %s7 = scalar_select 0, %s6, %s4
  loop: start=0, step=1, limit=4
  $region2: #{residual_conv_forward.3} parent=0 // loop_pre_header
    _
  $region3: #{residual_conv_forward.3} parent=0 // loop_header
    %s9 = sphi 0, %s13
    %p10 = scmp.ge.s32.totalorder %s9, 4
    %s19 = sphi 0, %s21
    %s22 = sphi 0, %s19
    %s23 = sphi 0, %s22
    %s39 = sphi 0, %s23
    %s45 = sphi 0, %s47
    %s48 = sphi 0, %s45
    %s49 = sphi 0, %s48
    %s65 = sphi 0, %s49
    %s71 = sphi 0, %s73
    %s74 = sphi 0, %s71
    %s75 = sphi 0, %s74
    %s91 = sphi 0, %s75
  $region4: #{residual_conv_forward.3} parent=0 // loop_header_branch
    %12 = sbr.rel (%p10) target = $region8
  $region5: #{residual_conv_forward.3} parent=0 // loop_body
    %s14 = ssub.s32 %s9, 1
    %s15 = ssub.s32 %s9, 2
    %s16 = sadd.s32 %s9, 1
    %s17 = ssub.s32 %s9, %s16
    %p18 = scmp.eq.s32.totalorder %s17, 0
    %s20 = sadd.s32 %s19, 1
    %s21 = scalar_select %p18, %s19, %s20
    %p24 = pneg %p18
    %p25 = scmp.eq.s32.totalorder %s9, 1
    %p26 = por %p24, %p25
    %p27 = scmp.ne.s32.totalorder %s19, %s22
    %p28 = scmp.eq.s32.totalorder %s9, 0
    %p29 = por %p27, %p28
    %p30 = scmp.ne.s32.totalorder %s19, %s22
    %p31 = scmp.eq.s32.totalorder %s14, 1
    %p32 = por %p30, %p31
    %p33 = scmp.ne.s32.totalorder %s22, %s23
    %p34 = scmp.eq.s32.totalorder %s14, 0
    %p35 = por %p33, %p34
    %p36 = scmp.ne.s32.totalorder %s22, %s23
    %p37 = scmp.eq.s32.totalorder %s15, 1
    %p38 = por %p36, %p37
    %p40 = scmp.ne.s32.totalorder %s23, %s39
    %p41 = scmp.eq.s32.totalorder %s15, 0
    %p42 = por %p40, %p41
    %s43 = ssub.s32 %s9, %s16
    %p44 = scmp.eq.s32.totalorder %s43, 0
    %s46 = sadd.s32 %s45, 1
    %s47 = scalar_select %p44, %s45, %s46
    %p50 = pneg %p44
    %p51 = scmp.eq.s32.totalorder %s9, 1
    %p52 = por %p50, %p51
    %p53 = scmp.ne.s32.totalorder %s45, %s48
    %p54 = scmp.eq.s32.totalorder %s9, 0
    %p55 = por %p53, %p54
    %p56 = scmp.ne.s32.totalorder %s45, %s48
    %p57 = scmp.eq.s32.totalorder %s14, 1
    %p58 = por %p56, %p57
    %p59 = scmp.ne.s32.totalorder %s48, %s49
    %p60 = scmp.eq.s32.totalorder %s14, 0
    %p61 = por %p59, %p60
    %p62 = scmp.ne.s32.totalorder %s48, %s49
    %p63 = scmp.eq.s32.totalorder %s15, 1
    %p64 = por %p62, %p63
    %p66 = scmp.ne.s32.totalorder %s49, %s65
    %p67 = scmp.eq.s32.totalorder %s15, 0
    %p68 = por %p66, %p67
    %s69 = ssub.s32 %s9, %s16
    %p70 = scmp.eq.s32.totalorder %s69, 0
    %s72 = sadd.s32 %s71, 1
    %s73 = scalar_select %p70, %s71, %s72
    %p76 = pneg %p70
    %p77 = scmp.eq.s32.totalorder %s9, 1
    %p78 = por %p76, %p77
    %p79 = scmp.ne.s32.totalorder %s71, %s74
    %p80 = scmp.eq.s32.totalorder %s9, 0
    %p81 = por %p79, %p80
    %p82 = scmp.ne.s32.totalorder %s71, %s74
    %p83 = scmp.eq.s32.totalorder %s14, 1
    %p84 = por %p82, %p83
    %p85 = scmp.ne.s32.totalorder %s74, %s75
    %p86 = scmp.eq.s32.totalorder %s14, 0
    %p87 = por %p85, %p86
    %p88 = scmp.ne.s32.totalorder %s74, %s75
    %p89 = scmp.eq.s32.totalorder %s15, 1
    %p90 = por %p88, %p89
    %p92 = scmp.ne.s32.totalorder %s75, %s91
    %p93 = scmp.eq.s32.totalorder %s15, 0
    %p94 = por %p92, %p93
    %p95 = scmp.le.s32.totalorder 1, %s9
    %p96 = scmp.lt.s32.totalorder %s9, 3
    %p97 = pnand %p95, %p96
    %p98 = pneg %p97
    // Predicated region
    $region9: #{residual_conv_forward.3} parent=5 // pred_check
      _
    $region10: #{residual_conv_forward.3} parent=5 // pred_check_branch
      %100 = sbr.rel (%p97) target = $region12
    $region11: #{residual_conv_forward.3} parent=5 // pred_region
      %s101 = ssub.s32 %s9, 1
    $region12: #{residual_conv_forward.3} parent=5 // pred_fallthru
      _
    %p102 = scmp.lt.s32.totalorder %s9, 2
    // Predicated region
    $region13: #{residual_conv_forward.3} parent=5 // pred_check
      %p103 = pneg %p102
    $region14: #{residual_conv_forward.3} parent=5 // pred_check_branch
      %105 = sbr.rel (%p103) target = $region16
    $region15: #{residual_conv_forward.3} parent=5 // pred_region
      // Predicated region
      $region17: #{residual_conv_forward.3} parent=15 // pred_check
        %p106 = pneg %p29
      $region18: #{residual_conv_forward.3} parent=15 // pred_check_branch
        %108 = sbr.rel (%p106) target = $region20
      $region19: #{residual_conv_forward.3} parent=15 // pred_region
        %p109 = scmp.lt.s32.totalorder %s9, 1
        %s110 = scalar_select %p109, %s9, 1
        %s111 = smul.addr %s110, 2
        %s112 = smul.addr %s111, 8
        %s113 = scalar_lea.vmem %s0, %s112
      $region20: #{residual_conv_forward.3} parent=15 // pred_fallthru
        _
    $region16: #{residual_conv_forward.3} parent=5 // pred_fallthru
      _
    %p114 = scmp.le.s32.totalorder 1, %s9
    %p115 = scmp.lt.s32.totalorder %s9, 3
    %p116 = pnand %p114, %p115
    %p117 = pneg %p116
    // Predicated region
    $region21: #{residual_conv_forward.3} parent=5 // pred_check
      _
    $region22: #{residual_conv_forward.3} parent=5 // pred_check_branch
      %119 = sbr.rel (%p116) target = $region24
    $region23: #{residual_conv_forward.3} parent=5 // pred_region
      %s120 = ssub.s32 %s9, 1
      %p121 = scmp.lt.s32.totalorder %s14, 1
      %s122 = scalar_select %p121, %s14, 1
      %s123 = smul.addr %s122, 2
      %s124 = smul.addr %s123, 8
      %s125 = scalar_lea.vmem %s0, %s124
      %p126 = pneg %p35
      %p127 = pneg %p32
      %p128 = pneg %p61
      %p129 = pneg %p58
      %p130 = scmp.lt.s32.totalorder %s14, 1
      %s131 = scalar_select %p130, %s14, 1
      %s132 = scalar_lea.vmem %s1, %s131
      %p133 = pneg %p87
      %p134 = pneg %p84
      %p135 = scmp.lt.s32.totalorder %s14, 1
      %s136 = scalar_select %p135, %s14, 1
      %s137 = scalar_lea.vmem %s2, %s136
      %p138 = scmp.lt.s32.totalorder %s14, 1
      %s139 = scalar_select %p138, %s14, 1
      %s140 = smul.addr %s139, 2
      %s141 = smul.addr %s140, 8
      %s142 = scalar_lea.vmem %s0, %s141
      %p143 = scmp.lt.s32.totalorder %s14, 1
      %s144 = scalar_select %p143, %s14, 1
      %s145 = scalar_lea.vmem %s1, %s144
      %p146 = scmp.lt.s32.totalorder %s14, 1
      %s147 = scalar_select %p146, %s14, 1
      %s148 = scalar_lea.vmem %s2, %s147
      %v149 = vld [vmem:[%s142] sm:$0xff]
      %v150 = vld [vmem:[%s142 + $0x8] sm:$0xff]
      %vm151 = vcmask 523264
      %v152 = vsel %vm151, %v149, 0.0
      %v153 = vsel %vm151, %v150, 0.0
      %v154 = vadd.f32 %v152, %v153
      %v155 = vrot.slane %v154, 4
      %v156 = vadd.f32 %v154, %v155
      %v157 = vrot.slane %v156, 2
      %v158 = vadd.f32 %v156, %v157
      %v159 = vrot.slane %v158, 1
      %v160 = vadd.f32 %v158, %v159
      %vm161 = vcmask 516096
      %162 = vst.msk [vmem:[%s145] sm:$0x1] %vm161, %v160
      %v163 = vmul.f32 %v149, %v149
      %v164 = vmul.f32 %v150, %v150
      %v165 = vsel %vm151, %v163, 0.0
      %v166 = vsel %vm151, %v164, 0.0
      %v167 = vadd.f32 %v165, %v166
      %v168 = vrot.slane %v167, 4
      %v169 = vadd.f32 %v167, %v168
      %v170 = vrot.slane %v169, 2
      %v171 = vadd.f32 %v169, %v170
      %v172 = vrot.slane %v171, 1
      %v173 = vadd.f32 %v171, %v172
      %174 = vst.msk [vmem:[%s148] sm:$0x1] %vm161, %v173
      %p175 = scmp.lt.s32.totalorder %s14, 1
      %s176 = scalar_select %p175, %s14, 1
      %s177 = scalar_lea.vmem %s1, %s176
      %p178 = scmp.lt.s32.totalorder %s14, 1
      %s179 = scalar_select %p178, %s14, 1
      %s180 = scalar_lea.vmem %s2, %s179
      // Predicated region
      $region25: #{residual_conv_forward.3} parent=23 // pred_check
        %p181 = pneg %p58
      $region26: #{residual_conv_forward.3} parent=23 // pred_check_branch
        %183 = sbr.rel (%p181) target = $region28
      $region27: #{residual_conv_forward.3} parent=23 // pred_region
        _
      $region28: #{residual_conv_forward.3} parent=23 // pred_fallthru
        _
      // Predicated region
      $region29: #{residual_conv_forward.3} parent=23 // pred_check
        %p184 = pneg %p84
      $region30: #{residual_conv_forward.3} parent=23 // pred_check_branch
        %186 = sbr.rel (%p184) target = $region32
      $region31: #{residual_conv_forward.3} parent=23 // pred_region
        _
      $region32: #{residual_conv_forward.3} parent=23 // pred_fallthru
        _
    $region24: #{residual_conv_forward.3} parent=5 // pred_fallthru
      _
    %p187 = scmp.le.s32.totalorder 2, %s9
    // Predicated region
    $region33: #{residual_conv_forward.3} parent=5 // pred_check
      %p188 = pneg %p187
    $region34: #{residual_conv_forward.3} parent=5 // pred_check_branch
      %190 = sbr.rel (%p188) target = $region36
    $region35: #{residual_conv_forward.3} parent=5 // pred_region
      %s191 = ssub.s32 %s9, 2
      // Predicated region
      $region37: #{residual_conv_forward.3} parent=35 // pred_check
        %p192 = pneg %p64
      $region38: #{residual_conv_forward.3} parent=35 // pred_check_branch
        %194 = sbr.rel (%p192) target = $region40
      $region39: #{residual_conv_forward.3} parent=35 // pred_region
        %p195 = scmp.lt.s32.totalorder %s15, 1
        %s196 = scalar_select %p195, %s15, 1
        %s197 = scalar_lea.vmem %s1, %s196
      $region40: #{residual_conv_forward.3} parent=35 // pred_fallthru
        _
      // Predicated region
      $region41: #{residual_conv_forward.3} parent=35 // pred_check
        %p198 = pneg %p90
      $region42: #{residual_conv_forward.3} parent=35 // pred_check_branch
        %200 = sbr.rel (%p198) target = $region44
      $region43: #{residual_conv_forward.3} parent=35 // pred_region
        %p201 = scmp.lt.s32.totalorder %s15, 1
        %s202 = scalar_select %p201, %s15, 1
        %s203 = scalar_lea.vmem %s2, %s202
      $region44: #{residual_conv_forward.3} parent=35 // pred_fallthru
        _
    $region36: #{residual_conv_forward.3} parent=5 // pred_fallthru
      _
  $region6: #{residual_conv_forward.3} parent=0 // loop_footer
    %s13 = sadd.s32 1, %s9
  $region7: #{residual_conv_forward.3} parent=0 // loop_footer_branch
    %8 = sbr.rel target = $region3
  $region8: #{residual_conv_forward.3} parent=0 // loop_exit
    _

// kernel: residual_conv_forward.4
$region0: #{residual_conv_forward.4}
  #allocation0 [shape = 'u32[]', space=smem, size = 0x4, offset = 0x4, fixed_abs, tag = 'smem constant byte address 0x4 - core index']
  #allocation1 [shape = 'u32[144,128]{1,0:T(1,128)}', space=vmem, size = 0x12000, scoped, tag = 'internal scratch']
  #allocation2 [shape = 'bf16[1,18,64]{2,1,0:T(8,128)(2,1)}', space=vmem, size = 0x1800, scoped, tag = 'scratch operand']
  #allocation3 [shape = 'bf16[1,18,64]{2,1,0:T(8,128)(2,1)}', space=vmem, size = 0x1800, scoped, tag = 'scratch operand']
  %s0 = inlined_call_operand.vmem [shape: f32[2,16,64], index: 0, kind: input, shape index: {}]
  %s1 = inlined_call_operand.vmem [shape: f32[1,64], index: 1, kind: input, shape index: {}]
  %s2 = inlined_call_operand.vmem [shape: f32[1,64], index: 2, kind: input, shape index: {}]
  %s3 = inlined_call_operand.vmem [shape: bf16[3,64,128], index: 3, kind: input, shape index: {}]
  %s4 = inlined_call_operand.vmem [shape: f32[1,128], index: 4, kind: input, shape index: {}]
  %s5 = inlined_call_operand.vmem [shape: bf16[3,64,128], index: 5, kind: input, shape index: {}]
  %s6 = inlined_call_operand.vmem [shape: f32[1,128], index: 6, kind: input, shape index: {}]
  %s7 = inlined_call_operand.vmem [shape: bf16[2,16,128], index: 7, kind: output, shape index: {0}]
  %s8 = inlined_call_operand.vmem [shape: bf16[2,16,128], index: 8, kind: output, shape index: {1}]
  %s9 = inlined_call_operand.vmem [shape: f32[2,1,128], index: 9, kind: output, shape index: {2}]
  %s10 = inlined_call_operand.vmem [shape: f32[2,1,128], index: 10, kind: output, shape index: {3}]
  %s11 = inlined_call_operand.vmem [shape: f32[2,1,128], index: 11, kind: output, shape index: {4}]
  %s12 = inlined_call_operand.vmem [shape: f32[2,1,128], index: 12, kind: output, shape index: {5}]
  %13 = xla_tuple %s7, %s8, %s9, %s10, %s11, %s12
  %s14 = sld [smem:[#allocation0]]
  $region101: #{residual_conv_forward.4} parent=0
    _
  %s16 = ssub.s32 1, %s14
  %s17 = scalar_select 0, %s16, %s14
  loop: start=0, step=1, limit=4
  $region2: #{residual_conv_forward.4} parent=0 // loop_pre_header
    _
  $region3: #{residual_conv_forward.4} parent=0 // loop_header
    %s19 = sphi 0, %s23
    %p20 = scmp.ge.s32.totalorder %s19, 4
    %s29 = sphi 0, %s31
    %s32 = sphi 0, %s29
    %s33 = sphi 0, %s32
    %s49 = sphi 0, %s33
    %s53 = sphi 0, %s53
    %s55 = sphi 0, %s53
    %s56 = sphi 0, %s55
    %s70 = sphi 0, %s56
    %s74 = sphi 0, %s74
    %s76 = sphi 0, %s74
    %s77 = sphi 0, %s76
    %s91 = sphi 0, %s77
    %s95 = sphi 0, %s95
    %s97 = sphi 0, %s95
    %s98 = sphi 0, %s97
    %s112 = sphi 0, %s98
    %s116 = sphi 0, %s116
    %s118 = sphi 0, %s116
    %s119 = sphi 0, %s118
    %s133 = sphi 0, %s119
    %s137 = sphi 0, %s137
    %s139 = sphi 0, %s137
    %s140 = sphi 0, %s139
    %s154 = sphi 0, %s140
    %s158 = sphi 0, %s158
    %s160 = sphi 0, %s158
    %s161 = sphi 0, %s160
    %s175 = sphi 0, %s161
    %s181 = sphi 0, %s183
    %s184 = sphi 0, %s181
    %s185 = sphi 0, %s184
    %s201 = sphi 0, %s185
    %s207 = sphi 0, %s209
    %s210 = sphi 0, %s207
    %s211 = sphi 0, %s210
    %s227 = sphi 0, %s211
    %s233 = sphi 0, %s235
    %s236 = sphi 0, %s233
    %s237 = sphi 0, %s236
    %s253 = sphi 0, %s237
    %s259 = sphi 0, %s261
    %s262 = sphi 0, %s259
    %s263 = sphi 0, %s262
    %s279 = sphi 0, %s263
    %s285 = sphi 0, %s287
    %s288 = sphi 0, %s285
    %s289 = sphi 0, %s288
    %s305 = sphi 0, %s289
    %s311 = sphi 0, %s313
    %s314 = sphi 0, %s311
    %s315 = sphi 0, %s314
    %s331 = sphi 0, %s315
  $region4: #{residual_conv_forward.4} parent=0 // loop_header_branch
    %22 = sbr.rel (%p20) target = $region8
  $region5: #{residual_conv_forward.4} parent=0 // loop_body
    %s24 = ssub.s32 %s19, 1
    %s25 = ssub.s32 %s19, 2
    %s26 = sadd.s32 %s19, 1
    %s27 = ssub.s32 %s19, %s26
    %p28 = scmp.eq.s32.totalorder %s27, 0
    %s30 = sadd.s32 %s29, 1
    %s31 = scalar_select %p28, %s29, %s30
    %p34 = pneg %p28
    %p35 = scmp.eq.s32.totalorder %s19, 1
    %p36 = por %p34, %p35
    %p37 = scmp.ne.s32.totalorder %s29, %s32
    %p38 = scmp.eq.s32.totalorder %s19, 0
    %p39 = por %p37, %p38
    %p40 = scmp.ne.s32.totalorder %s29, %s32
    %p41 = scmp.eq.s32.totalorder %s24, 1
    %p42 = por %p40, %p41
    %p43 = scmp.ne.s32.totalorder %s32, %s33
    %p44 = scmp.eq.s32.totalorder %s24, 0
    %p45 = por %p43, %p44
    %p46 = scmp.ne.s32.totalorder %s32, %s33
    %p47 = scmp.eq.s32.totalorder %s25, 1
    %p48 = por %p46, %p47
    %p50 = scmp.ne.s32.totalorder %s33, %s49
    %p51 = scmp.eq.s32.totalorder %s25, 0
    %p52 = por %p50, %p51
    %s54 = sadd.s32 %s53, 1
    %p57 = scmp.eq.s32.totalorder %s19, 1
    %p58 = scmp.ne.s32.totalorder %s53, %s55
    %p59 = scmp.eq.s32.totalorder %s19, 0
    %p60 = por %p58, %p59
    %p61 = scmp.ne.s32.totalorder %s53, %s55
    %p62 = scmp.eq.s32.totalorder %s24, 1
    %p63 = por %p61, %p62
    %p64 = scmp.ne.s32.totalorder %s55, %s56
    %p65 = scmp.eq.s32.totalorder %s24, 0
    %p66 = por %p64, %p65
    %p67 = scmp.ne.s32.totalorder %s55, %s56
    %p68 = scmp.eq.s32.totalorder %s25, 1
    %p69 = por %p67, %p68
    %p71 = scmp.ne.s32.totalorder %s56, %s70
    %p72 = scmp.eq.s32.totalorder %s25, 0
    %p73 = por %p71, %p72
    %s75 = sadd.s32 %s74, 1
    %p78 = scmp.eq.s32.totalorder %s19, 1
    %p79 = scmp.ne.s32.totalorder %s74, %s76
    %p80 = scmp.eq.s32.totalorder %s19, 0
    %p81 = por %p79, %p80
    %p82 = scmp.ne.s32.totalorder %s74, %s76
    %p83 = scmp.eq.s32.totalorder %s24, 1
    %p84 = por %p82, %p83
    %p85 = scmp.ne.s32.totalorder %s76, %s77
    %p86 = scmp.eq.s32.totalorder %s24, 0
    %p87 = por %p85, %p86
    %p88 = scmp.ne.s32.totalorder %s76, %s77
    %p89 = scmp.eq.s32.totalorder %s25, 1
    %p90 = por %p88, %p89
    %p92 = scmp.ne.s32.totalorder %s77, %s91
    %p93 = scmp.eq.s32.totalorder %s25, 0
    %p94 = por %p92, %p93
    %s96 = sadd.s32 %s95, 1
    %p99 = scmp.eq.s32.totalorder %s19, 1
    %p100 = scmp.ne.s32.totalorder %s95, %s97
    %p101 = scmp.eq.s32.totalorder %s19, 0
    %p102 = por %p100, %p101
    %p103 = scmp.ne.s32.totalorder %s95, %s97
    %p104 = scmp.eq.s32.totalorder %s24, 1
    %p105 = por %p103, %p104
    %p106 = scmp.ne.s32.totalorder %s97, %s98
    %p107 = scmp.eq.s32.totalorder %s24, 0
    %p108 = por %p106, %p107
    %p109 = scmp.ne.s32.totalorder %s97, %s98
    %p110 = scmp.eq.s32.totalorder %s25, 1
    %p111 = por %p109, %p110
    %p113 = scmp.ne.s32.totalorder %s98, %s112
    %p114 = scmp.eq.s32.totalorder %s25, 0
    %p115 = por %p113, %p114
    %s117 = sadd.s32 %s116, 1
    %p120 = scmp.eq.s32.totalorder %s19, 1
    %p121 = scmp.ne.s32.totalorder %s116, %s118
    %p122 = scmp.eq.s32.totalorder %s19, 0
    %p123 = por %p121, %p122
    %p124 = scmp.ne.s32.totalorder %s116, %s118
    %p125 = scmp.eq.s32.totalorder %s24, 1
    %p126 = por %p124, %p125
    %p127 = scmp.ne.s32.totalorder %s118, %s119
    %p128 = scmp.eq.s32.totalorder %s24, 0
    %p129 = por %p127, %p128
    %p130 = scmp.ne.s32.totalorder %s118, %s119
    %p131 = scmp.eq.s32.totalorder %s25, 1
    %p132 = por %p130, %p131
    %p134 = scmp.ne.s32.totalorder %s119, %s133
    %p135 = scmp.eq.s32.totalorder %s25, 0
    %p136 = por %p134, %p135
    %s138 = sadd.s32 %s137, 1
    %p141 = scmp.eq.s32.totalorder %s19, 1
    %p142 = scmp.ne.s32.totalorder %s137, %s139
    %p143 = scmp.eq.s32.totalorder %s19, 0
    %p144 = por %p142, %p143
    %p145 = scmp.ne.s32.totalorder %s137, %s139
    %p146 = scmp.eq.s32.totalorder %s24, 1
    %p147 = por %p145, %p146
    %p148 = scmp.ne.s32.totalorder %s139, %s140
    %p149 = scmp.eq.s32.totalorder %s24, 0
    %p150 = por %p148, %p149
    %p151 = scmp.ne.s32.totalorder %s139, %s140
    %p152 = scmp.eq.s32.totalorder %s25, 1
    %p153 = por %p151, %p152
    %p155 = scmp.ne.s32.totalorder %s140, %s154
    %p156 = scmp.eq.s32.totalorder %s25, 0
    %p157 = por %p155, %p156
    %s159 = sadd.s32 %s158, 1
    %p162 = scmp.eq.s32.totalorder %s19, 1
    %p163 = scmp.ne.s32.totalorder %s158, %s160
    %p164 = scmp.eq.s32.totalorder %s19, 0
    %p165 = por %p163, %p164
    %p166 = scmp.ne.s32.totalorder %s158, %s160
    %p167 = scmp.eq.s32.totalorder %s24, 1
    %p168 = por %p166, %p167
    %p169 = scmp.ne.s32.totalorder %s160, %s161
    %p170 = scmp.eq.s32.totalorder %s24, 0
    %p171 = por %p169, %p170
    %p172 = scmp.ne.s32.totalorder %s160, %s161
    %p173 = scmp.eq.s32.totalorder %s25, 1
    %p174 = por %p172, %p173
    %p176 = scmp.ne.s32.totalorder %s161, %s175
    %p177 = scmp.eq.s32.totalorder %s25, 0
    %p178 = por %p176, %p177
    %s179 = ssub.s32 %s19, %s26
    %p180 = scmp.eq.s32.totalorder %s179, 0
    %s182 = sadd.s32 %s181, 1
    %s183 = scalar_select %p180, %s181, %s182
    %p186 = pneg %p180
    %p187 = scmp.eq.s32.totalorder %s19, 1
    %p188 = por %p186, %p187
    %p189 = scmp.ne.s32.totalorder %s181, %s184
    %p190 = scmp.eq.s32.totalorder %s19, 0
    %p191 = por %p189, %p190
    %p192 = scmp.ne.s32.totalorder %s181, %s184
    %p193 = scmp.eq.s32.totalorder %s24, 1
    %p194 = por %p192, %p193
    %p195 = scmp.ne.s32.totalorder %s184, %s185
    %p196 = scmp.eq.s32.totalorder %s24, 0
    %p197 = por %p195, %p196
    %p198 = scmp.ne.s32.totalorder %s184, %s185
    %p199 = scmp.eq.s32.totalorder %s25, 1
    %p200 = por %p198, %p199
    %p202 = scmp.ne.s32.totalorder %s185, %s201
    %p203 = scmp.eq.s32.totalorder %s25, 0
    %p204 = por %p202, %p203
    %s205 = ssub.s32 %s19, %s26
    %p206 = scmp.eq.s32.totalorder %s205, 0
    %s208 = sadd.s32 %s207, 1
    %s209 = scalar_select %p206, %s207, %s208
    %p212 = pneg %p206
    %p213 = scmp.eq.s32.totalorder %s19, 1
    %p214 = por %p212, %p213
    %p215 = scmp.ne.s32.totalorder %s207, %s210
    %p216 = scmp.eq.s32.totalorder %s19, 0
    %p217 = por %p215, %p216
    %p218 = scmp.ne.s32.totalorder %s207, %s210
    %p219 = scmp.eq.s32.totalorder %s24, 1
    %p220 = por %p218, %p219
    %p221 = scmp.ne.s32.totalorder %s210, %s211
    %p222 = scmp.eq.s32.totalorder %s24, 0
    %p223 = por %p221, %p222
    %p224 = scmp.ne.s32.totalorder %s210, %s211
    %p225 = scmp.eq.s32.totalorder %s25, 1
    %p226 = por %p224, %p225
    %p228 = scmp.ne.s32.totalorder %s211, %s227
    %p229 = scmp.eq.s32.totalorder %s25, 0
    %p230 = por %p228, %p229
    %s231 = ssub.s32 %s19, %s26
    %p232 = scmp.eq.s32.totalorder %s231, 0
    %s234 = sadd.s32 %s233, 1
    %s235 = scalar_select %p232, %s233, %s234
    %p238 = pneg %p232
    %p239 = scmp.eq.s32.totalorder %s19, 1
    %p240 = por %p238, %p239
    %p241 = scmp.ne.s32.totalorder %s233, %s236
    %p242 = scmp.eq.s32.totalorder %s19, 0
    %p243 = por %p241, %p242
    %p244 = scmp.ne.s32.totalorder %s233, %s236
    %p245 = scmp.eq.s32.totalorder %s24, 1
    %p246 = por %p244, %p245
    %p247 = scmp.ne.s32.totalorder %s236, %s237
    %p248 = scmp.eq.s32.totalorder %s24, 0
    %p249 = por %p247, %p248
    %p250 = scmp.ne.s32.totalorder %s236, %s237
    %p251 = scmp.eq.s32.totalorder %s25, 1
    %p252 = por %p250, %p251
    %p254 = scmp.ne.s32.totalorder %s237, %s253
    %p255 = scmp.eq.s32.totalorder %s25, 0
    %p256 = por %p254, %p255
    %s257 = ssub.s32 %s19, %s26
    %p258 = scmp.eq.s32.totalorder %s257, 0
    %s260 = sadd.s32 %s259, 1
    %s261 = scalar_select %p258, %s259, %s260
    %p264 = pneg %p258
    %p265 = scmp.eq.s32.totalorder %s19, 1
    %p266 = por %p264, %p265
    %p267 = scmp.ne.s32.totalorder %s259, %s262
    %p268 = scmp.eq.s32.totalorder %s19, 0
    %p269 = por %p267, %p268
    %p270 = scmp.ne.s32.totalorder %s259, %s262
    %p271 = scmp.eq.s32.totalorder %s24, 1
    %p272 = por %p270, %p271
    %p273 = scmp.ne.s32.totalorder %s262, %s263
    %p274 = scmp.eq.s32.totalorder %s24, 0
    %p275 = por %p273, %p274
    %p276 = scmp.ne.s32.totalorder %s262, %s263
    %p277 = scmp.eq.s32.totalorder %s25, 1
    %p278 = por %p276, %p277
    %p280 = scmp.ne.s32.totalorder %s263, %s279
    %p281 = scmp.eq.s32.totalorder %s25, 0
    %p282 = por %p280, %p281
    %s283 = ssub.s32 %s19, %s26
    %p284 = scmp.eq.s32.totalorder %s283, 0
    %s286 = sadd.s32 %s285, 1
    %s287 = scalar_select %p284, %s285, %s286
    %p290 = pneg %p284
    %p291 = scmp.eq.s32.totalorder %s19, 1
    %p292 = por %p290, %p291
    %p293 = scmp.ne.s32.totalorder %s285, %s288
    %p294 = scmp.eq.s32.totalorder %s19, 0
    %p295 = por %p293, %p294
    %p296 = scmp.ne.s32.totalorder %s285, %s288
    %p297 = scmp.eq.s32.totalorder %s24, 1
    %p298 = por %p296, %p297
    %p299 = scmp.ne.s32.totalorder %s288, %s289
    %p300 = scmp.eq.s32.totalorder %s24, 0
    %p301 = por %p299, %p300
    %p302 = scmp.ne.s32.totalorder %s288, %s289
    %p303 = scmp.eq.s32.totalorder %s25, 1
    %p304 = por %p302, %p303
    %p306 = scmp.ne.s32.totalorder %s289, %s305
    %p307 = scmp.eq.s32.totalorder %s25, 0
    %p308 = por %p306, %p307
    %s309 = ssub.s32 %s19, %s26
    %p310 = scmp.eq.s32.totalorder %s309, 0
    %s312 = sadd.s32 %s311, 1
    %s313 = scalar_select %p310, %s311, %s312
    %p316 = pneg %p310
    %p317 = scmp.eq.s32.totalorder %s19, 1
    %p318 = por %p316, %p317
    %p319 = scmp.ne.s32.totalorder %s311, %s314
    %p320 = scmp.eq.s32.totalorder %s19, 0
    %p321 = por %p319, %p320
    %p322 = scmp.ne.s32.totalorder %s311, %s314
    %p323 = scmp.eq.s32.totalorder %s24, 1
    %p324 = por %p322, %p323
    %p325 = scmp.ne.s32.totalorder %s314, %s315
    %p326 = scmp.eq.s32.totalorder %s24, 0
    %p327 = por %p325, %p326
    %p328 = scmp.ne.s32.totalorder %s314, %s315
    %p329 = scmp.eq.s32.totalorder %s25, 1
    %p330 = por %p328, %p329
    %p332 = scmp.ne.s32.totalorder %s315, %s331
    %p333 = scmp.eq.s32.totalorder %s25, 0
    %p334 = por %p332, %p333
    %p335 = scmp.le.s32.totalorder 1, %s19
    %p336 = scmp.lt.s32.totalorder %s19, 3
    %p337 = pnand %p335, %p336
    %p338 = pneg %p337
    // Predicated region
    $region9: #{residual_conv_forward.4} parent=5 // pred_check
      _
    $region10: #{residual_conv_forward.4} parent=5 // pred_check_branch
      %340 = sbr.rel (%p337) target = $region12
    $region11: #{residual_conv_forward.4} parent=5 // pred_region
      %s341 = ssub.s32 %s19, 1
      // Predicated region
      $region13: #{residual_conv_forward.4} parent=11 // pred_check
        %p342 = pneg %p66
      $region14: #{residual_conv_forward.4} parent=11 // pred_check_branch
        %344 = sbr.rel (%p342) target = $region16
      $region15: #{residual_conv_forward.4} parent=11 // pred_region
        _
      $region16: #{residual_conv_forward.4} parent=11 // pred_fallthru
        _
      // Predicated region
      $region17: #{residual_conv_forward.4} parent=11 // pred_check
        %p345 = pneg %p87
      $region18: #{residual_conv_forward.4} parent=11 // pred_check_branch
        %347 = sbr.rel (%p345) target = $region20
      $region19: #{residual_conv_forward.4} parent=11 // pred_region
        _
      $region20: #{residual_conv_forward.4} parent=11 // pred_fallthru
        _
      // Predicated region
      $region21: #{residual_conv_forward.4} parent=11 // pred_check
        %p348 = pneg %p108
      $region22: #{residual_conv_forward.4} parent=11 // pred_check_branch
        %350 = sbr.rel (%p348) target = $region24
      $region23: #{residual_conv_forward.4} parent=11 // pred_region
        _
      $region24: #{residual_conv_forward.4} parent=11 // pred_fallthru
        _
      // Predicated region
      $region25: #{residual_conv_forward.4} parent=11 // pred_check
        %p351 = pneg %p129
      $region26: #{residual_conv_forward.4} parent=11 // pred_check_branch
        %353 = sbr.rel (%p351) target = $region28
      $region27: #{residual_conv_forward.4} parent=11 // pred_region
        _
      $region28: #{residual_conv_forward.4} parent=11 // pred_fallthru
        _
      // Predicated region
      $region29: #{residual_conv_forward.4} parent=11 // pred_check
        %p354 = pneg %p150
      $region30: #{residual_conv_forward.4} parent=11 // pred_check_branch
        %356 = sbr.rel (%p354) target = $region32
      $region31: #{residual_conv_forward.4} parent=11 // pred_region
        _
      $region32: #{residual_conv_forward.4} parent=11 // pred_fallthru
        _
      // Predicated region
      $region33: #{residual_conv_forward.4} parent=11 // pred_check
        %p357 = pneg %p171
      $region34: #{residual_conv_forward.4} parent=11 // pred_check_branch
        %359 = sbr.rel (%p357) target = $region36
      $region35: #{residual_conv_forward.4} parent=11 // pred_region
        _
      $region36: #{residual_conv_forward.4} parent=11 // pred_fallthru
        _
    $region12: #{residual_conv_forward.4} parent=5 // pred_fallthru
      _
    %p360 = scmp.lt.s32.totalorder %s19, 2
    // Predicated region
    $region37: #{residual_conv_forward.4} parent=5 // pred_check
      %p361 = pneg %p360
    $region38: #{residual_conv_forward.4} parent=5 // pred_check_branch
      %363 = sbr.rel (%p361) target = $region40
    $region39: #{residual_conv_forward.4} parent=5 // pred_region
      // Predicated region
      $region41: #{residual_conv_forward.4} parent=39 // pred_check
        %p364 = pneg %p39
      $region42: #{residual_conv_forward.4} parent=39 // pred_check_branch
        %366 = sbr.rel (%p364) target = $region44
      $region43: #{residual_conv_forward.4} parent=39 // pred_region
        %p367 = scmp.lt.s32.totalorder %s19, 1
        %s368 = scalar_select %p367, %s19, 1
        %s369 = smul.addr %s368, 2
        %s370 = smul.addr %s369, 8
        %s371 = scalar_lea.vmem %s0, %s370
      $region44: #{residual_conv_forward.4} parent=39 // pred_fallthru
        _
    $region40: #{residual_conv_forward.4} parent=5 // pred_fallthru
      _
    %p372 = scmp.le.s32.totalorder 1, %s19
    %p373 = scmp.lt.s32.totalorder %s19, 3
    %p374 = pnand %p372, %p373
    %p375 = pneg %p374
    // Predicated region
    $region45: #{residual_conv_forward.4} parent=5 // pred_check
      _
    $region46: #{residual_conv_forward.4} parent=5 // pred_check_branch
      %377 = sbr.rel (%p374) target = $region48
    $region47: #{residual_conv_forward.4} parent=5 // pred_region
      %s378 = ssub.s32 %s19, 1
      %p379 = scmp.lt.s32.totalorder %s24, 1
      %s380 = scalar_select %p379, %s24, 1
      %s381 = smul.addr %s380, 2
      %s382 = smul.addr %s381, 8
      %s383 = scalar_lea.vmem %s0, %s382
      %p384 = pneg %p45
      %p385 = pneg %p42
      %p386 = pneg %p66
      %p387 = pneg %p63
      %p388 = pneg %p87
      %p389 = pneg %p84
      %p390 = pneg %p108
      %p391 = pneg %p105
      %p392 = pneg %p129
      %p393 = pneg %p126
      %p394 = pneg %p150
      %p395 = pneg %p147
      %p396 = pneg %p171
      %p397 = pneg %p168
      %p398 = pneg %p197
      %p399 = pneg %p194
      %p400 = scmp.lt.s32.totalorder %s24, 1
      %s401 = scalar_select %p400, %s24, 1
      %s402 = smul.addr %s401, 2
      %s403 = smul.addr %s402, 4
      %s404 = scalar_lea.vmem %s7, %s403
      %p405 = pneg %p223
      %p406 = pneg %p220
      %p407 = scmp.lt.s32.totalorder %s24, 1
      %s408 = scalar_select %p407, %s24, 1
      %s409 = smul.addr %s408, 2
      %s410 = smul.addr %s409, 4
      %s411 = scalar_lea.vmem %s8, %s410
      %p412 = pneg %p249
      %p413 = pneg %p246
      %p414 = scmp.lt.s32.totalorder %s24, 1
      %s415 = scalar_select %p414, %s24, 1
      %s416 = scalar_lea.vmem %s9, %s415
      %p417 = pneg %p275
      %p418 = pneg %p272
      %p419 = scmp.lt.s32.totalorder %s24, 1
      %s420 = scalar_select %p419, %s24, 1
      %s421 = scalar_lea.vmem %s10, %s420
      %p422 = pneg %p301
      %p423 = pneg %p298
      %p424 = scmp.lt.s32.totalorder %s24, 1
      %s425 = scalar_select %p424, %s24, 1
      %s426 = scalar_lea.vmem %s11, %s425
      %p427 = pneg %p327
      %p428 = pneg %p324
      %p429 = scmp.lt.s32.totalorder %s24, 1
      %s430 = scalar_select %p429, %s24, 1
      %s431 = scalar_lea.vmem %s12, %s430
      %p432 = scmp.lt.s32.totalorder %s24, 1
      %s433 = scalar_select %p432, %s24, 1
      %s434 = smul.addr %s433, 2
      %s435 = smul.addr %s434, 8
      %s436 = scalar_lea.vmem %s0, %s435
      %p437 = scmp.lt.s32.totalorder %s24, 1
      %s438 = scalar_select %p437, %s24, 1
      %s439 = smul.addr %s438, 2
      %s440 = smul.addr %s439, 4
      %s441 = scalar_lea.vmem %s7, %s440
      %p442 = scmp.lt.s32.totalorder %s24, 1
      %s443 = scalar_select %p442, %s24, 1
      %s444 = smul.addr %s443, 2
      %s445 = smul.addr %s444, 4
      %s446 = scalar_lea.vmem %s8, %s445
      %p447 = scmp.lt.s32.totalorder %s24, 1
      %s448 = scalar_select %p447, %s24, 1
      %s449 = scalar_lea.vmem %s9, %s448
      %p450 = scmp.lt.s32.totalorder %s24, 1
      %s451 = scalar_select %p450, %s24, 1
      %s452 = scalar_lea.vmem %s10, %s451
      %p453 = scmp.lt.s32.totalorder %s24, 1
      %s454 = scalar_select %p453, %s24, 1
      %s455 = scalar_lea.vmem %s11, %s454
      %p456 = scmp.lt.s32.totalorder %s24, 1
      %s457 = scalar_select %p456, %s24, 1
      %s458 = scalar_lea.vmem %s12, %s457
      %v460 = vld [vmem:[%s436] sm:$0xff]
      %v461 = vld [vmem:[%s436 + $0x8] sm:$0xff]
      %v462 = vld [vmem:[%s1] sm:$0x1]
      %v464 = vlaneseq
      %v465 = vshrl.u32 %v464, 7
      %v466 = vsub.s32 0, %v465
      %v467 = vrot.slane %v462, %v466
      %v469 = vmul.f32 %v460, %v467
      %v470 = vmul.f32 %v461, %v467
      %v471 = vld [vmem:[%s2] sm:$0x1]
      %v473 = vlaneseq
      %v474 = vshrl.u32 %v473, 7
      %v475 = vsub.s32 0, %v474
      %v476 = vrot.slane %v471, %v475
      %v478 = vadd.f32 %v469, %v476
      %v479 = vadd.f32 %v470, %v476
      %v480 = vmax.f32 %v478, 0.0
      %v481 = vmax.f32 %v479, 0.0
      %vm482 = vcmask 516096
      %vm483 = vsmask.f32 256
      %vm484 = vmand %vm482, %vm483
      %v485 = vld [vmem:[#allocation2] sm:$0x1]
      %v486 = vsel %vm484, 0, %v485
      %487 = vst [vmem:[#allocation2] sm:$0x1] %v486
      %vm488 = vsmask.f32 7938
      %vm489 = vmand %vm482, %vm488
      %v490 = vld [vmem:[#allocation2 + $0x8] sm:$0x1]
      %v491 = vsel %vm489, 0, %v490
      %492 = vst [vmem:[#allocation2 + $0x8] sm:$0x1] %v491
      %v493 = vld [vmem:[#allocation3] sm:$0x1]
      %v494 = vsel %vm484, 0, %v493
      %495 = vst [vmem:[#allocation3] sm:$0x1] %v494
      %v496 = vld [vmem:[#allocation3 + $0x8] sm:$0x1]
      %v497 = vsel %vm489, 0, %v496
      %498 = vst [vmem:[#allocation3 + $0x8] sm:$0x1] %v497
      %v499 = vpack.c.bf16 %v481, %v480
      %v501 = vunpack.c.l.b16 %v499
      %v502 = vunpack.c.h.b16 %v499
      %v503 = vpack.c.b16 %v501, %v501
      %v504 = vpack.c.b16 %v502, %v502
      %vm505 = vsmask.f32 4368
      %vm506 = vmor %vm483, %vm505
      %v508 = vshrl.u32 %v503, 16
      %v510 = vrot.slane %v508, 7
      %v511 = vshll.u32 %v503, 16
      %v513 = vor.u32 %v510, %v511
      %v514 = vrot.slane %v510, 4
      %v516 = vshrl.u32 %v504, 16
      %v518 = vrot.slane %v516, 7
      %v519 = vshll.u32 %v504, 16
      %v521 = vor.u32 %v518, %v519
      %v522 = vsel %vm506, %v514, %v521
      %v523 = vrot.slane %v518, 4
      %vm527 = vcmask 519168
      %vm528 = vmand %vm527, %vm488
      %v529 = vld [vmem:[#allocation2] sm:$0xf]
      %v530 = vsel %vm528, %v513, %v529
      %531 = vst [vmem:[#allocation2] sm:$0xf] %v530
      %vm532 = vcmask 519168
      %533 = vst.msk [vmem:[#allocation2 + $0x4] sm:$0xf] %vm532, %v522
      %v534 = vld [vmem:[#allocation2 + $0x8] sm:$0x1]
      %v535 = vsel %vm484, %v523, %v534
      %536 = vst [vmem:[#allocation2 + $0x8] sm:$0x1] %v535
      %v537 = vpack.c.bf16 %v461, %v460
      %v539 = vunpack.c.l.b16 %v537
      %v540 = vunpack.c.h.b16 %v537
      %v541 = vpack.c.b16 %v539, %v539
      %v542 = vpack.c.b16 %v540, %v540
      %v544 = vshrl.u32 %v541, 16
      %v546 = vrot.slane %v544, 7
      %v547 = vshll.u32 %v541, 16
      %v549 = vor.u32 %v546, %v547
      %v550 = vrot.slane %v546, 4
      %v552 = vshrl.u32 %v542, 16
      %v554 = vrot.slane %v552, 7
      %v555 = vshll.u32 %v542, 16
      %v557 = vor.u32 %v554, %v555
      %v558 = vsel %vm506, %v550, %v557
      %v559 = vrot.slane %v554, 4
      %v563 = vld [vmem:[#allocation3] sm:$0xf]
      %v564 = vsel %vm528, %v549, %v563
      %565 = vst [vmem:[#allocation3] sm:$0xf] %v564
      %566 = vst.msk [vmem:[#allocation3 + $0x4] sm:$0xf] %vm532, %v558
      %v567 = vld [vmem:[#allocation3 + $0x8] sm:$0x1]
      %v568 = vsel %vm484, %v559, %v567
      %569 = vst [vmem:[#allocation3 + $0x8] sm:$0x1] %v568
      %v570 = vld [vmem:[#allocation2] sm:$0xf]
      %v571 = vld [vmem:[#allocation2 + $0x4] sm:$0xf]
      %v572 = vld [vmem:[%s3] sm:$0xf]
      %v573 = vld [vmem:[%s3 + $0x4] sm:$0xf]
      %v574 = vld [vmem:[%s3 + $0x8] sm:$0xf]
      %v575 = vld [vmem:[%s3 + $0xc] sm:$0xf]
      %v576 = vld [vmem:[%s3 + $0x10] sm:$0xf]
      %v577 = vld [vmem:[%s3 + $0x14] sm:$0xf]
      %v578 = vld [vmem:[%s3 + $0x18] sm:$0xf]
      %v579 = vld [vmem:[%s3 + $0x1c] sm:$0xf]
      %v580 = vld [vmem:[#allocation2 + $0x8] sm:$0x1]
      %s581 = scalar_lea.vmem %s3, 32
      %v582 = vld [vmem:[%s581] sm:$0xf]
      %v583 = vld [vmem:[%s581 + $0x4] sm:$0xf]
      %v584 = vld [vmem:[%s581 + $0x8] sm:$0xf]
      %v585 = vld [vmem:[%s581 + $0xc] sm:$0xf]
      %v586 = vld [vmem:[%s581 + $0x10] sm:$0xf]
      %v587 = vld [vmem:[%s581 + $0x14] sm:$0xf]
      %v588 = vld [vmem:[%s581 + $0x18] sm:$0xf]
      %v589 = vld [vmem:[%s581 + $0x1c] sm:$0xf]
      %v593 = vunpack.c.l.b16 %v570
      %v594 = vunpack.c.l.b16 %v571
      %v595 = vunpack.c.l.b16 %v580
      %v596 = vpack.c.b16 %v594, %v593
      %v597 = vpack.c.b16 %v595, %v595
      %vm598 = vsmask.f32 7424
      %v600 = vshrl.u32 %v596, 16
      %v602 = vshll.u32 %v596, 16
      %v604 = vrot.slane %v602, 1
      %v605 = vor.u32 %v600, %v604
      %v607 = vshll.u32 %v597, 16
      %v609 = vrot.slane %v607, 1
      %v610 = vsel %vm598, %v605, %v609
      %v619 = vunpack.c.l.b16 %v582
      %v620 = vunpack.c.l.b16 %v583
      %v621 = vunpack.c.l.b16 %v584
      %v622 = vunpack.c.l.b16 %v585
      %v623 = vunpack.c.l.b16 %v586
      %v624 = vunpack.c.l.b16 %v587
      %v625 = vunpack.c.l.b16 %v588
      %v626 = vunpack.c.l.b16 %v589
      %v627 = vpack.c.b16 %v620, %v619
      %v628 = vpack.c.b16 %v622, %v621
      %v629 = vpack.c.b16 %v624, %v623
      %v630 = vpack.c.b16 %v626, %v625
      %vm635 = vcmask 523264
      %v637 = vsel %vm635, %v610, 0
      %639 = vmatprep.subr.bf16.mxu0 0
      %640 = vmatpush1.bf16.msra.mxu0 %v627
      %641 = vmatprep.subr.bf16.mxu0 0
      %642 = vmatpush1.bf16.msra.mxu0 %v628
      %643 = vmatprep.subr.bf16.mxu0 0
      %644 = vmatpush1.bf16.msra.mxu0 %v629
      %645 = vmatprep.subr.bf16.mxu0 0
      %646 = vmatpush1.bf16.msra.mxu0 %v630
      %647 = vmatprep.subr.bf16.mxu0 0
      %648 = vmatpush1.bf16.msra.mxu0 0
      %649 = vmatprep.subr.bf16.mxu0 0
      %650 = vmatpush1.bf16.msra.mxu0 0
      %651 = vmatprep.subr.bf16.mxu0 0
      %652 = vmatpush1.bf16.msra.mxu0 0
      %653 = vmatprep.subr.bf16.mxu0 0
      %654 = vmatpush1.bf16.msra.mxu0 0
      %655 = vmatprep.subr.bf16.mxu0 0
      %656 = vmatpush1.bf16.msra.mxu0 0
      %657 = vmatprep.subr.bf16.mxu0 0
      %658 = vmatpush1.bf16.msra.mxu0 0
      %659 = vmatprep.subr.bf16.mxu0 0
      %660 = vmatpush1.bf16.msra.mxu0 0
      %661 = vmatprep.subr.bf16.mxu0 0
      %662 = vmatpush1.bf16.msra.mxu0 0
      %663 = vmatprep.subr.bf16.mxu0 0
      %664 = vmatpush1.bf16.msra.mxu0 0
      %665 = vmatprep.subr.bf16.mxu0 0
      %666 = vmatpush1.bf16.msra.mxu0 0
      %667 = vmatprep.subr.bf16.mxu0 0
      %668 = vmatpush1.bf16.msra.mxu0 0
      %669 = vmatprep.subr.bf16.mxu0 0
      %670 = vmatpush1.bf16.msra.mxu0 0
      %671 = vmatprep.mubr.bf16.mxu0 0
      %672 = vmatmul.mubr.bf16.gmra.mrb[0].mxu0 %v637
      %v673 = vpop.f32.mrb[0].mxu0
      %v674 = vadd.f32 0.0, %v673
      %v675 = vpop.f32.mrb[0].mxu0
      %v676 = vpop.f32.mrb[0].mxu0
      %v677 = vadd.f32 0.0, %v676
      %v678 = vpop.f32.mrb[0].mxu0
      %679 = vdwg.mxu0
      %v688 = vunpack.c.l.b16 %v572
      %v689 = vunpack.c.l.b16 %v573
      %v690 = vunpack.c.l.b16 %v574
      %v691 = vunpack.c.l.b16 %v575
      %v692 = vunpack.c.l.b16 %v576
      %v693 = vunpack.c.l.b16 %v577
      %v694 = vunpack.c.l.b16 %v578
      %v695 = vunpack.c.l.b16 %v579
      %v696 = vpack.c.b16 %v689, %v688
      %v697 = vpack.c.b16 %v691, %v690
      %v698 = vpack.c.b16 %v693, %v692
      %v699 = vpack.c.b16 %v695, %v694
      %v704 = vsel %vm635, %v596, 0
      %706 = vmatprep.subr.bf16.mxu0 0
      %707 = vmatpush1.bf16.msra.mxu0 %v696
      %708 = vmatprep.subr.bf16.mxu0 0
      %709 = vmatpush1.bf16.msra.mxu0 %v697
      %710 = vmatprep.subr.bf16.mxu0 0
      %711 = vmatpush1.bf16.msra.mxu0 %v698
      %712 = vmatprep.subr.bf16.mxu0 0
      %713 = vmatpush1.bf16.msra.mxu0 %v699
      %714 = vmatprep.subr.bf16.mxu0 0
      %715 = vmatpush1.bf16.msra.mxu0 0
      %716 = vmatprep.subr.bf16.mxu0 0
      %717 = vmatpush1.bf16.msra.mxu0 0
      %718 = vmatprep.subr.bf16.mxu0 0
      %719 = vmatpush1.bf16.msra.mxu0 0
      %720 = vmatprep.subr.bf16.mxu0 0
      %721 = vmatpush1.bf16.msra.mxu0 0
      %722 = vmatprep.subr.bf16.mxu0 0
      %723 = vmatpush1.bf16.msra.mxu0 0
      %724 = vmatprep.subr.bf16.mxu0 0
      %725 = vmatpush1.bf16.msra.mxu0 0
      %726 = vmatprep.subr.bf16.mxu0 0
      %727 = vmatpush1.bf16.msra.mxu0 0
      %728 = vmatprep.subr.bf16.mxu0 0
      %729 = vmatpush1.bf16.msra.mxu0 0
      %730 = vmatprep.subr.bf16.mxu0 0
      %731 = vmatpush1.bf16.msra.mxu0 0
      %732 = vmatprep.subr.bf16.mxu0 0
      %733 = vmatpush1.bf16.msra.mxu0 0
      %734 = vmatprep.subr.bf16.mxu0 0
      %735 = vmatpush1.bf16.msra.mxu0 0
      %736 = vmatprep.subr.bf16.mxu0 0
      %737 = vmatpush1.bf16.msra.mxu0 0
      %738 = vmatprep.mubr.bf16.mxu0 0
      %739 = vmatmul.mubr.bf16.gmra.mrb[0].mxu0 %v704
      %v740 = vpop.f32.mrb[0].mxu0
      %v741 = vadd.f32 %v674, %v740
      %v742 = vpop.f32.mrb[0].mxu0
      %v743 = vpop.f32.mrb[0].mxu0
      %v744 = vadd.f32 %v677, %v743
      %v745 = vpop.f32.mrb[0].mxu0
      %746 = vdwg.mxu0
      %v747 = vld [vmem:[#allocation2] sm:$0xe]
      %s748 = scalar_lea.vmem %s3, 64
      %v749 = vld [vmem:[%s748] sm:$0xf]
      %v750 = vld [vmem:[%s748 + $0x4] sm:$0xf]
      %v751 = vld [vmem:[%s748 + $0x8] sm:$0xf]
      %v752 = vld [vmem:[%s748 + $0xc] sm:$0xf]
      %v753 = vld [vmem:[%s748 + $0x10] sm:$0xf]
      %v754 = vld [vmem:[%s748 + $0x14] sm:$0xf]
      %v755 = vld [vmem:[%s748 + $0x18] sm:$0xf]
      %v756 = vld [vmem:[%s748 + $0x1c] sm:$0xf]
      %v758 = vunpack.c.l.b16 %v747
      %v759 = vpack.c.b16 %v594, %v758
      %vm760 = vcmask 1046528
      %v761 = vrot.slane %v759, 1
      %v762 = vrot.slane %v597, 1
      %v763 = vsel %vm760, %v761, %v762
      %v772 = vunpack.c.l.b16 %v749
      %v773 = vunpack.c.l.b16 %v750
      %v774 = vunpack.c.l.b16 %v751
      %v775 = vunpack.c.l.b16 %v752
      %v776 = vunpack.c.l.b16 %v753
      %v777 = vunpack.c.l.b16 %v754
      %v778 = vunpack.c.l.b16 %v755
      %v779 = vunpack.c.l.b16 %v756
      %v780 = vpack.c.b16 %v773, %v772
      %v781 = vpack.c.b16 %v775, %v774
      %v782 = vpack.c.b16 %v777, %v776
      %v783 = vpack.c.b16 %v779, %v778
      %v789 = vsel %vm635, %v763, 0
      %791 = vmatprep.subr.bf16.mxu0 0
      %792 = vmatpush1.bf16.msra.mxu0 %v780
      %793 = vmatprep.subr.bf16.mxu0 0
      %794 = vmatpush1.bf16.msra.mxu0 %v781
      %795 = vmatprep.subr.bf16.mxu0 0
      %796 = vmatpush1.bf16.msra.mxu0 %v782
      %797 = vmatprep.subr.bf16.mxu0 0
      %798 = vmatpush1.bf16.msra.mxu0 %v783
      %799 = vmatprep.subr.bf16.mxu0 0
      %800 = vmatpush1.bf16.msra.mxu0 0
      %801 = vmatprep.subr.bf16.mxu0 0
      %802 = vmatpush1.bf16.msra.mxu0 0
      %803 = vmatprep.subr.bf16.mxu0 0
      %804 = vmatpush1.bf16.msra.mxu0 0
      %805 = vmatprep.subr.bf16.mxu0 0
      %806 = vmatpush1.bf16.msra.mxu0 0
      %807 = vmatprep.subr.bf16.mxu0 0
      %808 = vmatpush1.bf16.msra.mxu0 0
      %809 = vmatprep.subr.bf16.mxu0 0
      %810 = vmatpush1.bf16.msra.mxu0 0
      %811 = vmatprep.subr.bf16.mxu0 0
      %812 = vmatpush1.bf16.msra.mxu0 0
      %813 = vmatprep.subr.bf16.mxu0 0
      %814 = vmatpush1.bf16.msra.mxu0 0
      %815 = vmatprep.subr.bf16.mxu0 0
      %816 = vmatpush1.bf16.msra.mxu0 0
      %817 = vmatprep.subr.bf16.mxu0 0
      %818 = vmatpush1.bf16.msra.mxu0 0
      %819 = vmatprep.subr.bf16.mxu0 0
      %820 = vmatpush1.bf16.msra.mxu0 0
      %821 = vmatprep.subr.bf16.mxu0 0
      %822 = vmatpush1.bf16.msra.mxu0 0
      %823 = vmatprep.mubr.bf16.mxu0 0
      %824 = vmatmul.mubr.bf16.gmra.mrb[0].mxu0 %v789
      %v825 = vpop.f32.mrb[0].mxu0
      %v826 = vadd.f32 0.0, %v825
      %v827 = vpop.f32.mrb[0].mxu0
      %v828 = vpop.f32.mrb[0].mxu0
      %v829 = vadd.f32 0.0, %v828
      %v830 = vpop.f32.mrb[0].mxu0
      %831 = vdwg.mxu0
      %v832 = vadd.f32 %v741, %v826
      %v833 = vadd.f32 %v744, %v829
      %v834 = vld [vmem:[%s4] sm:$0x1]
      %v836 = vlaneseq
      %v837 = vshrl.u32 %v836, 7
      %v838 = vsub.s32 0, %v837
      %v839 = vrot.slane %v834, %v838
      %v841 = vadd.f32 %v832, %v839
      %v842 = vadd.f32 %v833, %v839
      %v843 = vld [vmem:[#allocation3] sm:$0xf]
      %v844 = vld [vmem:[#allocation3 + $0x4] sm:$0xf]
      %v845 = vld [vmem:[%s5] sm:$0xf]
      %v846 = vld [vmem:[%s5 + $0x4] sm:$0xf]
      %v847 = vld [vmem:[%s5 + $0x8] sm:$0xf]
      %v848 = vld [vmem:[%s5 + $0xc] sm:$0xf]
      %v849 = vld [vmem:[%s5 + $0x10] sm:$0xf]
      %v850 = vld [vmem:[%s5 + $0x14] sm:$0xf]
      %v851 = vld [vmem:[%s5 + $0x18] sm:$0xf]
      %v852 = vld [vmem:[%s5 + $0x1c] sm:$0xf]
      %v853 = vld [vmem:[#allocation3 + $0x8] sm:$0x1]
      %s854 = scalar_lea.vmem %s5, 32
      %v855 = vld [vmem:[%s854] sm:$0xf]
      %v856 = vld [vmem:[%s854 + $0x4] sm:$0xf]
      %v857 = vld [vmem:[%s854 + $0x8] sm:$0xf]
      %v858 = vld [vmem:[%s854 + $0xc] sm:$0xf]
      %v859 = vld [vmem:[%s854 + $0x10] sm:$0xf]
      %v860 = vld [vmem:[%s854 + $0x14] sm:$0xf]
      %v861 = vld [vmem:[%s854 + $0x18] sm:$0xf]
      %v862 = vld [vmem:[%s854 + $0x1c] sm:$0xf]
      %v866 = vunpack.c.l.b16 %v843
      %v867 = vunpack.c.l.b16 %v844
      %v868 = vunpack.c.l.b16 %v853
      %v869 = vpack.c.b16 %v867, %v866
      %v870 = vpack.c.b16 %v868, %v868
      %v872 = vshrl.u32 %v869, 16
      %v874 = vshll.u32 %v869, 16
      %v876 = vrot.slane %v874, 1
      %v877 = vor.u32 %v872, %v876
      %v879 = vshll.u32 %v870, 16
      %v881 = vrot.slane %v879, 1
      %v882 = vsel %vm598, %v877, %v881
      %v891 = vunpack.c.l.b16 %v855
      %v892 = vunpack.c.l.b16 %v856
      %v893 = vunpack.c.l.b16 %v857
      %v894 = vunpack.c.l.b16 %v858
      %v895 = vunpack.c.l.b16 %v859
      %v896 = vunpack.c.l.b16 %v860
      %v897 = vunpack.c.l.b16 %v861
      %v898 = vunpack.c.l.b16 %v862
      %v899 = vpack.c.b16 %v892, %v891
      %v900 = vpack.c.b16 %v894, %v893
      %v901 = vpack.c.b16 %v896, %v895
      %v902 = vpack.c.b16 %v898, %v897
      %v908 = vsel %vm635, %v882, 0
      %910 = vmatprep.subr.bf16.mxu0 0
      %911 = vmatpush1.bf16.msra.mxu0 %v899
      %912 = vmatprep.subr.bf16.mxu0 0
      %913 = vmatpush1.bf16.msra.mxu0 %v900
      %914 = vmatprep.subr.bf16.mxu0 0
      %915 = vmatpush1.bf16.msra.mxu0 %v901
      %916 = vmatprep.subr.bf16.mxu0 0
      %917 = vmatpush1.bf16.msra.mxu0 %v902
      %918 = vmatprep.subr.bf16.mxu0 0
      %919 = vmatpush1.bf16.msra.mxu0 0
      %920 = vmatprep.subr.bf16.mxu0 0
      %921 = vmatpush1.bf16.msra.mxu0 0
      %922 = vmatprep.subr.bf16.mxu0 0
      %923 = vmatpush1.bf16.msra.mxu0 0
      %924 = vmatprep.subr.bf16.mxu0 0
      %925 = vmatpush1.bf16.msra.mxu0 0
      %926 = vmatprep.subr.bf16.mxu0 0
      %927 = vmatpush1.bf16.msra.mxu0 0
      %928 = vmatprep.subr.bf16.mxu0 0
      %929 = vmatpush1.bf16.msra.mxu0 0
      %930 = vmatprep.subr.bf16.mxu0 0
      %931 = vmatpush1.bf16.msra.mxu0 0
      %932 = vmatprep.subr.bf16.mxu0 0
      %933 = vmatpush1.bf16.msra.mxu0 0
      %934 = vmatprep.subr.bf16.mxu0 0
      %935 = vmatpush1.bf16.msra.mxu0 0
      %936 = vmatprep.subr.bf16.mxu0 0
      %937 = vmatpush1.bf16.msra.mxu0 0
      %938 = vmatprep.subr.bf16.mxu0 0
      %939 = vmatpush1.bf16.msra.mxu0 0
      %940 = vmatprep.subr.bf16.mxu0 0
      %941 = vmatpush1.bf16.msra.mxu0 0
      %942 = vmatprep.mubr.bf16.mxu0 0
      %943 = vmatmul.mubr.bf16.gmra.mrb[0].mxu0 %v908
      %v944 = vpop.f32.mrb[0].mxu0
      %v945 = vadd.f32 0.0, %v944
      %v946 = vpop.f32.mrb[0].mxu0
      %v947 = vpop.f32.mrb[0].mxu0
      %v948 = vadd.f32 0.0, %v947
      %v949 = vpop.f32.mrb[0].mxu0
      %950 = vdwg.mxu0
      %v959 = vunpack.c.l.b16 %v845
      %v960 = vunpack.c.l.b16 %v846
      %v961 = vunpack.c.l.b16 %v847
      %v962 = vunpack.c.l.b16 %v848
      %v963 = vunpack.c.l.b16 %v849
      %v964 = vunpack.c.l.b16 %v850
      %v965 = vunpack.c.l.b16 %v851
      %v966 = vunpack.c.l.b16 %v852
      %v967 = vpack.c.b16 %v960, %v959
      %v968 = vpack.c.b16 %v962, %v961
      %v969 = vpack.c.b16 %v964, %v963
      %v970 = vpack.c.b16 %v966, %v965
      %v975 = vsel %vm635, %v869, 0
      %977 = vmatprep.subr.bf16.mxu0 0
      %978 = vmatpush1.bf16.msra.mxu0 %v967
      %979 = vmatprep.subr.bf16.mxu0 0
      %980 = vmatpush1.bf16.msra.mxu0 %v968
      %981 = vmatprep.subr.bf16.mxu0 0
      %982 = vmatpush1.bf16.msra.mxu0 %v969
      %983 = vmatprep.subr.bf16.mxu0 0
      %984 = vmatpush1.bf16.msra.mxu0 %v970
      %985 = vmatprep.subr.bf16.mxu0 0
      %986 = vmatpush1.bf16.msra.mxu0 0
      %987 = vmatprep.subr.bf16.mxu0 0
      %988 = vmatpush1.bf16.msra.mxu0 0
      %989 = vmatprep.subr.bf16.mxu0 0
      %990 = vmatpush1.bf16.msra.mxu0 0
      %991 = vmatprep.subr.bf16.mxu0 0
      %992 = vmatpush1.bf16.msra.mxu0 0
      %993 = vmatprep.subr.bf16.mxu0 0
      %994 = vmatpush1.bf16.msra.mxu0 0
      %995 = vmatprep.subr.bf16.mxu0 0
      %996 = vmatpush1.bf16.msra.mxu0 0
      %997 = vmatprep.subr.bf16.mxu0 0
      %998 = vmatpush1.bf16.msra.mxu0 0
      %999 = vmatprep.subr.bf16.mxu0 0
      %1000 = vmatpush1.bf16.msra.mxu0 0
      %1001 = vmatprep.subr.bf16.mxu0 0
      %1002 = vmatpush1.bf16.msra.mxu0 0
      %1003 = vmatprep.subr.bf16.mxu0 0
      %1004 = vmatpush1.bf16.msra.mxu0 0
      %1005 = vmatprep.subr.bf16.mxu0 0
      %1006 = vmatpush1.bf16.msra.mxu0 0
      %1007 = vmatprep.subr.bf16.mxu0 0
      %1008 = vmatpush1.bf16.msra.mxu0 0
      %1009 = vmatprep.mubr.bf16.mxu0 0
      %1010 = vmatmul.mubr.bf16.gmra.mrb[0].mxu0 %v975
      %v1011 = vpop.f32.mrb[0].mxu0
      %v1012 = vadd.f32 %v945, %v1011
      %v1013 = vpop.f32.mrb[0].mxu0
      %v1014 = vpop.f32.mrb[0].mxu0
      %v1015 = vadd.f32 %v948, %v1014
      %v1016 = vpop.f32.mrb[0].mxu0
      %1017 = vdwg.mxu0
      %v1018 = vld [vmem:[#allocation3] sm:$0xe]
      %s1019 = scalar_lea.vmem %s5, 64
      %v1020 = vld [vmem:[%s1019] sm:$0xf]
      %v1021 = vld [vmem:[%s1019 + $0x4] sm:$0xf]
      %v1022 = vld [vmem:[%s1019 + $0x8] sm:$0xf]
      %v1023 = vld [vmem:[%s1019 + $0xc] sm:$0xf]
      %v1024 = vld [vmem:[%s1019 + $0x10] sm:$0xf]
      %v1025 = vld [vmem:[%s1019 + $0x14] sm:$0xf]
      %v1026 = vld [vmem:[%s1019 + $0x18] sm:$0xf]
      %v1027 = vld [vmem:[%s1019 + $0x1c] sm:$0xf]
      %v1029 = vunpack.c.l.b16 %v1018
      %v1030 = vpack.c.b16 %v867, %v1029
      %v1031 = vrot.slane %v1030, 1
      %v1032 = vrot.slane %v870, 1
      %v1033 = vsel %vm760, %v1031, %v1032
      %v1042 = vunpack.c.l.b16 %v1020
      %v1043 = vunpack.c.l.b16 %v1021
      %v1044 = vunpack.c.l.b16 %v1022
      %v1045 = vunpack.c.l.b16 %v1023
      %v1046 = vunpack.c.l.b16 %v1024
      %v1047 = vunpack.c.l.b16 %v1025
      %v1048 = vunpack.c.l.b16 %v1026
      %v1049 = vunpack.c.l.b16 %v1027
      %v1050 = vpack.c.b16 %v1043, %v1042
      %v1051 = vpack.c.b16 %v1045, %v1044
      %v1052 = vpack.c.b16 %v1047, %v1046
      %v1053 = vpack.c.b16 %v1049, %v1048
      %v1059 = vsel %vm635, %v1033, 0
      %1061 = vmatprep.subr.bf16.mxu0 0
      %1062 = vmatpush1.bf16.msra.mxu0 %v1050
      %1063 = vmatprep.subr.bf16.mxu0 0
      %1064 = vmatpush1.bf16.msra.mxu0 %v1051
      %1065 = vmatprep.subr.bf16.mxu0 0
      %1066 = vmatpush1.bf16.msra.mxu0 %v1052
      %1067 = vmatprep.subr.bf16.mxu0 0
      %1068 = vmatpush1.bf16.msra.mxu0 %v1053
      %1069 = vmatprep.subr.bf16.mxu0 0
      %1070 = vmatpush1.bf16.msra.mxu0 0
      %1071 = vmatprep.subr.bf16.mxu0 0
      %1072 = vmatpush1.bf16.msra.mxu0 0
      %1073 = vmatprep.subr.bf16.mxu0 0
      %1074 = vmatpush1.bf16.msra.mxu0 0
      %1075 = vmatprep.subr.bf16.mxu0 0
      %1076 = vmatpush1.bf16.msra.mxu0 0
      %1077 = vmatprep.subr.bf16.mxu0 0
      %1078 = vmatpush1.bf16.msra.mxu0 0
      %1079 = vmatprep.subr.bf16.mxu0 0
      %1080 = vmatpush1.bf16.msra.mxu0 0
      %1081 = vmatprep.subr.bf16.mxu0 0
      %1082 = vmatpush1.bf16.msra.mxu0 0
      %1083 = vmatprep.subr.bf16.mxu0 0
      %1084 = vmatpush1.bf16.msra.mxu0 0
      %1085 = vmatprep.subr.bf16.mxu0 0
      %1086 = vmatpush1.bf16.msra.mxu0 0
      %1087 = vmatprep.subr.bf16.mxu0 0
      %1088 = vmatpush1.bf16.msra.mxu0 0
      %1089 = vmatprep.subr.bf16.mxu0 0
      %1090 = vmatpush1.bf16.msra.mxu0 0
      %1091 = vmatprep.subr.bf16.mxu0 0
      %1092 = vmatpush1.bf16.msra.mxu0 0
      %1093 = vmatprep.mubr.bf16.mxu0 0
      %1094 = vmatmul.mubr.bf16.gmra.mrb[0].mxu0 %v1059
      %v1095 = vpop.f32.mrb[0].mxu0
      %v1096 = vadd.f32 0.0, %v1095
      %v1097 = vpop.f32.mrb[0].mxu0
      %v1098 = vpop.f32.mrb[0].mxu0
      %v1099 = vadd.f32 0.0, %v1098
      %v1100 = vpop.f32.mrb[0].mxu0
      %1101 = vdwg.mxu0
      %v1102 = vadd.f32 %v1012, %v1096
      %v1103 = vadd.f32 %v1015, %v1099
      %v1104 = vld [vmem:[%s6] sm:$0x1]
      %v1106 = vlaneseq
      %v1107 = vshrl.u32 %v1106, 7
      %v1108 = vsub.s32 0, %v1107
      %v1109 = vrot.slane %v1104, %v1108
      %v1111 = vadd.f32 %v1102, %v1109
      %v1112 = vadd.f32 %v1103, %v1109
      %v1113 = vpack.c.bf16 %v842, %v841
      %v1115 = vunpack.c.l.b16 %v1113
      %v1116 = vunpack.c.h.b16 %v1113
      %v1117 = vpack.c.b16 %v1115, %v1115
      %v1118 = vpack.c.b16 %v1116, %v1116
      %1121 = vst [vmem:[%s441] sm:$0xf] %v1117
      %1122 = vst [vmem:[%s441 + $0x4] sm:$0xf] %v1118
      %v1123 = vpack.c.bf16 %v1112, %v1111
      %v1125 = vunpack.c.l.b16 %v1123
      %v1126 = vunpack.c.h.b16 %v1123
      %v1127 = vpack.c.b16 %v1125, %v1125
      %v1128 = vpack.c.b16 %v1126, %v1126
      %1131 = vst [vmem:[%s446] sm:$0xf] %v1127
      %1132 = vst [vmem:[%s446 + $0x4] sm:$0xf] %v1128
      %v1133 = vadd.f32 %v841, %v842
      %v1134 = vrot.slane %v1133, 4
      %v1135 = vadd.f32 %v1133, %v1134
      %v1136 = vrot.slane %v1135, 2
      %v1137 = vadd.f32 %v1135, %v1136
      %v1138 = vrot.slane %v1137, 1
      %v1139 = vadd.f32 %v1137, %v1138
      %1140 = vst [vmem:[%s449] sm:$0x1] %v1139
      %v1141 = vmul.f32 %v841, %v841
      %v1142 = vmul.f32 %v842, %v842
      %v1143 = vadd.f32 %v1141, %v1142
      %v1144 = vrot.slane %v1143, 4
      %v1145 = vadd.f32 %v1143, %v1144
      %v1146 = vrot.slane %v1145, 2
      %v1147 = vadd.f32 %v1145, %v1146
      %v1148 = vrot.slane %v1147, 1
      %v1149 = vadd.f32 %v1147, %v1148
      %1150 = vst [vmem:[%s452] sm:$0x1] %v1149
      %v1151 = vadd.f32 %v1111, %v1112
      %v1152 = vrot.slane %v1151, 4
      %v1153 = vadd.f32 %v1151, %v1152
      %v1154 = vrot.slane %v1153, 2
      %v1155 = vadd.f32 %v1153, %v1154
      %v1156 = vrot.slane %v1155, 1
      %v1157 = vadd.f32 %v1155, %v1156
      %1158 = vst [vmem:[%s455] sm:$0x1] %v1157
      %v1159 = vmul.f32 %v1111, %v1111
      %v1160 = vmul.f32 %v1112, %v1112
      %v1161 = vadd.f32 %v1159, %v1160
      %v1162 = vrot.slane %v1161, 4
      %v1163 = vadd.f32 %v1161, %v1162
      %v1164 = vrot.slane %v1163, 2
      %v1165 = vadd.f32 %v1163, %v1164
      %v1166 = vrot.slane %v1165, 1
      %v1167 = vadd.f32 %v1165, %v1166
      %1168 = vst [vmem:[%s458] sm:$0x1] %v1167
      %p1169 = scmp.lt.s32.totalorder %s24, 1
      %s1170 = scalar_select %p1169, %s24, 1
      %s1171 = smul.addr %s1170, 2
      %s1172 = smul.addr %s1171, 4
      %s1173 = scalar_lea.vmem %s7, %s1172
      %p1174 = scmp.lt.s32.totalorder %s24, 1
      %s1175 = scalar_select %p1174, %s24, 1
      %s1176 = smul.addr %s1175, 2
      %s1177 = smul.addr %s1176, 4
      %s1178 = scalar_lea.vmem %s8, %s1177
      %p1179 = scmp.lt.s32.totalorder %s24, 1
      %s1180 = scalar_select %p1179, %s24, 1
      %s1181 = scalar_lea.vmem %s9, %s1180
      %p1182 = scmp.lt.s32.totalorder %s24, 1
      %s1183 = scalar_select %p1182, %s24, 1
      %s1184 = scalar_lea.vmem %s10, %s1183
      %p1185 = scmp.lt.s32.totalorder %s24, 1
      %s1186 = scalar_select %p1185, %s24, 1
      %s1187 = scalar_lea.vmem %s11, %s1186
      %p1188 = scmp.lt.s32.totalorder %s24, 1
      %s1189 = scalar_select %p1188, %s24, 1
      %s1190 = scalar_lea.vmem %s12, %s1189
      // Predicated region
      $region49: #{residual_conv_forward.4} parent=47 // pred_check
        %p1191 = pneg %p194
      $region50: #{residual_conv_forward.4} parent=47 // pred_check_branch
        %1193 = sbr.rel (%p1191) target = $region52
      $region51: #{residual_conv_forward.4} parent=47 // pred_region
        _
      $region52: #{residual_conv_forward.4} parent=47 // pred_fallthru
        _
      // Predicated region
      $region53: #{residual_conv_forward.4} parent=47 // pred_check
        %p1194 = pneg %p220
      $region54: #{residual_conv_forward.4} parent=47 // pred_check_branch
        %1196 = sbr.rel (%p1194) target = $region56
      $region55: #{residual_conv_forward.4} parent=47 // pred_region
        _
      $region56: #{residual_conv_forward.4} parent=47 // pred_fallthru
        _
      // Predicated region
      $region57: #{residual_conv_forward.4} parent=47 // pred_check
        %p1197 = pneg %p246
      $region58: #{residual_conv_forward.4} parent=47 // pred_check_branch
        %1199 = sbr.rel (%p1197) target = $region60
      $region59: #{residual_conv_forward.4} parent=47 // pred_region
        _
      $region60: #{residual_conv_forward.4} parent=47 // pred_fallthru
        _
      // Predicated region
      $region61: #{residual_conv_forward.4} parent=47 // pred_check
        %p1200 = pneg %p272
      $region62: #{residual_conv_forward.4} parent=47 // pred_check_branch
        %1202 = sbr.rel (%p1200) target = $region64
      $region63: #{residual_conv_forward.4} parent=47 // pred_region
        _
      $region64: #{residual_conv_forward.4} parent=47 // pred_fallthru
        _
      // Predicated region
      $region65: #{residual_conv_forward.4} parent=47 // pred_check
        %p1203 = pneg %p298
      $region66: #{residual_conv_forward.4} parent=47 // pred_check_branch
        %1205 = sbr.rel (%p1203) target = $region68
      $region67: #{residual_conv_forward.4} parent=47 // pred_region
        _
      $region68: #{residual_conv_forward.4} parent=47 // pred_fallthru
        _
      // Predicated region
      $region69: #{residual_conv_forward.4} parent=47 // pred_check
        %p1206 = pneg %p324
      $region70: #{residual_conv_forward.4} parent=47 // pred_check_branch
        %1208 = sbr.rel (%p1206) target = $region72
      $region71: #{residual_conv_forward.4} parent=47 // pred_region
        _
      $region72: #{residual_conv_forward.4} parent=47 // pred_fallthru
        _
    $region48: #{residual_conv_forward.4} parent=5 // pred_fallthru
      _
    %p1209 = scmp.le.s32.totalorder 2, %s19
    // Predicated region
    $region73: #{residual_conv_forward.4} parent=5 // pred_check
      %p1210 = pneg %p1209
    $region74: #{residual_conv_forward.4} parent=5 // pred_check_branch
      %1212 = sbr.rel (%p1210) target = $region76
    $region75: #{residual_conv_forward.4} parent=5 // pred_region
      %s1213 = ssub.s32 %s19, 2
      // Predicated region
      $region77: #{residual_conv_forward.4} parent=75 // pred_check
        %p1214 = pneg %p200
      $region78: #{residual_conv_forward.4} parent=75 // pred_check_branch
        %1216 = sbr.rel (%p1214) target = $region80
      $region79: #{residual_conv_forward.4} parent=75 // pred_region
        %p1217 = scmp.lt.s32.totalorder %s25, 1
        %s1218 = scalar_select %p1217, %s25, 1
        %s1219 = smul.addr %s1218, 2
        %s1220 = smul.addr %s1219, 4
        %s1221 = scalar_lea.vmem %s7, %s1220
      $region80: #{residual_conv_forward.4} parent=75 // pred_fallthru
        _
      // Predicated region
      $region81: #{residual_conv_forward.4} parent=75 // pred_check
        %p1222 = pneg %p226
      $region82: #{residual_conv_forward.4} parent=75 // pred_check_branch
        %1224 = sbr.rel (%p1222) target = $region84
      $region83: #{residual_conv_forward.4} parent=75 // pred_region
        %p1225 = scmp.lt.s32.totalorder %s25, 1
        %s1226 = scalar_select %p1225, %s25, 1
        %s1227 = smul.addr %s1226, 2
        %s1228 = smul.addr %s1227, 4
        %s1229 = scalar_lea.vmem %s8, %s1228
      $region84: #{residual_conv_forward.4} parent=75 // pred_fallthru
        _
      // Predicated region
      $region85: #{residual_conv_forward.4} parent=75 // pred_check
        %p1230 = pneg %p252
      $region86: #{residual_conv_forward.4} parent=75 // pred_check_branch
        %1232 = sbr.rel (%p1230) target = $region88
      $region87: #{residual_conv_forward.4} parent=75 // pred_region
        %p1233 = scmp.lt.s32.totalorder %s25, 1
        %s1234 = scalar_select %p1233, %s25, 1
        %s1235 = scalar_lea.vmem %s9, %s1234
      $region88: #{residual_conv_forward.4} parent=75 // pred_fallthru
        _
      // Predicated region
      $region89: #{residual_conv_forward.4} parent=75 // pred_check
        %p1236 = pneg %p278
      $region90: #{residual_conv_forward.4} parent=75 // pred_check_branch
        %1238 = sbr.rel (%p1236) target = $region92
      $region91: #{residual_conv_forward.4} parent=75 // pred_region
        %p1239 = scmp.lt.s32.totalorder %s25, 1
        %s1240 = scalar_select %p1239, %s25, 1
        %s1241 = scalar_lea.vmem %s10, %s1240
      $region92: #{residual_conv_forward.4} parent=75 // pred_fallthru
        _
      // Predicated region
      $region93: #{residual_conv_forward.4} parent=75 // pred_check
        %p1242 = pneg %p304
      $region94: #{residual_conv_forward.4} parent=75 // pred_check_branch
        %1244 = sbr.rel (%p1242) target = $region96
      $region95: #{residual_conv_forward.4} parent=75 // pred_region
        %p1245 = scmp.lt.s32.totalorder %s25, 1
        %s1246 = scalar_select %p1245, %s25, 1
        %s1247 = scalar_lea.vmem %s11, %s1246
      $region96: #{residual_conv_forward.4} parent=75 // pred_fallthru
        _
      // Predicated region
      $region97: #{residual_conv_forward.4} parent=75 // pred_check
        %p1248 = pneg %p330
      $region98: #{residual_conv_forward.4} parent=75 // pred_check_branch
        %1250 = sbr.rel (%p1248) target = $region100
      $region99: #{residual_conv_forward.4} parent=75 // pred_region
        %p1251 = scmp.lt.s32.totalorder %s25, 1
        %s1252 = scalar_select %p1251, %s25, 1
        %s1253 = scalar_lea.vmem %s12, %s1252
      $region100: #{residual_conv_forward.4} parent=75 // pred_fallthru
        _
    $region76: #{residual_conv_forward.4} parent=5 // pred_fallthru
      _
  $region6: #{residual_conv_forward.4} parent=0 // loop_footer
    %s23 = sadd.s32 1, %s19
  $region7: #{residual_conv_forward.4} parent=0 // loop_footer_branch
    %18 = sbr.rel target = $region3
  $region8: #{residual_conv_forward.4} parent=0 // loop_exit
    _

// kernel: residual_conv_forward.5
$region0: #{residual_conv_forward.5}
  #allocation0 [shape = 'u32[]', space=smem, size = 0x4, offset = 0x4, fixed_abs, tag = 'smem constant byte address 0x4 - core index']
  #allocation1 [shape = 'u32[144,128]{1,0:T(1,128)}', space=vmem, size = 0x12000, scoped, tag = 'internal scratch']
  #allocation2 [shape = 'bf16[1,18,128]{2,1,0:T(8,128)(2,1)}', space=vmem, size = 0x1800, scoped, tag = 'scratch operand']
  %s0 = inlined_call_operand.vmem [shape: bf16[2,16,128], index: 0, kind: input, shape index: {}]
  %s1 = inlined_call_operand.vmem [shape: bf16[2,16,128], index: 1, kind: input, shape index: {}]
  %s2 = inlined_call_operand.vmem [shape: f32[1,128], index: 2, kind: input, shape index: {}]
  %s3 = inlined_call_operand.vmem [shape: f32[1,128], index: 3, kind: input, shape index: {}]
  %s4 = inlined_call_operand.vmem [shape: bf16[3,128,128], index: 4, kind: input, shape index: {}]
  %s5 = inlined_call_operand.vmem [shape: f32[1,128], index: 5, kind: input, shape index: {}]
  %s6 = inlined_call_operand.vmem [shape: f32[1,128], index: 6, kind: input, shape index: {}]
  %s7 = inlined_call_operand.vmem [shape: f32[1,128], index: 7, kind: input, shape index: {}]
  %s8 = inlined_call_operand.vmem [shape: f32[2,16,128], index: 8, kind: output, shape index: {}]
  %s9 = sld [smem:[#allocation0]]
  $region65: #{residual_conv_forward.5} parent=0
    _
  %s11 = ssub.s32 1, %s9
  %s12 = scalar_select 0, %s11, %s9
  loop: start=0, step=1, limit=4
  $region2: #{residual_conv_forward.5} parent=0 // loop_pre_header
    _
  $region3: #{residual_conv_forward.5} parent=0 // loop_header
    %s14 = sphi 0, %s18
    %p15 = scmp.ge.s32.totalorder %s14, 4
    %s24 = sphi 0, %s26
    %s27 = sphi 0, %s24
    %s28 = sphi 0, %s27
    %s44 = sphi 0, %s28
    %s50 = sphi 0, %s52
    %s53 = sphi 0, %s50
    %s54 = sphi 0, %s53
    %s70 = sphi 0, %s54
    %s74 = sphi 0, %s74
    %s76 = sphi 0, %s74
    %s77 = sphi 0, %s76
    %s91 = sphi 0, %s77
    %s95 = sphi 0, %s95
    %s97 = sphi 0, %s95
    %s98 = sphi 0, %s97
    %s112 = sphi 0, %s98
    %s116 = sphi 0, %s116
    %s118 = sphi 0, %s116
    %s119 = sphi 0, %s118
    %s133 = sphi 0, %s119
    %s137 = sphi 0, %s137
    %s139 = sphi 0, %s137
    %s140 = sphi 0, %s139
    %s154 = sphi 0, %s140
    %s158 = sphi 0, %s158
    %s160 = sphi 0, %s158
    %s161 = sphi 0, %s160
    %s175 = sphi 0, %s161
    %s179 = sphi 0, %s179
    %s181 = sphi 0, %s179
    %s182 = sphi 0, %s181
    %s196 = sphi 0, %s182
    %s202 = sphi 0, %s204
    %s205 = sphi 0, %s202
    %s206 = sphi 0, %s205
    %s222 = sphi 0, %s206
  $region4: #{residual_conv_forward.5} parent=0 // loop_header_branch
    %17 = sbr.rel (%p15) target = $region8
  $region5: #{residual_conv_forward.5} parent=0 // loop_body
    %s19 = ssub.s32 %s14, 1
    %s20 = ssub.s32 %s14, 2
    %s21 = sadd.s32 %s14, 1
    %s22 = ssub.s32 %s14, %s21
    %p23 = scmp.eq.s32.totalorder %s22, 0
    %s25 = sadd.s32 %s24, 1
    %s26 = scalar_select %p23, %s24, %s25
    %p29 = pneg %p23
    %p30 = scmp.eq.s32.totalorder %s14, 1
    %p31 = por %p29, %p30
    %p32 = scmp.ne.s32.totalorder %s24, %s27
    %p33 = scmp.eq.s32.totalorder %s14, 0
    %p34 = por %p32, %p33
    %p35 = scmp.ne.s32.totalorder %s24, %s27
    %p36 = scmp.eq.s32.totalorder %s19, 1
    %p37 = por %p35, %p36
    %p38 = scmp.ne.s32.totalorder %s27, %s28
    %p39 = scmp.eq.s32.totalorder %s19, 0
    %p40 = por %p38, %p39
    %p41 = scmp.ne.s32.totalorder %s27, %s28
    %p42 = scmp.eq.s32.totalorder %s20, 1
    %p43 = por %p41, %p42
    %p45 = scmp.ne.s32.totalorder %s28, %s44
    %p46 = scmp.eq.s32.totalorder %s20, 0
    %p47 = por %p45, %p46
    %s48 = ssub.s32 %s14, %s21
    %p49 = scmp.eq.s32.totalorder %s48, 0
    %s51 = sadd.s32 %s50, 1
    %s52 = scalar_select %p49, %s50, %s51
    %p55 = pneg %p49
    %p56 = scmp.eq.s32.totalorder %s14, 1
    %p57 = por %p55, %p56
    %p58 = scmp.ne.s32.totalorder %s50, %s53
    %p59 = scmp.eq.s32.totalorder %s14, 0
    %p60 = por %p58, %p59
    %p61 = scmp.ne.s32.totalorder %s50, %s53
    %p62 = scmp.eq.s32.totalorder %s19, 1
    %p63 = por %p61, %p62
    %p64 = scmp.ne.s32.totalorder %s53, %s54
    %p65 = scmp.eq.s32.totalorder %s19, 0
    %p66 = por %p64, %p65
    %p67 = scmp.ne.s32.totalorder %s53, %s54
    %p68 = scmp.eq.s32.totalorder %s20, 1
    %p69 = por %p67, %p68
    %p71 = scmp.ne.s32.totalorder %s54, %s70
    %p72 = scmp.eq.s32.totalorder %s20, 0
    %p73 = por %p71, %p72
    %s75 = sadd.s32 %s74, 1
    %p78 = scmp.eq.s32.totalorder %s14, 1
    %p79 = scmp.ne.s32.totalorder %s74, %s76
    %p80 = scmp.eq.s32.totalorder %s14, 0
    %p81 = por %p79, %p80
    %p82 = scmp.ne.s32.totalorder %s74, %s76
    %p83 = scmp.eq.s32.totalorder %s19, 1
    %p84 = por %p82, %p83
    %p85 = scmp.ne.s32.totalorder %s76, %s77
    %p86 = scmp.eq.s32.totalorder %s19, 0
    %p87 = por %p85, %p86
    %p88 = scmp.ne.s32.totalorder %s76, %s77
    %p89 = scmp.eq.s32.totalorder %s20, 1
    %p90 = por %p88, %p89
    %p92 = scmp.ne.s32.totalorder %s77, %s91
    %p93 = scmp.eq.s32.totalorder %s20, 0
    %p94 = por %p92, %p93
    %s96 = sadd.s32 %s95, 1
    %p99 = scmp.eq.s32.totalorder %s14, 1
    %p100 = scmp.ne.s32.totalorder %s95, %s97
    %p101 = scmp.eq.s32.totalorder %s14, 0
    %p102 = por %p100, %p101
    %p103 = scmp.ne.s32.totalorder %s95, %s97
    %p104 = scmp.eq.s32.totalorder %s19, 1
    %p105 = por %p103, %p104
    %p106 = scmp.ne.s32.totalorder %s97, %s98
    %p107 = scmp.eq.s32.totalorder %s19, 0
    %p108 = por %p106, %p107
    %p109 = scmp.ne.s32.totalorder %s97, %s98
    %p110 = scmp.eq.s32.totalorder %s20, 1
    %p111 = por %p109, %p110
    %p113 = scmp.ne.s32.totalorder %s98, %s112
    %p114 = scmp.eq.s32.totalorder %s20, 0
    %p115 = por %p113, %p114
    %s117 = sadd.s32 %s116, 1
    %p120 = scmp.eq.s32.totalorder %s14, 1
    %p121 = scmp.ne.s32.totalorder %s116, %s118
    %p122 = scmp.eq.s32.totalorder %s14, 0
    %p123 = por %p121, %p122
    %p124 = scmp.ne.s32.totalorder %s116, %s118
    %p125 = scmp.eq.s32.totalorder %s19, 1
    %p126 = por %p124, %p125
    %p127 = scmp.ne.s32.totalorder %s118, %s119
    %p128 = scmp.eq.s32.totalorder %s19, 0
    %p129 = por %p127, %p128
    %p130 = scmp.ne.s32.totalorder %s118, %s119
    %p131 = scmp.eq.s32.totalorder %s20, 1
    %p132 = por %p130, %p131
    %p134 = scmp.ne.s32.totalorder %s119, %s133
    %p135 = scmp.eq.s32.totalorder %s20, 0
    %p136 = por %p134, %p135
    %s138 = sadd.s32 %s137, 1
    %p141 = scmp.eq.s32.totalorder %s14, 1
    %p142 = scmp.ne.s32.totalorder %s137, %s139
    %p143 = scmp.eq.s32.totalorder %s14, 0
    %p144 = por %p142, %p143
    %p145 = scmp.ne.s32.totalorder %s137, %s139
    %p146 = scmp.eq.s32.totalorder %s19, 1
    %p147 = por %p145, %p146
    %p148 = scmp.ne.s32.totalorder %s139, %s140
    %p149 = scmp.eq.s32.totalorder %s19, 0
    %p150 = por %p148, %p149
    %p151 = scmp.ne.s32.totalorder %s139, %s140
    %p152 = scmp.eq.s32.totalorder %s20, 1
    %p153 = por %p151, %p152
    %p155 = scmp.ne.s32.totalorder %s140, %s154
    %p156 = scmp.eq.s32.totalorder %s20, 0
    %p157 = por %p155, %p156
    %s159 = sadd.s32 %s158, 1
    %p162 = scmp.eq.s32.totalorder %s14, 1
    %p163 = scmp.ne.s32.totalorder %s158, %s160
    %p164 = scmp.eq.s32.totalorder %s14, 0
    %p165 = por %p163, %p164
    %p166 = scmp.ne.s32.totalorder %s158, %s160
    %p167 = scmp.eq.s32.totalorder %s19, 1
    %p168 = por %p166, %p167
    %p169 = scmp.ne.s32.totalorder %s160, %s161
    %p170 = scmp.eq.s32.totalorder %s19, 0
    %p171 = por %p169, %p170
    %p172 = scmp.ne.s32.totalorder %s160, %s161
    %p173 = scmp.eq.s32.totalorder %s20, 1
    %p174 = por %p172, %p173
    %p176 = scmp.ne.s32.totalorder %s161, %s175
    %p177 = scmp.eq.s32.totalorder %s20, 0
    %p178 = por %p176, %p177
    %s180 = sadd.s32 %s179, 1
    %p183 = scmp.eq.s32.totalorder %s14, 1
    %p184 = scmp.ne.s32.totalorder %s179, %s181
    %p185 = scmp.eq.s32.totalorder %s14, 0
    %p186 = por %p184, %p185
    %p187 = scmp.ne.s32.totalorder %s179, %s181
    %p188 = scmp.eq.s32.totalorder %s19, 1
    %p189 = por %p187, %p188
    %p190 = scmp.ne.s32.totalorder %s181, %s182
    %p191 = scmp.eq.s32.totalorder %s19, 0
    %p192 = por %p190, %p191
    %p193 = scmp.ne.s32.totalorder %s181, %s182
    %p194 = scmp.eq.s32.totalorder %s20, 1
    %p195 = por %p193, %p194
    %p197 = scmp.ne.s32.totalorder %s182, %s196
    %p198 = scmp.eq.s32.totalorder %s20, 0
    %p199 = por %p197, %p198
    %s200 = ssub.s32 %s14, %s21
    %p201 = scmp.eq.s32.totalorder %s200, 0
    %s203 = sadd.s32 %s202, 1
    %s204 = scalar_select %p201, %s202, %s203
    %p207 = pneg %p201
    %p208 = scmp.eq.s32.totalorder %s14, 1
    %p209 = por %p207, %p208
    %p210 = scmp.ne.s32.totalorder %s202, %s205
    %p211 = scmp.eq.s32.totalorder %s14, 0
    %p212 = por %p210, %p211
    %p213 = scmp.ne.s32.totalorder %s202, %s205
    %p214 = scmp.eq.s32.totalorder %s19, 1
    %p215 = por %p213, %p214
    %p216 = scmp.ne.s32.totalorder %s205, %s206
    %p217 = scmp.eq.s32.totalorder %s19, 0
    %p218 = por %p216, %p217
    %p219 = scmp.ne.s32.totalorder %s205, %s206
    %p220 = scmp.eq.s32.totalorder %s20, 1
    %p221 = por %p219, %p220
    %p223 = scmp.ne.s32.totalorder %s206, %s222
    %p224 = scmp.eq.s32.totalorder %s20, 0
    %p225 = por %p223, %p224
    %p226 = scmp.le.s32.totalorder 1, %s14
    %p227 = scmp.lt.s32.totalorder %s14, 3
    %p228 = pnand %p226, %p227
    %p229 = pneg %p228
    // Predicated region
    $region9: #{residual_conv_forward.5} parent=5 // pred_check
      _
    $region10: #{residual_conv_forward.5} parent=5 // pred_check_branch
      %231 = sbr.rel (%p228) target = $region12
    $region11: #{residual_conv_forward.5} parent=5 // pred_region
      %s232 = ssub.s32 %s14, 1
      // Predicated region
      $region13: #{residual_conv_forward.5} parent=11 // pred_check
        %p233 = pneg %p87
      $region14: #{residual_conv_forward.5} parent=11 // pred_check_branch
        %235 = sbr.rel (%p233) target = $region16
      $region15: #{residual_conv_forward.5} parent=11 // pred_region
        _
      $region16: #{residual_conv_forward.5} parent=11 // pred_fallthru
        _
      // Predicated region
      $region17: #{residual_conv_forward.5} parent=11 // pred_check
        %p236 = pneg %p108
      $region18: #{residual_conv_forward.5} parent=11 // pred_check_branch
        %238 = sbr.rel (%p236) target = $region20
      $region19: #{residual_conv_forward.5} parent=11 // pred_region
        _
      $region20: #{residual_conv_forward.5} parent=11 // pred_fallthru
        _
      // Predicated region
      $region21: #{residual_conv_forward.5} parent=11 // pred_check
        %p239 = pneg %p129
      $region22: #{residual_conv_forward.5} parent=11 // pred_check_branch
        %241 = sbr.rel (%p239) target = $region24
      $region23: #{residual_conv_forward.5} parent=11 // pred_region
        _
      $region24: #{residual_conv_forward.5} parent=11 // pred_fallthru
        _
      // Predicated region
      $region25: #{residual_conv_forward.5} parent=11 // pred_check
        %p242 = pneg %p150
      $region26: #{residual_conv_forward.5} parent=11 // pred_check_branch
        %244 = sbr.rel (%p242) target = $region28
      $region27: #{residual_conv_forward.5} parent=11 // pred_region
        _
      $region28: #{residual_conv_forward.5} parent=11 // pred_fallthru
        _
      // Predicated region
      $region29: #{residual_conv_forward.5} parent=11 // pred_check
        %p245 = pneg %p171
      $region30: #{residual_conv_forward.5} parent=11 // pred_check_branch
        %247 = sbr.rel (%p245) target = $region32
      $region31: #{residual_conv_forward.5} parent=11 // pred_region
        _
      $region32: #{residual_conv_forward.5} parent=11 // pred_fallthru
        _
      // Predicated region
      $region33: #{residual_conv_forward.5} parent=11 // pred_check
        %p248 = pneg %p192
      $region34: #{residual_conv_forward.5} parent=11 // pred_check_branch
        %250 = sbr.rel (%p248) target = $region36
      $region35: #{residual_conv_forward.5} parent=11 // pred_region
        _
      $region36: #{residual_conv_forward.5} parent=11 // pred_fallthru
        _
    $region12: #{residual_conv_forward.5} parent=5 // pred_fallthru
      _
    %p251 = scmp.lt.s32.totalorder %s14, 2
    // Predicated region
    $region37: #{residual_conv_forward.5} parent=5 // pred_check
      %p252 = pneg %p251
    $region38: #{residual_conv_forward.5} parent=5 // pred_check_branch
      %254 = sbr.rel (%p252) target = $region40
    $region39: #{residual_conv_forward.5} parent=5 // pred_region
      // Predicated region
      $region41: #{residual_conv_forward.5} parent=39 // pred_check
        %p255 = pneg %p34
      $region42: #{residual_conv_forward.5} parent=39 // pred_check_branch
        %257 = sbr.rel (%p255) target = $region44
      $region43: #{residual_conv_forward.5} parent=39 // pred_region
        %p258 = scmp.lt.s32.totalorder %s14, 1
        %s259 = scalar_select %p258, %s14, 1
        %s260 = smul.addr %s259, 2
        %s261 = smul.addr %s260, 4
        %s262 = scalar_lea.vmem %s0, %s261
      $region44: #{residual_conv_forward.5} parent=39 // pred_fallthru
        _
      // Predicated region
      $region45: #{residual_conv_forward.5} parent=39 // pred_check
        %p263 = pneg %p60
      $region46: #{residual_conv_forward.5} parent=39 // pred_check_branch
        %265 = sbr.rel (%p263) target = $region48
      $region47: #{residual_conv_forward.5} parent=39 // pred_region
        %p266 = scmp.lt.s32.totalorder %s14, 1
        %s267 = scalar_select %p266, %s14, 1
        %s268 = smul.addr %s267, 2
        %s269 = smul.addr %s268, 4
        %s270 = scalar_lea.vmem %s1, %s269
      $region48: #{residual_conv_forward.5} parent=39 // pred_fallthru
        _
    $region40: #{residual_conv_forward.5} parent=5 // pred_fallthru
      _
    %p271 = scmp.le.s32.totalorder 1, %s14
    %p272 = scmp.lt.s32.totalorder %s14, 3
    %p273 = pnand %p271, %p272
    %p274 = pneg %p273
    // Predicated region
    $region49: #{residual_conv_forward.5} parent=5 // pred_check
      _
    $region50: #{residual_conv_forward.5} parent=5 // pred_check_branch
      %276 = sbr.rel (%p273) target = $region52
    $region51: #{residual_conv_forward.5} parent=5 // pred_region
      %s277 = ssub.s32 %s14, 1
      %p278 = scmp.lt.s32.totalorder %s19, 1
      %s279 = scalar_select %p278, %s19, 1
      %s280 = smul.addr %s279, 2
      %s281 = smul.addr %s280, 4
      %s282 = scalar_lea.vmem %s0, %s281
      %p283 = pneg %p40
      %p284 = pneg %p37
      %p285 = scmp.lt.s32.totalorder %s19, 1
      %s286 = scalar_select %p285, %s19, 1
      %s287 = smul.addr %s286, 2
      %s288 = smul.addr %s287, 4
      %s289 = scalar_lea.vmem %s1, %s288
      %p290 = pneg %p66
      %p291 = pneg %p63
      %p292 = pneg %p87
      %p293 = pneg %p84
      %p294 = pneg %p108
      %p295 = pneg %p105
      %p296 = pneg %p129
      %p297 = pneg %p126
      %p298 = pneg %p150
      %p299 = pneg %p147
      %p300 = pneg %p171
      %p301 = pneg %p168
      %p302 = pneg %p192
      %p303 = pneg %p189
      %p304 = pneg %p218
      %p305 = pneg %p215
      %p306 = scmp.lt.s32.totalorder %s19, 1
      %s307 = scalar_select %p306, %s19, 1
      %s308 = smul.addr %s307, 2
      %s309 = smul.addr %s308, 8
      %s310 = scalar_lea.vmem %s8, %s309
      %p311 = scmp.lt.s32.totalorder %s19, 1
      %s312 = scalar_select %p311, %s19, 1
      %s313 = smul.addr %s312, 2
      %s314 = smul.addr %s313, 4
      %s315 = scalar_lea.vmem %s0, %s314
      %p316 = scmp.lt.s32.totalorder %s19, 1
      %s317 = scalar_select %p316, %s19, 1
      %s318 = smul.addr %s317, 2
      %s319 = smul.addr %s318, 4
      %s320 = scalar_lea.vmem %s1, %s319
      %p321 = scmp.lt.s32.totalorder %s19, 1
      %s322 = scalar_select %p321, %s19, 1
      %s323 = smul.addr %s322, 2
      %s324 = smul.addr %s323, 8
      %s325 = scalar_lea.vmem %s8, %s324
      %v327 = vld [vmem:[%s315] sm:$0xf]
      %v328 = vld [vmem:[%s315 + $0x4] sm:$0xf]
      %v329 = vunpack.c.l.bf16 %v327
      %v330 = vunpack.c.l.bf16 %v328
      %v331 = vld [vmem:[%s2] sm:$0x1]
      %v333 = vlaneseq
      %v334 = vshrl.u32 %v333, 7
      %v335 = vsub.s32 0, %v334
      %v336 = vrot.slane %v331, %v335
      %v338 = vmul.f32 %v329, %v336
      %v339 = vmul.f32 %v330, %v336
      %v340 = vld [vmem:[%s3] sm:$0x1]
      %v342 = vlaneseq
      %v343 = vshrl.u32 %v342, 7
      %v344 = vsub.s32 0, %v343
      %v345 = vrot.slane %v340, %v344
      %v347 = vadd.f32 %v338, %v345
      %v348 = vadd.f32 %v339, %v345
      %v349 = vmax.f32 %v347, 0.0
      %v350 = vmax.f32 %v348, 0.0
      %vm351 = vcmask 1040384
      %vm352 = vsmask.f32 256
      %vm353 = vmand %vm351, %vm352
      %v354 = vld [vmem:[#allocation2] sm:$0x1]
      %v355 = vsel %vm353, 0, %v354
      %356 = vst [vmem:[#allocation2] sm:$0x1] %v355
      %vm357 = vsmask.f32 7938
      %vm358 = vmand %vm351, %vm357
      %v359 = vld [vmem:[#allocation2 + $0x8] sm:$0x1]
      %v360 = vsel %vm358, 0, %v359
      %361 = vst [vmem:[#allocation2 + $0x8] sm:$0x1] %v360
      %v362 = vpack.c.bf16 %v350, %v349
      %v364 = vunpack.c.l.b16 %v362
      %v365 = vunpack.c.h.b16 %v362
      %v366 = vpack.c.b16 %v364, %v364
      %v367 = vpack.c.b16 %v365, %v365
      %vm368 = vsmask.f32 4368
      %vm369 = vmor %vm352, %vm368
      %v371 = vshrl.u32 %v366, 16
      %v373 = vrot.slane %v371, 7
      %v374 = vshll.u32 %v366, 16
      %v376 = vor.u32 %v373, %v374
      %v377 = vrot.slane %v373, 4
      %v379 = vshrl.u32 %v367, 16
      %v381 = vrot.slane %v379, 7
      %v382 = vshll.u32 %v367, 16
      %v384 = vor.u32 %v381, %v382
      %v385 = vsel %vm369, %v377, %v384
      %v386 = vrot.slane %v381, 4
      %vm390 = vcmask 1043456
      %vm391 = vmand %vm390, %vm357
      %v392 = vld [vmem:[#allocation2] sm:$0xf]
      %v393 = vsel %vm391, %v376, %v392
      %394 = vst [vmem:[#allocation2] sm:$0xf] %v393
      %395 = vst [vmem:[#allocation2 + $0x4] sm:$0xf] %v385
      %v396 = vld [vmem:[#allocation2 + $0x8] sm:$0x1]
      %v397 = vsel %vm353, %v386, %v396
      %398 = vst [vmem:[#allocation2 + $0x8] sm:$0x1] %v397
      %v399 = vld [vmem:[#allocation2] sm:$0xf]
      %v400 = vld [vmem:[#allocation2 + $0x4] sm:$0xf]
      %v401 = vld [vmem:[%s4] sm:$0xf]
      %v402 = vld [vmem:[%s4 + $0x4] sm:$0xf]
      %v403 = vld [vmem:[%s4 + $0x8] sm:$0xf]
      %v404 = vld [vmem:[%s4 + $0xc] sm:$0xf]
      %v405 = vld [vmem:[%s4 + $0x10] sm:$0xf]
      %v406 = vld [vmem:[%s4 + $0x14] sm:$0xf]
      %v407 = vld [vmem:[%s4 + $0x18] sm:$0xf]
      %v408 = vld [vmem:[%s4 + $0x1c] sm:$0xf]
      %v409 = vld [vmem:[%s4 + $0x20] sm:$0xf]
      %v410 = vld [vmem:[%s4 + $0x24] sm:$0xf]
      %v411 = vld [vmem:[%s4 + $0x28] sm:$0xf]
      %v412 = vld [vmem:[%s4 + $0x2c] sm:$0xf]
      %v413 = vld [vmem:[%s4 + $0x30] sm:$0xf]
      %v414 = vld [vmem:[%s4 + $0x34] sm:$0xf]
      %v415 = vld [vmem:[%s4 + $0x38] sm:$0xf]
      %v416 = vld [vmem:[%s4 + $0x3c] sm:$0xf]
      %v417 = vld [vmem:[#allocation2 + $0x8] sm:$0x1]
      %s418 = scalar_lea.vmem %s4, 64
      %v419 = vld [vmem:[%s418] sm:$0xf]
      %v420 = vld [vmem:[%s418 + $0x4] sm:$0xf]
      %v421 = vld [vmem:[%s418 + $0x8] sm:$0xf]
      %v422 = vld [vmem:[%s418 + $0xc] sm:$0xf]
      %v423 = vld [vmem:[%s418 + $0x10] sm:$0xf]
      %v424 = vld [vmem:[%s418 + $0x14] sm:$0xf]
      %v425 = vld [vmem:[%s418 + $0x18] sm:$0xf]
      %v426 = vld [vmem:[%s418 + $0x1c] sm:$0xf]
      %v427 = vld [vmem:[%s418 + $0x20] sm:$0xf]
      %v428 = vld [vmem:[%s418 + $0x24] sm:$0xf]
      %v429 = vld [vmem:[%s418 + $0x28] sm:$0xf]
      %v430 = vld [vmem:[%s418 + $0x2c] sm:$0xf]
      %v431 = vld [vmem:[%s418 + $0x30] sm:$0xf]
      %v432 = vld [vmem:[%s418 + $0x34] sm:$0xf]
      %v433 = vld [vmem:[%s418 + $0x38] sm:$0xf]
      %v434 = vld [vmem:[%s418 + $0x3c] sm:$0xf]
      %v438 = vunpack.c.l.b16 %v399
      %v439 = vunpack.c.l.b16 %v400
      %v440 = vunpack.c.l.b16 %v417
      %v441 = vpack.c.b16 %v439, %v438
      %v442 = vpack.c.b16 %v440, %v440
      %vm443 = vsmask.f32 7424
      %v445 = vshrl.u32 %v441, 16
      %v447 = vshll.u32 %v441, 16
      %v449 = vrot.slane %v447, 1
      %v450 = vor.u32 %v445, %v449
      %v452 = vshll.u32 %v442, 16
      %v454 = vrot.slane %v452, 1
      %v455 = vsel %vm443, %v450, %v454
      %v473 = vunpack.c.l.b16 %v419
      %v474 = vunpack.c.l.b16 %v420
      %v475 = vunpack.c.l.b16 %v421
      %v476 = vunpack.c.l.b16 %v422
      %v477 = vunpack.c.l.b16 %v423
      %v478 = vunpack.c.l.b16 %v424
      %v479 = vunpack.c.l.b16 %v425
      %v480 = vunpack.c.l.b16 %v426
      %v481 = vunpack.c.l.b16 %v427
      %v482 = vunpack.c.l.b16 %v428
      %v483 = vunpack.c.l.b16 %v429
      %v484 = vunpack.c.l.b16 %v430
      %v485 = vunpack.c.l.b16 %v431
      %v486 = vunpack.c.l.b16 %v432
      %v487 = vunpack.c.l.b16 %v433
      %v488 = vunpack.c.l.b16 %v434
      %v489 = vpack.c.b16 %v474, %v473
      %v490 = vpack.c.b16 %v476, %v475
      %v491 = vpack.c.b16 %v478, %v477
      %v492 = vpack.c.b16 %v480, %v479
      %v493 = vpack.c.b16 %v482, %v481
      %v494 = vpack.c.b16 %v484, %v483
      %v495 = vpack.c.b16 %v486, %v485
      %v496 = vpack.c.b16 %v488, %v487
      %505 = vmatprep.subr.bf16.mxu0 0
      %506 = vmatpush1.bf16.msra.mxu0 %v489
      %507 = vmatprep.subr.bf16.mxu0 0
      %508 = vmatpush1.bf16.msra.mxu0 %v490
      %509 = vmatprep.subr.bf16.mxu0 0
      %510 = vmatpush1.bf16.msra.mxu0 %v491
      %511 = vmatprep.subr.bf16.mxu0 0
      %512 = vmatpush1.bf16.msra.mxu0 %v492
      %513 = vmatprep.subr.bf16.mxu0 0
      %514 = vmatpush1.bf16.msra.mxu0 %v493
      %515 = vmatprep.subr.bf16.mxu0 0
      %516 = vmatpush1.bf16.msra.mxu0 %v494
      %517 = vmatprep.subr.bf16.mxu0 0
      %518 = vmatpush1.bf16.msra.mxu0 %v495
      %519 = vmatprep.subr.bf16.mxu0 0
      %520 = vmatpush1.bf16.msra.mxu0 %v496
      %521 = vmatprep.subr.bf16.mxu0 0
      %522 = vmatpush1.bf16.msra.mxu0 0
      %523 = vmatprep.subr.bf16.mxu0 0
      %524 = vmatpush1.bf16.msra.mxu0 0
      %525 = vmatprep.subr.bf16.mxu0 0
      %526 = vmatpush1.bf16.msra.mxu0 0
      %527 = vmatprep.subr.bf16.mxu0 0
      %528 = vmatpush1.bf16.msra.mxu0 0
      %529 = vmatprep.subr.bf16.mxu0 0
      %530 = vmatpush1.bf16.msra.mxu0 0
      %531 = vmatprep.subr.bf16.mxu0 0
      %532 = vmatpush1.bf16.msra.mxu0 0
      %533 = vmatprep.subr.bf16.mxu0 0
      %534 = vmatpush1.bf16.msra.mxu0 0
      %535 = vmatprep.subr.bf16.mxu0 0
      %536 = vmatpush1.bf16.msra.mxu0 0
      %537 = vmatprep.mubr.bf16.mxu0 0
      %538 = vmatmul.mubr.bf16.gmra.mrb[0].mxu0 %v455
      %v539 = vpop.f32.mrb[0].mxu0
      %v540 = vadd.f32 0.0, %v539
      %v541 = vpop.f32.mrb[0].mxu0
      %v542 = vpop.f32.mrb[0].mxu0
      %v543 = vadd.f32 0.0, %v542
      %v544 = vpop.f32.mrb[0].mxu0
      %545 = vdwg.mxu0
      %v563 = vunpack.c.l.b16 %v401
      %v564 = vunpack.c.l.b16 %v402
      %v565 = vunpack.c.l.b16 %v403
      %v566 = vunpack.c.l.b16 %v404
      %v567 = vunpack.c.l.b16 %v405
      %v568 = vunpack.c.l.b16 %v406
      %v569 = vunpack.c.l.b16 %v407
      %v570 = vunpack.c.l.b16 %v408
      %v571 = vunpack.c.l.b16 %v409
      %v572 = vunpack.c.l.b16 %v410
      %v573 = vunpack.c.l.b16 %v411
      %v574 = vunpack.c.l.b16 %v412
      %v575 = vunpack.c.l.b16 %v413
      %v576 = vunpack.c.l.b16 %v414
      %v577 = vunpack.c.l.b16 %v415
      %v578 = vunpack.c.l.b16 %v416
      %v579 = vpack.c.b16 %v564, %v563
      %v580 = vpack.c.b16 %v566, %v565
      %v581 = vpack.c.b16 %v568, %v567
      %v582 = vpack.c.b16 %v570, %v569
      %v583 = vpack.c.b16 %v572, %v571
      %v584 = vpack.c.b16 %v574, %v573
      %v585 = vpack.c.b16 %v576, %v575
      %v586 = vpack.c.b16 %v578, %v577
      %595 = vmatprep.subr.bf16.mxu0 0
      %596 = vmatpush1.bf16.msra.mxu0 %v579
      %597 = vmatprep.subr.bf16.mxu0 0
      %598 = vmatpush1.bf16.msra.mxu0 %v580
      %599 = vmatprep.subr.bf16.mxu0 0
      %600 = vmatpush1.bf16.msra.mxu0 %v581
      %601 = vmatprep.subr.bf16.mxu0 0
      %602 = vmatpush1.bf16.msra.mxu0 %v582
      %603 = vmatprep.subr.bf16.mxu0 0
      %604 = vmatpush1.bf16.msra.mxu0 %v583
      %605 = vmatprep.subr.bf16.mxu0 0
      %606 = vmatpush1.bf16.msra.mxu0 %v584
      %607 = vmatprep.subr.bf16.mxu0 0
      %608 = vmatpush1.bf16.msra.mxu0 %v585
      %609 = vmatprep.subr.bf16.mxu0 0
      %610 = vmatpush1.bf16.msra.mxu0 %v586
      %611 = vmatprep.subr.bf16.mxu0 0
      %612 = vmatpush1.bf16.msra.mxu0 0
      %613 = vmatprep.subr.bf16.mxu0 0
      %614 = vmatpush1.bf16.msra.mxu0 0
      %615 = vmatprep.subr.bf16.mxu0 0
      %616 = vmatpush1.bf16.msra.mxu0 0
      %617 = vmatprep.subr.bf16.mxu0 0
      %618 = vmatpush1.bf16.msra.mxu0 0
      %619 = vmatprep.subr.bf16.mxu0 0
      %620 = vmatpush1.bf16.msra.mxu0 0
      %621 = vmatprep.subr.bf16.mxu0 0
      %622 = vmatpush1.bf16.msra.mxu0 0
      %623 = vmatprep.subr.bf16.mxu0 0
      %624 = vmatpush1.bf16.msra.mxu0 0
      %625 = vmatprep.subr.bf16.mxu0 0
      %626 = vmatpush1.bf16.msra.mxu0 0
      %627 = vmatprep.mubr.bf16.mxu0 0
      %628 = vmatmul.mubr.bf16.gmra.mrb[0].mxu0 %v441
      %v629 = vpop.f32.mrb[0].mxu0
      %v630 = vadd.f32 %v540, %v629
      %v631 = vpop.f32.mrb[0].mxu0
      %v632 = vpop.f32.mrb[0].mxu0
      %v633 = vadd.f32 %v543, %v632
      %v634 = vpop.f32.mrb[0].mxu0
      %635 = vdwg.mxu0
      %v636 = vld [vmem:[#allocation2] sm:$0xe]
      %s637 = scalar_lea.vmem %s4, 128
      %v638 = vld [vmem:[%s637] sm:$0xf]
      %v639 = vld [vmem:[%s637 + $0x4] sm:$0xf]
      %v640 = vld [vmem:[%s637 + $0x8] sm:$0xf]
      %v641 = vld [vmem:[%s637 + $0xc] sm:$0xf]
      %v642 = vld [vmem:[%s637 + $0x10] sm:$0xf]
      %v643 = vld [vmem:[%s637 + $0x14] sm:$0xf]
      %v644 = vld [vmem:[%s637 + $0x18] sm:$0xf]
      %v645 = vld [vmem:[%s637 + $0x1c] sm:$0xf]
      %v646 = vld [vmem:[%s637 + $0x20] sm:$0xf]
      %v647 = vld [vmem:[%s637 + $0x24] sm:$0xf]
      %v648 = vld [vmem:[%s637 + $0x28] sm:$0xf]
      %v649 = vld [vmem:[%s637 + $0x2c] sm:$0xf]
      %v650 = vld [vmem:[%s637 + $0x30] sm:$0xf]
      %v651 = vld [vmem:[%s637 + $0x34] sm:$0xf]
      %v652 = vld [vmem:[%s637 + $0x38] sm:$0xf]
      %v653 = vld [vmem:[%s637 + $0x3c] sm:$0xf]
      %v655 = vunpack.c.l.b16 %v636
      %v656 = vpack.c.b16 %v439, %v655
      %vm657 = vcmask 1046528
      %v658 = vrot.slane %v656, 1
      %v659 = vrot.slane %v442, 1
      %v660 = vsel %vm657, %v658, %v659
      %v678 = vunpack.c.l.b16 %v638
      %v679 = vunpack.c.l.b16 %v639
      %v680 = vunpack.c.l.b16 %v640
      %v681 = vunpack.c.l.b16 %v641
      %v682 = vunpack.c.l.b16 %v642
      %v683 = vunpack.c.l.b16 %v643
      %v684 = vunpack.c.l.b16 %v644
      %v685 = vunpack.c.l.b16 %v645
      %v686 = vunpack.c.l.b16 %v646
      %v687 = vunpack.c.l.b16 %v647
      %v688 = vunpack.c.l.b16 %v648
      %v689 = vunpack.c.l.b16 %v649
      %v690 = vunpack.c.l.b16 %v650
      %v691 = vunpack.c.l.b16 %v651
      %v692 = vunpack.c.l.b16 %v652
      %v693 = vunpack.c.l.b16 %v653
      %v694 = vpack.c.b16 %v679, %v678
      %v695 = vpack.c.b16 %v681, %v680
      %v696 = vpack.c.b16 %v683, %v682
      %v697 = vpack.c.b16 %v685, %v684
      %v698 = vpack.c.b16 %v687, %v686
      %v699 = vpack.c.b16 %v689, %v688
      %v700 = vpack.c.b16 %v691, %v690
      %v701 = vpack.c.b16 %v693, %v692
      %710 = vmatprep.subr.bf16.mxu0 0
      %711 = vmatpush1.bf16.msra.mxu0 %v694
      %712 = vmatprep.subr.bf16.mxu0 0
      %713 = vmatpush1.bf16.msra.mxu0 %v695
      %714 = vmatprep.subr.bf16.mxu0 0
      %715 = vmatpush1.bf16.msra.mxu0 %v696
      %716 = vmatprep.subr.bf16.mxu0 0
      %717 = vmatpush1.bf16.msra.mxu0 %v697
      %718 = vmatprep.subr.bf16.mxu0 0
      %719 = vmatpush1.bf16.msra.mxu0 %v698
      %720 = vmatprep.subr.bf16.mxu0 0
      %721 = vmatpush1.bf16.msra.mxu0 %v699
      %722 = vmatprep.subr.bf16.mxu0 0
      %723 = vmatpush1.bf16.msra.mxu0 %v700
      %724 = vmatprep.subr.bf16.mxu0 0
      %725 = vmatpush1.bf16.msra.mxu0 %v701
      %726 = vmatprep.subr.bf16.mxu0 0
      %727 = vmatpush1.bf16.msra.mxu0 0
      %728 = vmatprep.subr.bf16.mxu0 0
      %729 = vmatpush1.bf16.msra.mxu0 0
      %730 = vmatprep.subr.bf16.mxu0 0
      %731 = vmatpush1.bf16.msra.mxu0 0
      %732 = vmatprep.subr.bf16.mxu0 0
      %733 = vmatpush1.bf16.msra.mxu0 0
      %734 = vmatprep.subr.bf16.mxu0 0
      %735 = vmatpush1.bf16.msra.mxu0 0
      %736 = vmatprep.subr.bf16.mxu0 0
      %737 = vmatpush1.bf16.msra.mxu0 0
      %738 = vmatprep.subr.bf16.mxu0 0
      %739 = vmatpush1.bf16.msra.mxu0 0
      %740 = vmatprep.subr.bf16.mxu0 0
      %741 = vmatpush1.bf16.msra.mxu0 0
      %742 = vmatprep.mubr.bf16.mxu0 0
      %743 = vmatmul.mubr.bf16.gmra.mrb[0].mxu0 %v660
      %v744 = vpop.f32.mrb[0].mxu0
      %v745 = vadd.f32 0.0, %v744
      %v746 = vpop.f32.mrb[0].mxu0
      %v747 = vpop.f32.mrb[0].mxu0
      %v748 = vadd.f32 0.0, %v747
      %v749 = vpop.f32.mrb[0].mxu0
      %750 = vdwg.mxu0
      %v751 = vadd.f32 %v630, %v745
      %v752 = vadd.f32 %v633, %v748
      %v753 = vld [vmem:[%s5] sm:$0x1]
      %v755 = vlaneseq
      %v756 = vshrl.u32 %v755, 7
      %v757 = vsub.s32 0, %v756
      %v758 = vrot.slane %v753, %v757
      %v760 = vadd.f32 %v751, %v758
      %v761 = vadd.f32 %v752, %v758
      %v762 = vld [vmem:[%s320] sm:$0xf]
      %v763 = vld [vmem:[%s320 + $0x4] sm:$0xf]
      %v764 = vunpack.c.l.bf16 %v762
      %v765 = vunpack.c.l.bf16 %v763
      %v766 = vld [vmem:[%s6] sm:$0x1]
      %v768 = vlaneseq
      %v769 = vshrl.u32 %v768, 7
      %v770 = vsub.s32 0, %v769
      %v771 = vrot.slane %v766, %v770
      %v773 = vmul.f32 %v764, %v771
      %v774 = vmul.f32 %v765, %v771
      %v775 = vld [vmem:[%s7] sm:$0x1]
      %v777 = vlaneseq
      %v778 = vshrl.u32 %v777, 7
      %v779 = vsub.s32 0, %v778
      %v780 = vrot.slane %v775, %v779
      %v782 = vadd.f32 %v773, %v780
      %v783 = vadd.f32 %v774, %v780
      %v784 = vadd.f32 %v760, %v782
      %v785 = vadd.f32 %v761, %v783
      %786 = vst [vmem:[%s325] sm:$0xff] %v784
      %787 = vst [vmem:[%s325 + $0x8] sm:$0xff] %v785
      %p788 = scmp.lt.s32.totalorder %s19, 1
      %s789 = scalar_select %p788, %s19, 1
      %s790 = smul.addr %s789, 2
      %s791 = smul.addr %s790, 8
      %s792 = scalar_lea.vmem %s8, %s791
      // Predicated region
      $region53: #{residual_conv_forward.5} parent=51 // pred_check
        %p793 = pneg %p215
      $region54: #{residual_conv_forward.5} parent=51 // pred_check_branch
        %795 = sbr.rel (%p793) target = $region56
      $region55: #{residual_conv_forward.5} parent=51 // pred_region
        _
      $region56: #{residual_conv_forward.5} parent=51 // pred_fallthru
        _
    $region52: #{residual_conv_forward.5} parent=5 // pred_fallthru
      _
    %p796 = scmp.le.s32.totalorder 2, %s14
    // Predicated region
    $region57: #{residual_conv_forward.5} parent=5 // pred_check
      %p797 = pneg %p796
    $region58: #{residual_conv_forward.5} parent=5 // pred_check_branch
      %799 = sbr.rel (%p797) target = $region60
    $region59: #{residual_conv_forward.5} parent=5 // pred_region
      %s800 = ssub.s32 %s14, 2
      // Predicated region
      $region61: #{residual_conv_forward.5} parent=59 // pred_check
        %p801 = pneg %p221
      $region62: #{residual_conv_forward.5} parent=59 // pred_check_branch
        %803 = sbr.rel (%p801) target = $region64
      $region63: #{residual_conv_forward.5} parent=59 // pred_region
        %p804 = scmp.lt.s32.totalorder %s20, 1
        %s805 = scalar_select %p804, %s20, 1
        %s806 = smul.addr %s805, 2
        %s807 = smul.addr %s806, 8
        %s808 = scalar_lea.vmem %s8, %s807
      $region64: #{residual_conv_forward.5} parent=59 // pred_fallthru
        _
    $region60: #{residual_conv_forward.5} parent=5 // pred_fallthru
      _
  $region6: #{residual_conv_forward.5} parent=0 // loop_footer
    %s18 = sadd.s32 1, %s14
  $region7: #{residual_conv_forward.5} parent=0 // loop_footer_branch
    %13 = sbr.rel target = $region3
  $region8: #{residual_conv_forward.5} parent=0 // loop_exit
    _

</llo_original>
